<compile_context>
chip_gen: v5e
topology: v5e:2x2
jax: 0.10.0
libtpu: 0.0.40
codegen_flags: <defaults>
</compile_context>

<pallas_src>
import jax
import jax.numpy as jnp
from jax.experimental import pallas as pl
from jax.experimental.pallas import tpu as pltpu


def _round_up(x, m):
    return ((x + m - 1) // m) * m


def _num_tensorcores_per_chip():
    """1 TensorCore on v5e/v6e, 2 on v7x (sharded via the "parallel" grid axis)."""
    try:
        kind = jax.devices()[0].device_kind.lower()
    except Exception:
        return 1
    return 2 if ("v7" in kind or "tpu7" in kind) else 1


# ---------------------------------------------------------------------------
# Kernel: one batch tile of TB rows per grid step, all weights VMEM-resident.
# ---------------------------------------------------------------------------
def node_decoder_kernel(parent_ref, left_enc_ref, right_enc_ref,
                        w_mlp_ref, b_mlp_ref, wl_p_ref, wr_p_ref,
                        w_left_e_t_ref, b_left_ref,
                        w_right_e_t_ref, b_right_ref,
                        left_out_ref, right_out_ref):
    S = w_mlp_ref.shape[0]            # = int(F * 0.01), tiny (e.g. 2)
    cdt = w_left_e_t_ref.dtype        # compute dtype of the two big matmuls

    parent = parent_ref[...]          # (TB, F) f32 (cast happens in-kernel only)

    # ---- code = tanh(Linear_S(parent)) on the VPU/XLU ------------------------
    # S is tiny, so the (TB, S) "code" is computed as S row-dot reductions
    # instead of a 128-lane zero-padded MXU matmul: no padded-zero weight bytes
    # in HBM, no half-empty MXU pushes.
    code = []
    for s in range(S):                                   # static unroll, S small
        row = w_mlp_ref[s:s + 1, :]                                   # (1, F)
        acc = jnp.sum(parent * row, axis=-1, keepdims=True)           # (TB, 1)
        code.append(jnp.tanh(acc + b_mlp_ref[s:s + 1, :]))            # (TB, 1)

    # ---- left_feature = tanh(Linear(cat(code, left_enc))) --------------------
    # cat((code, enc), 1) @ W.T == code @ W[:, :S].T + enc @ W[:, S:].T
    left_pre = jnp.dot(left_enc_ref[...].astype(cdt), w_left_e_t_ref[...],
                       preferred_element_type=jnp.float32)            # (TB, F)
    left_pre = left_pre + b_left_ref[...]
    for s in range(S):
        left_pre = left_pre + code[s] * wl_p_ref[s:s + 1, :]          # VPU FMA
    left_out_ref[...] = jnp.tanh(left_pre).astype(left_out_ref.dtype)

    # ---- right_feature: computed only after the left store, so a single
    # (TB, F) f32 intermediate is live at a time and the left store can overlap
    # the right matmul.
    right_pre = jnp.dot(right_enc_ref[...].astype(cdt), w_right_e_t_ref[...],
                        preferred_element_type=jnp.float32)
    right_pre = right_pre + b_right_ref[...]
    for s in range(S):
        right_pre = right_pre + code[s] * wr_p_ref[s:s + 1, :]
    right_out_ref[...] = jnp.tanh(right_pre).astype(right_out_ref.dtype)


# ---------------------------------------------------------------------------
# One-time weight preparation (hoisted out of the per-call hot path).
# ---------------------------------------------------------------------------
def prepare_params(params, compute_dtype=jnp.bfloat16):
    """Transpose / split the concat-weights ONCE.  Parent-path ("code") weights
    are stored at their true (S, F) size (no zero padding); only the two big
    (F, F) weights are cast to `compute_dtype` (bf16 by default).  Biases and
    tiny weights stay f32."""
    w_mlp, b_mlp = params["w_mlp"], params["b_mlp"]
    w_left, b_left = params["w_left"], params["b_left"]
    w_right, b_right = params["w_right"], params["b_right"]

    S, F = w_mlp.shape                        # S = int(F * 0.01)
    assert S >= 1, "feature_size must be >= 100 so int(F * 0.01) >= 1"
    f32 = jnp.float32
    cast = lambda x: x.astype(compute_dtype)

    return dict(
        w_mlp=w_mlp.astype(f32),                          # (S, F)
        b_mlp=b_mlp.reshape(S, 1).astype(f32),            # (S, 1)
        wl_p=jnp.transpose(w_left[:, :S]).astype(f32),    # (S, F)
        wr_p=jnp.transpose(w_right[:, :S]).astype(f32),   # (S, F)
        w_left_e_t=cast(jnp.transpose(w_left[:, S:])),    # (F, F) compute dtype
        b_left=b_left.reshape(1, F).astype(f32),          # (1, F)
        w_right_e_t=cast(jnp.transpose(w_right[:, S:])),  # (F, F) compute dtype
        b_right=b_right.reshape(1, F).astype(f32),        # (1, F)
        compute_dtype=jnp.dtype(compute_dtype),
        feature_size=int(F),
        code_size=int(S),
    )


# ---------------------------------------------------------------------------
# Wrapper: grid over the batch axis only, weights resident, batch "parallel".
# ---------------------------------------------------------------------------
def node_decoder(parent, left_enc, right_enc, prep, *, tb=None, out_dtype=None):
    """parent/left_enc/right_enc: (B, F).  Returns (left_feature, right_feature)
    with dtype `out_dtype` (default: parent.dtype; pass jnp.bfloat16 to halve
    output HBM traffic)."""
    B, F = parent.shape
    assert F == prep["feature_size"]
    S = prep["code_size"]
    cdt = prep["compute_dtype"]
    out_dtype = jnp.dtype(parent.dtype if out_dtype is None else out_dtype)

    # --- per-generation batch tile -------------------------------------------
    # v5e/v6e: one TensorCore -> a single big grid step (per-step overhead
    #          ~0.35us dominates this tiny memory-bound kernel).
    # v7x:     two TensorCores -> keep >= 2 grid steps so "parallel" shards them.
    if tb is None:
        n_tc = _num_tensorcores_per_chip()
        tb = pl.cdiv(B, n_tc) if n_tc > 1 else B
    tb = max(1, min(int(tb), 512, B))
    if tb != B:
        tb = min(_round_up(tb, 16), B)        # 16-row aligned (bf16-packing safe)
    grid = (pl.cdiv(B, tb),)                  # ragged last block masked by Pallas
    # NOTE: no wrapper-side astype()/pad() of the (B, F) inputs -- they are read
    # from HBM exactly once, in their original dtype.

    # --- explicit VMEM budget (v5e default scoped = 16 MiB, v7x physical = 64)
    est = (2 * F * F * cdt.itemsize                     # resident (F,F) weights
           + 2 * 3 * tb * F * parent.dtype.itemsize     # double-buffered inputs
           + 2 * 2 * tb * F * out_dtype.itemsize        # double-buffered outputs
           + 8 * tb * F * 4                             # live intermediates
           + 4 * S * F * 4 + 4 * F * 4)                 # small weights / biases
    vmem_limit = int(min(max(2 * est, 32 << 20), 64 << 20))
    # TODO(synk): once 2*F*F*itemsize approaches the scoped VMEM limit
    # (F ~ 1300 f32 / ~1800 bf16 on v7x's 64 MiB), tile the two (F, F) weights
    # along N with a second grid axis instead of keeping them whole-resident.

    flops = 2 * B * (3 * S * F + 2 * F * F)
    transcendentals = B * (S + 2 * F)
    bytes_accessed = (3 * B * F * parent.dtype.itemsize
                      + 2 * B * F * out_dtype.itemsize
                      + 2 * F * F * cdt.itemsize
                      + 3 * S * F * 4 + (S + 2 * F) * 4)
    cost = pl.CostEstimate(flops=int(flops),
                           transcendentals=int(transcendentals),
                           bytes_accessed=int(bytes_accessed))

    batch_spec = pl.BlockSpec((tb, F), lambda i: (i, 0))
    weights = (prep["w_mlp"], prep["b_mlp"], prep["wl_p"], prep["wr_p"],
               prep["w_left_e_t"], prep["b_left"],
               prep["w_right_e_t"], prep["b_right"])

    def run(single_buffer_weights):
        def resident(arr):
            # Constant block index -> weight stays VMEM-resident across the grid
            # (DMA'd once per call); single-buffering halves its VMEM footprint.
            if single_buffer_weights:
                return pl.BlockSpec(arr.shape, lambda i: (0, 0),
                                    pipeline_mode=pl.Buffered(1))
            return pl.BlockSpec(arr.shape, lambda i: (0, 0))

        return pl.pallas_call(
            node_decoder_kernel,
            grid=grid,
            in_specs=[batch_spec, batch_spec, batch_spec]
                     + [resident(w) for w in weights],
            out_specs=(batch_spec, batch_spec),
            out_shape=(jax.ShapeDtypeStruct((B, F), out_dtype),
                       jax.ShapeDtypeStruct((B, F), out_dtype)),
            compiler_params=pltpu.CompilerParams(
                dimension_semantics=("parallel",),
                vmem_limit_bytes=vmem_limit),
            cost_estimate=cost,
        )(parent, left_enc, right_enc, *weights)

    try:
        left_out, right_out = run(single_buffer_weights=True)
    except Exception:
        # Fallback for JAX versions that reject pl.Buffered(1) (single-buffered
        # resident weights) in the TPU pallas_call lowering.
        left_out, right_out = run(single_buffer_weights=False)
    return left_out, right_out


# ---------------------------------------------------------------------------
# Reference + init (mirrors nn.Linear shapes / the PyTorch forward exactly).
# ---------------------------------------------------------------------------
def init_params(key, feature_size):
    F = feature_size
    S = int(F * 0.01)
    ks = jax.random.split(key, 6)

    def lin(kw, kb, out_f, in_f):
        bound = 1.0 / jnp.sqrt(in_f)
        w = jax.random.uniform(kw, (out_f, in_f), jnp.float32, -bound, bound)
        b = jax.random.uniform(kb, (out_f,), jnp.float32, -bound, bound)
        return w, b

    w_mlp, b_mlp = lin(ks[0], ks[1], S, F)
    w_left, b_left = lin(ks[2], ks[3], F, F + S)
    w_right, b_right = lin(ks[4], ks[5], F, F + S)
    return dict(w_mlp=w_mlp, b_mlp=b_mlp,
                w_left=w_left, b_left=b_left,
                w_right=w_right, b_right=b_right)


def node_decoder_ref(parent, left_enc, right_enc, params):
    p = jnp.tanh(parent @ params["w_mlp"].T + params["b_mlp"])
    lf = jnp.tanh(jnp.concatenate([p, left_enc], 1) @ params["w_left"].T
                  + params["b_left"])
    rf = jnp.tanh(jnp.concatenate([p, right_enc], 1) @ params["w_right"].T
                  + params["b_right"])
    return lf, rf


if __name__ == "__main__":
    FEATURE_SIZE = 256          # -> int(256 * 0.01) = 2 hidden "code" dims
    BATCH = 256                 # many tree nodes batched into one call

    key = jax.random.PRNGKey(0)
    k_par, k_le, k_re, k_w = jax.random.split(key, 4)
    parent = jax.random.normal(k_par, (BATCH, FEATURE_SIZE), jnp.float32)
    left_enc = jax.random.normal(k_le, (BATCH, FEATURE_SIZE), jnp.float32)
    right_enc = jax.random.normal(k_re, (BATCH, FEATURE_SIZE), jnp.float32)
    params = init_params(k_w, FEATURE_SIZE)

    left_ref, right_ref = node_decoder_ref(parent, left_enc, right_enc, params)

    # --- f32 path: numerically faithful to the PyTorch forward ---------------
    prep_f32 = prepare_params(params, compute_dtype=jnp.float32)
    left_out, right_out = node_decoder(parent, left_enc, right_enc, prep_f32)
    jax.block_until_ready((left_out, right_out))
    assert jnp.allclose(left_out, left_ref, atol=2e-5, rtol=2e-5)
    assert jnp.allclose(right_out, right_ref, atol=2e-5, rtol=2e-5)

    # --- default bf16 compute path (f32 accumulation / f32 tanh), bf16 outputs
    prep_bf16 = prepare_params(params)       # compute_dtype defaults to bf16
    left_b, right_b = node_decoder(parent, left_enc, right_enc, prep_bf16,
                                   out_dtype=jnp.bfloat16)
    jax.block_until_ready((left_b, right_b))
    assert jnp.allclose(left_b.astype(jnp.float32), left_ref, atol=5e-2, rtol=0)
    assert jnp.allclose(right_b.astype(jnp.float32), right_ref, atol=5e-2, rtol=0)

    print("KERNEL_OK")
</pallas_src>

<mosaic_0001>
module attributes {stable_mosaic.version = 11 : i64} {
  func.func @node_decoder_kernel(%arg0: i32, %arg1: memref<256x256xf32, #tpu.memory_space<vmem>>, %arg2: memref<256x256xf32, #tpu.memory_space<vmem>>, %arg3: memref<256x256xf32, #tpu.memory_space<vmem>>, %arg4: memref<2x256xf32, #tpu.memory_space<vmem>>, %arg5: memref<2x1xf32, #tpu.memory_space<vmem>>, %arg6: memref<2x256xf32, #tpu.memory_space<vmem>>, %arg7: memref<2x256xf32, #tpu.memory_space<vmem>>, %arg8: memref<256x256xf32, #tpu.memory_space<vmem>>, %arg9: memref<1x256xf32, #tpu.memory_space<vmem>>, %arg10: memref<256x256xf32, #tpu.memory_space<vmem>>, %arg11: memref<1x256xf32, #tpu.memory_space<vmem>>, %arg12: memref<256x256xf32, #tpu.memory_space<vmem>>, %arg13: memref<256x256xf32, #tpu.memory_space<vmem>>) attributes {dimension_semantics = [#tpu.dimension_semantics<parallel>], iteration_bounds = array<i64: 1>, scalar_prefetch = 0 : i64, scratch_operands = 0 : i64, tpu.core_type = #tpu.core_type<tc>, window_params = [{transform_indices = @transform_0, window_bounds = array<i64: 256, 256>}, {transform_indices = @transform_1, window_bounds = array<i64: 256, 256>}, {transform_indices = @transform_2, window_bounds = array<i64: 256, 256>}, {pipeline_mode = #tpu.pipeline_mode<synchronous>, transform_indices = @transform_3, window_bounds = array<i64: 2, 256>}, {pipeline_mode = #tpu.pipeline_mode<synchronous>, transform_indices = @transform_4, window_bounds = array<i64: 2, 1>}, {pipeline_mode = #tpu.pipeline_mode<synchronous>, transform_indices = @transform_5, window_bounds = array<i64: 2, 256>}, {pipeline_mode = #tpu.pipeline_mode<synchronous>, transform_indices = @transform_6, window_bounds = array<i64: 2, 256>}, {pipeline_mode = #tpu.pipeline_mode<synchronous>, transform_indices = @transform_7, window_bounds = array<i64: 256, 256>}, {pipeline_mode = #tpu.pipeline_mode<synchronous>, transform_indices = @transform_8, window_bounds = array<i64: 1, 256>}, {pipeline_mode = #tpu.pipeline_mode<synchronous>, transform_indices = @transform_9, window_bounds = array<i64: 256, 256>}, {pipeline_mode = #tpu.pipeline_mode<synchronous>, transform_indices = @transform_10, window_bounds = array<i64: 1, 256>}, {transform_indices = @transform_11, window_bounds = array<i64: 256, 256>}, {transform_indices = @transform_12, window_bounds = array<i64: 256, 256>}]} {
    %c0 = arith.constant 0 : index
    %c0_0 = arith.constant 0 : index
    %0 = vector.load %arg1[%c0, %c0_0] : memref<256x256xf32, #tpu.memory_space<vmem>>, vector<256x256xf32>
    %c0_1 = arith.constant 0 : index
    %c0_2 = arith.constant 0 : index
    %1 = vector.load %arg4[%c0_1, %c0_2] : memref<2x256xf32, #tpu.memory_space<vmem>>, vector<1x256xf32>
    %2 = vector.broadcast %1 : vector<1x256xf32> to vector<256x256xf32>
    %3 = arith.mulf %0, %2 : vector<256x256xf32>
    %cst = arith.constant dense<0.000000e+00> : vector<256xf32>
    %4 = vector.multi_reduction <add>, %3, %cst [1] : vector<256x256xf32> to vector<256xf32>
    %5 = vector.shape_cast %4 : vector<256xf32> to vector<256x1xf32>
    %c0_3 = arith.constant 0 : index
    %c0_4 = arith.constant 0 : index
    %6 = vector.load %arg5[%c0_3, %c0_4] : memref<2x1xf32, #tpu.memory_space<vmem>>, vector<1x1xf32>
    %7 = vector.broadcast %6 : vector<1x1xf32> to vector<256x1xf32>
    %8 = arith.addf %5, %7 : vector<256x1xf32>
    %9 = math.tanh %8 : vector<256x1xf32>
    %c1 = arith.constant 1 : index
    %c0_5 = arith.constant 0 : index
    %10 = vector.load %arg4[%c1, %c0_5] : memref<2x256xf32, #tpu.memory_space<vmem>>, vector<1x256xf32>
    %11 = vector.broadcast %10 : vector<1x256xf32> to vector<256x256xf32>
    %12 = arith.mulf %0, %11 : vector<256x256xf32>
    %cst_6 = arith.constant dense<0.000000e+00> : vector<256xf32>
    %13 = vector.multi_reduction <add>, %12, %cst_6 [1] : vector<256x256xf32> to vector<256xf32>
    %14 = vector.shape_cast %13 : vector<256xf32> to vector<256x1xf32>
    %c1_7 = arith.constant 1 : index
    %c0_8 = arith.constant 0 : index
    %15 = vector.load %arg5[%c1_7, %c0_8] : memref<2x1xf32, #tpu.memory_space<vmem>>, vector<1x1xf32>
    %16 = vector.broadcast %15 : vector<1x1xf32> to vector<256x1xf32>
    %17 = arith.addf %14, %16 : vector<256x1xf32>
    %18 = math.tanh %17 : vector<256x1xf32>
    %c0_9 = arith.constant 0 : index
    %c0_10 = arith.constant 0 : index
    %19 = vector.load %arg2[%c0_9, %c0_10] : memref<256x256xf32, #tpu.memory_space<vmem>>, vector<256x256xf32>
    %c0_11 = arith.constant 0 : index
    %c0_12 = arith.constant 0 : index
    %20 = vector.load %arg8[%c0_11, %c0_12] : memref<256x256xf32, #tpu.memory_space<vmem>>, vector<256x256xf32>
    %cst_13 = arith.constant dense<0.000000e+00> : vector<256x256xf32>
    %21 = tpu.matmul %19, %20, %cst_13 {dimension_numbers = #tpu.dot_dimension_numbers<[1], [0], [0], [1], [0, 0, 1, 1], [], []>} : vector<256x256xf32>, vector<256x256xf32>, vector<256x256xf32> -> vector<256x256xf32>
    %c0_14 = arith.constant 0 : index
    %c0_15 = arith.constant 0 : index
    %22 = vector.load %arg9[%c0_14, %c0_15] : memref<1x256xf32, #tpu.memory_space<vmem>>, vector<1x256xf32>
    %23 = vector.broadcast %22 : vector<1x256xf32> to vector<256x256xf32>
    %24 = arith.addf %21, %23 : vector<256x256xf32>
    %c0_16 = arith.constant 0 : index
    %c0_17 = arith.constant 0 : index
    %25 = vector.load %arg6[%c0_16, %c0_17] : memref<2x256xf32, #tpu.memory_space<vmem>>, vector<1x256xf32>
    %26 = vector.broadcast %9 : vector<256x1xf32> to vector<256x256xf32>
    %27 = vector.broadcast %25 : vector<1x256xf32> to vector<256x256xf32>
    %28 = arith.mulf %26, %27 : vector<256x256xf32>
    %29 = arith.addf %24, %28 : vector<256x256xf32>
    %c1_18 = arith.constant 1 : index
    %c0_19 = arith.constant 0 : index
    %30 = vector.load %arg6[%c1_18, %c0_19] : memref<2x256xf32, #tpu.memory_space<vmem>>, vector<1x256xf32>
    %31 = vector.broadcast %18 : vector<256x1xf32> to vector<256x256xf32>
    %32 = vector.broadcast %30 : vector<1x256xf32> to vector<256x256xf32>
    %33 = arith.mulf %31, %32 : vector<256x256xf32>
    %34 = arith.addf %29, %33 : vector<256x256xf32>
    %35 = math.tanh %34 : vector<256x256xf32>
    %c0_20 = arith.constant 0 : index
    %c0_21 = arith.constant 0 : index
    %36 = vector.load %arg12[%c0_20, %c0_21] : memref<256x256xf32, #tpu.memory_space<vmem>>, vector<256x256xf32>
    tpu.vector_store %arg12[%c0_20, %c0_21], %35 {strides = array<i32>} : memref<256x256xf32, #tpu.memory_space<vmem>>, vector<256x256xf32>,
    %c0_22 = arith.constant 0 : index
    %c0_23 = arith.constant 0 : index
    %37 = vector.load %arg3[%c0_22, %c0_23] : memref<256x256xf32, #tpu.memory_space<vmem>>, vector<256x256xf32>
    %c0_24 = arith.constant 0 : index
    %c0_25 = arith.constant 0 : index
    %38 = vector.load %arg10[%c0_24, %c0_25] : memref<256x256xf32, #tpu.memory_space<vmem>>, vector<256x256xf32>
    %cst_26 = arith.constant dense<0.000000e+00> : vector<256x256xf32>
    %39 = tpu.matmul %37, %38, %cst_26 {dimension_numbers = #tpu.dot_dimension_numbers<[1], [0], [0], [1], [0, 0, 1, 1], [], []>} : vector<256x256xf32>, vector<256x256xf32>, vector<256x256xf32> -> vector<256x256xf32>
    %c0_27 = arith.constant 0 : index
    %c0_28 = arith.constant 0 : index
    %40 = vector.load %arg11[%c0_27, %c0_28] : memref<1x256xf32, #tpu.memory_space<vmem>>, vector<1x256xf32>
    %41 = vector.broadcast %40 : vector<1x256xf32> to vector<256x256xf32>
    %42 = arith.addf %39, %41 : vector<256x256xf32>
    %c0_29 = arith.constant 0 : index
    %c0_30 = arith.constant 0 : index
    %43 = vector.load %arg7[%c0_29, %c0_30] : memref<2x256xf32, #tpu.memory_space<vmem>>, vector<1x256xf32>
    %44 = vector.broadcast %9 : vector<256x1xf32> to vector<256x256xf32>
    %45 = vector.broadcast %43 : vector<1x256xf32> to vector<256x256xf32>
    %46 = arith.mulf %44, %45 : vector<256x256xf32>
    %47 = arith.addf %42, %46 : vector<256x256xf32>
    %c1_31 = arith.constant 1 : index
    %c0_32 = arith.constant 0 : index
    %48 = vector.load %arg7[%c1_31, %c0_32] : memref<2x256xf32, #tpu.memory_space<vmem>>, vector<1x256xf32>
    %49 = vector.broadcast %18 : vector<256x1xf32> to vector<256x256xf32>
    %50 = vector.broadcast %48 : vector<1x256xf32> to vector<256x256xf32>
    %51 = arith.mulf %49, %50 : vector<256x256xf32>
    %52 = arith.addf %47, %51 : vector<256x256xf32>
    %53 = math.tanh %52 : vector<256x256xf32>
    %c0_33 = arith.constant 0 : index
    %c0_34 = arith.constant 0 : index
    %54 = vector.load %arg13[%c0_33, %c0_34] : memref<256x256xf32, #tpu.memory_space<vmem>>, vector<256x256xf32>
    tpu.vector_store %arg13[%c0_33, %c0_34], %53 {strides = array<i32>} : memref<256x256xf32, #tpu.memory_space<vmem>>, vector<256x256xf32>,
    return
  }
  func.func @transform_0(%arg0: i32) -> (i32, i32) {
    %c0_i32 = arith.constant 0 : i32
    %c0_i32_0 = arith.constant 0 : i32
    return %arg0, %c0_i32 : i32, i32
  }
  func.func @transform_1(%arg0: i32) -> (i32, i32) {
    %c0_i32 = arith.constant 0 : i32
    %c0_i32_0 = arith.constant 0 : i32
    return %arg0, %c0_i32 : i32, i32
  }
  func.func @transform_2(%arg0: i32) -> (i32, i32) {
    %c0_i32 = arith.constant 0 : i32
    %c0_i32_0 = arith.constant 0 : i32
    return %arg0, %c0_i32 : i32, i32
  }
  func.func @transform_3(%arg0: i32) -> (i32, i32) {
    %c0_i32 = arith.constant 0 : i32
    %c0_i32_0 = arith.constant 0 : i32
    %c0_i32_1 = arith.constant 0 : i32
    return %c0_i32, %c0_i32_0 : i32, i32
  }
  func.func @transform_4(%arg0: i32) -> (i32, i32) {
    %c0_i32 = arith.constant 0 : i32
    %c0_i32_0 = arith.constant 0 : i32
    %c0_i32_1 = arith.constant 0 : i32
    return %c0_i32, %c0_i32_0 : i32, i32
  }
  func.func @transform_5(%arg0: i32) -> (i32, i32) {
    %c0_i32 = arith.constant 0 : i32
    %c0_i32_0 = arith.constant 0 : i32
    %c0_i32_1 = arith.constant 0 : i32
    return %c0_i32, %c0_i32_0 : i32, i32
  }
  func.func @transform_6(%arg0: i32) -> (i32, i32) {
    %c0_i32 = arith.constant 0 : i32
    %c0_i32_0 = arith.constant 0 : i32
    %c0_i32_1 = arith.constant 0 : i32
    return %c0_i32, %c0_i32_0 : i32, i32
  }
  func.func @transform_7(%arg0: i32) -> (i32, i32) {
    %c0_i32 = arith.constant 0 : i32
    %c0_i32_0 = arith.constant 0 : i32
    %c0_i32_1 = arith.constant 0 : i32
    return %c0_i32, %c0_i32_0 : i32, i32
  }
  func.func @transform_8(%arg0: i32) -> (i32, i32) {
    %c0_i32 = arith.constant 0 : i32
    %c0_i32_0 = arith.constant 0 : i32
    %c0_i32_1 = arith.constant 0 : i32
    return %c0_i32, %c0_i32_0 : i32, i32
  }
  func.func @transform_9(%arg0: i32) -> (i32, i32) {
    %c0_i32 = arith.constant 0 : i32
    %c0_i32_0 = arith.constant 0 : i32
    %c0_i32_1 = arith.constant 0 : i32
    return %c0_i32, %c0_i32_0 : i32, i32
  }
  func.func @transform_10(%arg0: i32) -> (i32, i32) {
    %c0_i32 = arith.constant 0 : i32
    %c0_i32_0 = arith.constant 0 : i32
    %c0_i32_1 = arith.constant 0 : i32
    return %c0_i32, %c0_i32_0 : i32, i32
  }
  func.func @transform_11(%arg0: i32) -> (i32, i32) {
    %c0_i32 = arith.constant 0 : i32
    %c0_i32_0 = arith.constant 0 : i32
    return %arg0, %c0_i32 : i32, i32
  }
  func.func @transform_12(%arg0: i32) -> (i32, i32) {
    %c0_i32 = arith.constant 0 : i32
    %c0_i32_0 = arith.constant 0 : i32
    return %arg0, %c0_i32 : i32, i32
  }
}

module attributes {stable_mosaic.version = 11 : i64} {
  func.func @node_decoder_kernel(%arg0: i32, %arg1: memref<256x256xf32, #tpu.memory_space<vmem>>, %arg2: memref<256x256xf32, #tpu.memory_space<vmem>>, %arg3: memref<256x256xf32, #tpu.memory_space<vmem>>, %arg4: memref<2x256xf32, #tpu.memory_space<vmem>>, %arg5: memref<2x1xf32, #tpu.memory_space<vmem>>, %arg6: memref<2x256xf32, #tpu.memory_space<vmem>>, %arg7: memref<2x256xf32, #tpu.memory_space<vmem>>, %arg8: memref<256x256xf32, #tpu.memory_space<vmem>>, %arg9: memref<1x256xf32, #tpu.memory_space<vmem>>, %arg10: memref<256x256xf32, #tpu.memory_space<vmem>>, %arg11: memref<1x256xf32, #tpu.memory_space<vmem>>, %arg12: memref<256x256xf32, #tpu.memory_space<vmem>>, %arg13: memref<256x256xf32, #tpu.memory_space<vmem>>) attributes {dimension_semantics = [#tpu.dimension_semantics<parallel>], iteration_bounds = array<i64: 1>, scalar_prefetch = 0 : i64, scratch_operands = 0 : i64, tpu.core_type = #tpu.core_type<tc>, window_params = [{transform_indices = @transform_0, window_bounds = array<i64: 256, 256>}, {transform_indices = @transform_1, window_bounds = array<i64: 256, 256>}, {transform_indices = @transform_2, window_bounds = array<i64: 256, 256>}, {pipeline_mode = #tpu.pipeline_mode<synchronous>, transform_indices = @transform_3, window_bounds = array<i64: 2, 256>}, {pipeline_mode = #tpu.pipeline_mode<synchronous>, transform_indices = @transform_4, window_bounds = array<i64: 2, 1>}, {pipeline_mode = #tpu.pipeline_mode<synchronous>, transform_indices = @transform_5, window_bounds = array<i64: 2, 256>}, {pipeline_mode = #tpu.pipeline_mode<synchronous>, transform_indices = @transform_6, window_bounds = array<i64: 2, 256>}, {pipeline_mode = #tpu.pipeline_mode<synchronous>, transform_indices = @transform_7, window_bounds = array<i64: 256, 256>}, {pipeline_mode = #tpu.pipeline_mode<synchronous>, transform_indices = @transform_8, window_bounds = array<i64: 1, 256>}, {pipeline_mode = #tpu.pipeline_mode<synchronous>, transform_indices = @transform_9, window_bounds = array<i64: 256, 256>}, {pipeline_mode = #tpu.pipeline_mode<synchronous>, transform_indices = @transform_10, window_bounds = array<i64: 1, 256>}, {transform_indices = @transform_11, window_bounds = array<i64: 256, 256>}, {transform_indices = @transform_12, window_bounds = array<i64: 256, 256>}]} {
    %c0 = arith.constant 0 : index
    %c0_0 = arith.constant 0 : index
    %0 = vector.load %arg1[%c0, %c0_0] : memref<256x256xf32, #tpu.memory_space<vmem>>, vector<256x256xf32>
    %c0_1 = arith.constant 0 : index
    %c0_2 = arith.constant 0 : index
    %1 = vector.load %arg4[%c0_1, %c0_2] : memref<2x256xf32, #tpu.memory_space<vmem>>, vector<1x256xf32>
    %2 = vector.broadcast %1 : vector<1x256xf32> to vector<256x256xf32>
    %3 = arith.mulf %0, %2 : vector<256x256xf32>
    %cst = arith.constant dense<0.000000e+00> : vector<256xf32>
    %4 = vector.multi_reduction <add>, %3, %cst [1] : vector<256x256xf32> to vector<256xf32>
    %5 = vector.shape_cast %4 : vector<256xf32> to vector<256x1xf32>
    %c0_3 = arith.constant 0 : index
    %c0_4 = arith.constant 0 : index
    %6 = vector.load %arg5[%c0_3, %c0_4] : memref<2x1xf32, #tpu.memory_space<vmem>>, vector<1x1xf32>
    %7 = vector.broadcast %6 : vector<1x1xf32> to vector<256x1xf32>
    %8 = arith.addf %5, %7 : vector<256x1xf32>
    %9 = math.tanh %8 : vector<256x1xf32>
    %c1 = arith.constant 1 : index
    %c0_5 = arith.constant 0 : index
    %10 = vector.load %arg4[%c1, %c0_5] : memref<2x256xf32, #tpu.memory_space<vmem>>, vector<1x256xf32>
    %11 = vector.broadcast %10 : vector<1x256xf32> to vector<256x256xf32>
    %12 = arith.mulf %0, %11 : vector<256x256xf32>
    %cst_6 = arith.constant dense<0.000000e+00> : vector<256xf32>
    %13 = vector.multi_reduction <add>, %12, %cst_6 [1] : vector<256x256xf32> to vector<256xf32>
    %14 = vector.shape_cast %13 : vector<256xf32> to vector<256x1xf32>
    %c1_7 = arith.constant 1 : index
    %c0_8 = arith.constant 0 : index
    %15 = vector.load %arg5[%c1_7, %c0_8] : memref<2x1xf32, #tpu.memory_space<vmem>>, vector<1x1xf32>
    %16 = vector.broadcast %15 : vector<1x1xf32> to vector<256x1xf32>
    %17 = arith.addf %14, %16 : vector<256x1xf32>
    %18 = math.tanh %17 : vector<256x1xf32>
    %c0_9 = arith.constant 0 : index
    %c0_10 = arith.constant 0 : index
    %19 = vector.load %arg2[%c0_9, %c0_10] : memref<256x256xf32, #tpu.memory_space<vmem>>, vector<256x256xf32>
    %c0_11 = arith.constant 0 : index
    %c0_12 = arith.constant 0 : index
    %20 = vector.load %arg8[%c0_11, %c0_12] : memref<256x256xf32, #tpu.memory_space<vmem>>, vector<256x256xf32>
    %cst_13 = arith.constant dense<0.000000e+00> : vector<256x256xf32>
    %21 = tpu.matmul %19, %20, %cst_13 {dimension_numbers = #tpu.dot_dimension_numbers<[1], [0], [0], [1], [0, 0, 1, 1], [], []>} : vector<256x256xf32>, vector<256x256xf32>, vector<256x256xf32> -> vector<256x256xf32>
    %c0_14 = arith.constant 0 : index
    %c0_15 = arith.constant 0 : index
    %22 = vector.load %arg9[%c0_14, %c0_15] : memref<1x256xf32, #tpu.memory_space<vmem>>, vector<1x256xf32>
    %23 = vector.broadcast %22 : vector<1x256xf32> to vector<256x256xf32>
    %24 = arith.addf %21, %23 : vector<256x256xf32>
    %c0_16 = arith.constant 0 : index
    %c0_17 = arith.constant 0 : index
    %25 = vector.load %arg6[%c0_16, %c0_17] : memref<2x256xf32, #tpu.memory_space<vmem>>, vector<1x256xf32>
    %26 = vector.broadcast %9 : vector<256x1xf32> to vector<256x256xf32>
    %27 = vector.broadcast %25 : vector<1x256xf32> to vector<256x256xf32>
    %28 = arith.mulf %26, %27 : vector<256x256xf32>
    %29 = arith.addf %24, %28 : vector<256x256xf32>
    %c1_18 = arith.constant 1 : index
    %c0_19 = arith.constant 0 : index
    %30 = vector.load %arg6[%c1_18, %c0_19] : memref<2x256xf32, #tpu.memory_space<vmem>>, vector<1x256xf32>
    %31 = vector.broadcast %18 : vector<256x1xf32> to vector<256x256xf32>
    %32 = vector.broadcast %30 : vector<1x256xf32> to vector<256x256xf32>
    %33 = arith.mulf %31, %32 : vector<256x256xf32>
    %34 = arith.addf %29, %33 : vector<256x256xf32>
    %35 = math.tanh %34 : vector<256x256xf32>
    %c0_20 = arith.constant 0 : index
    %c0_21 = arith.constant 0 : index
    %36 = vector.load %arg12[%c0_20, %c0_21] : memref<256x256xf32, #tpu.memory_space<vmem>>, vector<256x256xf32>
    tpu.vector_store %arg12[%c0_20, %c0_21], %35 {strides = array<i32>} : memref<256x256xf32, #tpu.memory_space<vmem>>, vector<256x256xf32>,
    %c0_22 = arith.constant 0 : index
    %c0_23 = arith.constant 0 : index
    %37 = vector.load %arg3[%c0_22, %c0_23] : memref<256x256xf32, #tpu.memory_space<vmem>>, vector<256x256xf32>
    %c0_24 = arith.constant 0 : index
    %c0_25 = arith.constant 0 : index
    %38 = vector.load %arg10[%c0_24, %c0_25] : memref<256x256xf32, #tpu.memory_space<vmem>>, vector<256x256xf32>
    %cst_26 = arith.constant dense<0.000000e+00> : vector<256x256xf32>
    %39 = tpu.matmul %37, %38, %cst_26 {dimension_numbers = #tpu.dot_dimension_numbers<[1], [0], [0], [1], [0, 0, 1, 1], [], []>} : vector<256x256xf32>, vector<256x256xf32>, vector<256x256xf32> -> vector<256x256xf32>
    %c0_27 = arith.constant 0 : index
    %c0_28 = arith.constant 0 : index
    %40 = vector.load %arg11[%c0_27, %c0_28] : memref<1x256xf32, #tpu.memory_space<vmem>>, vector<1x256xf32>
    %41 = vector.broadcast %40 : vector<1x256xf32> to vector<256x256xf32>
    %42 = arith.addf %39, %41 : vector<256x256xf32>
    %c0_29 = arith.constant 0 : index
    %c0_30 = arith.constant 0 : index
    %43 = vector.load %arg7[%c0_29, %c0_30] : memref<2x256xf32, #tpu.memory_space<vmem>>, vector<1x256xf32>
    %44 = vector.broadcast %9 : vector<256x1xf32> to vector<256x256xf32>
    %45 = vector.broadcast %43 : vector<1x256xf32> to vector<256x256xf32>
    %46 = arith.mulf %44, %45 : vector<256x256xf32>
    %47 = arith.addf %42, %46 : vector<256x256xf32>
    %c1_31 = arith.constant 1 : index
    %c0_32 = arith.constant 0 : index
    %48 = vector.load %arg7[%c1_31, %c0_32] : memref<2x256xf32, #tpu.memory_space<vmem>>, vector<1x256xf32>
    %49 = vector.broadcast %18 : vector<256x1xf32> to vector<256x256xf32>
    %50 = vector.broadcast %48 : vector<1x256xf32> to vector<256x256xf32>
    %51 = arith.mulf %49, %50 : vector<256x256xf32>
    %52 = arith.addf %47, %51 : vector<256x256xf32>
    %53 = math.tanh %52 : vector<256x256xf32>
    %c0_33 = arith.constant 0 : index
    %c0_34 = arith.constant 0 : index
    %54 = vector.load %arg13[%c0_33, %c0_34] : memref<256x256xf32, #tpu.memory_space<vmem>>, vector<256x256xf32>
    tpu.vector_store %arg13[%c0_33, %c0_34], %53 {strides = array<i32>} : memref<256x256xf32, #tpu.memory_space<vmem>>, vector<256x256xf32>,
    return
  }
  func.func @transform_0(%arg0: i32) -> (i32, i32) {
    %c0_i32 = arith.constant 0 : i32
    %c0_i32_0 = arith.constant 0 : i32
    return %arg0, %c0_i32 : i32, i32
  }
  func.func @transform_1(%arg0: i32) -> (i32, i32) {
    %c0_i32 = arith.constant 0 : i32
    %c0_i32_0 = arith.constant 0 : i32
    return %arg0, %c0_i32 : i32, i32
  }
  func.func @transform_2(%arg0: i32) -> (i32, i32) {
    %c0_i32 = arith.constant 0 : i32
    %c0_i32_0 = arith.constant 0 : i32
    return %arg0, %c0_i32 : i32, i32
  }
  func.func @transform_3(%arg0: i32) -> (i32, i32) {
    %c0_i32 = arith.constant 0 : i32
    %c0_i32_0 = arith.constant 0 : i32
    %c0_i32_1 = arith.constant 0 : i32
    return %c0_i32, %c0_i32_0 : i32, i32
  }
  func.func @transform_4(%arg0: i32) -> (i32, i32) {
    %c0_i32 = arith.constant 0 : i32
    %c0_i32_0 = arith.constant 0 : i32
    %c0_i32_1 = arith.constant 0 : i32
    return %c0_i32, %c0_i32_0 : i32, i32
  }
  func.func @transform_5(%arg0: i32) -> (i32, i32) {
    %c0_i32 = arith.constant 0 : i32
    %c0_i32_0 = arith.constant 0 : i32
    %c0_i32_1 = arith.constant 0 : i32
    return %c0_i32, %c0_i32_0 : i32, i32
  }
  func.func @transform_6(%arg0: i32) -> (i32, i32) {
    %c0_i32 = arith.constant 0 : i32
    %c0_i32_0 = arith.constant 0 : i32
    %c0_i32_1 = arith.constant 0 : i32
    return %c0_i32, %c0_i32_0 : i32, i32
  }
  func.func @transform_7(%arg0: i32) -> (i32, i32) {
    %c0_i32 = arith.constant 0 : i32
    %c0_i32_0 = arith.constant 0 : i32
    %c0_i32_1 = arith.constant 0 : i32
    return %c0_i32, %c0_i32_0 : i32, i32
  }
  func.func @transform_8(%arg0: i32) -> (i32, i32) {
    %c0_i32 = arith.constant 0 : i32
    %c0_i32_0 = arith.constant 0 : i32
    %c0_i32_1 = arith.constant 0 : i32
    return %c0_i32, %c0_i32_0 : i32, i32
  }
  func.func @transform_9(%arg0: i32) -> (i32, i32) {
    %c0_i32 = arith.constant 0 : i32
    %c0_i32_0 = arith.constant 0 : i32
    %c0_i32_1 = arith.constant 0 : i32
    return %c0_i32, %c0_i32_0 : i32, i32
  }
  func.func @transform_10(%arg0: i32) -> (i32, i32) {
    %c0_i32 = arith.constant 0 : i32
    %c0_i32_0 = arith.constant 0 : i32
    %c0_i32_1 = arith.constant 0 : i32
    return %c0_i32, %c0_i32_0 : i32, i32
  }
  func.func @transform_11(%arg0: i32) -> (i32, i32) {
    %c0_i32 = arith.constant 0 : i32
    %c0_i32_0 = arith.constant 0 : i32
    return %arg0, %c0_i32 : i32, i32
  }
  func.func @transform_12(%arg0: i32) -> (i32, i32) {
    %c0_i32 = arith.constant 0 : i32
    %c0_i32_0 = arith.constant 0 : i32
    return %arg0, %c0_i32 : i32, i32
  }
}

</mosaic_0001>

<llo_original>
// kernel: tpu_custom_call.1
$region0: #{tpu_custom_call.1}
  #allocation0 [shape = 'u32[]', space=smem, size = 0x4, offset = 0x4, fixed_abs, tag = 'smem constant byte address 0x4 - core index']
  #allocation1 [shape = 'u32[72,128]{1,0:T(1,128)}', space=vmem, size = 0x9000, scoped, tag = 'internal scratch']
  %s0 = inlined_call_operand.hbm [shape: f32[256,256], index: 0, kind: input, shape index: {}]
  %s1 = inlined_call_operand.hbm [shape: f32[256,256], index: 1, kind: input, shape index: {}]
  %s2 = inlined_call_operand.hbm [shape: f32[256,256], index: 2, kind: input, shape index: {}]
  %s3 = inlined_call_operand.vmem [shape: f32[2,256], index: 3, kind: input, shape index: {}]
  %s4 = inlined_call_operand.vmem [shape: f32[2,1], index: 4, kind: input, shape index: {}]
  %s5 = inlined_call_operand.hbm [shape: f32[2,256], index: 5, kind: input, shape index: {}]
  %s6 = inlined_call_operand.vmem [shape: f32[2,256], index: 6, kind: input, shape index: {}]
  %s7 = inlined_call_operand.hbm [shape: f32[256,256], index: 7, kind: input, shape index: {}]
  %s8 = inlined_call_operand.vmem [shape: f32[1,256], index: 8, kind: input, shape index: {}]
  %s9 = inlined_call_operand.hbm [shape: f32[256,256], index: 9, kind: input, shape index: {}]
  %s10 = inlined_call_operand.vmem [shape: f32[1,256], index: 10, kind: input, shape index: {}]
  %s11 = inlined_call_operand.hbm [shape: f32[256,256], index: 11, kind: output, shape index: {0}]
  %s12 = inlined_call_operand.hbm [shape: f32[256,256], index: 12, kind: output, shape index: {1}]
  %13 = xla_tuple %s11, %s12
  %s14 = sld [smem:[#allocation0]]
  $region86: #{tpu_custom_call.1} parent=0
    _
  %s16 = ssub.s32 1, %s14
  %s17 = scalar_select 0, %s16, %s14
  $region1: #{tpu_custom_call.1} parent=0
    #allocation2 [shape = 'u8[262144]{0}', space=vmem, size = 0x40000, scoped, tag = 'input window, operand 0, single buffered']
    #allocation3 [shape = 's32[1]{0}', space=sflag, size = 0x4, scoped, tag = 'scoped memory for tpu_custom_call.1']
    #allocation4 [shape = 's32[1]{0}', space=sflag, size = 0x4, scoped, tag = 'scoped memory for tpu_custom_call.1']
    #allocation5 [shape = 'u8[262144]{0}', space=vmem, size = 0x40000, scoped, tag = 'input window, operand 1, single buffered']
    #allocation6 [shape = 's32[1]{0}', space=sflag, size = 0x4, scoped, tag = 'scoped memory for tpu_custom_call.1']
    #allocation7 [shape = 'u8[262144]{0}', space=vmem, size = 0x40000, scoped, tag = 'input window, operand 2, single buffered']
    #allocation8 [shape = 'u8[2048]{0}', space=vmem, size = 0x800, scoped, tag = 'input window, operand 5, single buffered']
    #allocation9 [shape = 's32[1]{0}', space=sflag, size = 0x4, scoped, tag = 'scoped memory for tpu_custom_call.1']
    #allocation10 [shape = 'u8[262144]{0}', space=vmem, size = 0x40000, scoped, tag = 'input window, operand 7, single buffered']
    #allocation11 [shape = 'u8[262144]{0}', space=vmem, size = 0x40000, scoped, tag = 'input window, operand 9, single buffered']
    #allocation12 [shape = 's32[1]{0}', space=sflag, size = 0x4, scoped, tag = 'scoped memory for tpu_custom_call.1']
    #allocation13 [shape = 'u8[262144]{0}', space=vmem, size = 0x40000, scoped, tag = 'output window, operand 0, single buffered']
    #allocation14 [shape = 'u8[262144]{0}', space=vmem, size = 0x40000, scoped, tag = 'output window, operand 1, single buffered']
    #allocation15 [shape = 's32[1]{0}', space=sflag, size = 0x4, scoped, tag = 'scoped memory for tpu_custom_call.1']
    %18 = vsyncpa [#allocation3], 0
    %19 = vsyncpa [#allocation6], 0
    %20 = vsyncpa [#allocation9], 0
    %21 = vsyncpa [#allocation12], 0
    %22 = vsyncpa [#allocation4], 0
    %23 = vsyncpa [#allocation15], 0
    // Predicated region
    $region2: #{tpu_custom_call.1} parent=1 // pred_check
      _
    $region3: #{tpu_custom_call.1} parent=1 // pred_check_branch
      %25 = sbr.rel (0) target = $region5
    $region4: #{tpu_custom_call.1} parent=1 // pred_region
      %27 = vsyncadd [#allocation3], 0
      %s28 = sshll.u32 %s0, 4
      %s29 = int_to_ptr.hbm [resolvable:$true] %s28
      %s30 = sshll.u32 [#allocation2], 4
      %s31 = int_to_ptr.vmem [resolvable:$true] %s30
      %36 = dma.hbm_to_vmem [thread:$0]  %s29, 8192, %s31, [#allocation3], 256, 256, 16
    $region5: #{tpu_custom_call.1} parent=1 // pred_fallthru
      _
    // Predicated region
    $region6: #{tpu_custom_call.1} parent=1 // pred_check
      _
    $region7: #{tpu_custom_call.1} parent=1 // pred_check_branch
      %38 = sbr.rel (0) target = $region9
    $region8: #{tpu_custom_call.1} parent=1 // pred_region
      %40 = vsyncadd [#allocation6], 0
      %s41 = sshll.u32 %s1, 4
      %s42 = int_to_ptr.hbm [resolvable:$true] %s41
      %s43 = sshll.u32 [#allocation5], 4
      %s44 = int_to_ptr.vmem [resolvable:$true] %s43
      %49 = dma.hbm_to_vmem [thread:$0]  %s42, 8192, %s44, [#allocation6], 256, 256, 16
    $region9: #{tpu_custom_call.1} parent=1 // pred_fallthru
      _
    // Predicated region
    $region10: #{tpu_custom_call.1} parent=1 // pred_check
      _
    $region11: #{tpu_custom_call.1} parent=1 // pred_check_branch
      %51 = sbr.rel (0) target = $region13
    $region12: #{tpu_custom_call.1} parent=1 // pred_region
      %53 = vsyncadd [#allocation6], 0
      %s54 = sshll.u32 %s2, 4
      %s55 = int_to_ptr.hbm [resolvable:$true] %s54
      %s56 = sshll.u32 [#allocation7], 4
      %s57 = int_to_ptr.vmem [resolvable:$true] %s56
      %62 = dma.hbm_to_vmem [thread:$0]  %s55, 8192, %s57, [#allocation6], 256, 256, 16
    $region13: #{tpu_custom_call.1} parent=1 // pred_fallthru
      _
    // Predicated region
    $region14: #{tpu_custom_call.1} parent=1 // pred_check
      _
    $region15: #{tpu_custom_call.1} parent=1 // pred_check_branch
      %64 = sbr.rel (0) target = $region17
    $region16: #{tpu_custom_call.1} parent=1 // pred_region
      _
    $region17: #{tpu_custom_call.1} parent=1 // pred_fallthru
      _
    // Predicated region
    $region18: #{tpu_custom_call.1} parent=1 // pred_check
      _
    $region19: #{tpu_custom_call.1} parent=1 // pred_check_branch
      %66 = sbr.rel (0) target = $region21
    $region20: #{tpu_custom_call.1} parent=1 // pred_region
      _
    $region21: #{tpu_custom_call.1} parent=1 // pred_fallthru
      _
    // Predicated region
    $region22: #{tpu_custom_call.1} parent=1 // pred_check
      _
    $region23: #{tpu_custom_call.1} parent=1 // pred_check_branch
      %68 = sbr.rel (0) target = $region25
    $region24: #{tpu_custom_call.1} parent=1 // pred_region
      %70 = vsyncadd [#allocation9], 0
      %s72 = sshll.u32 %s5, 4
      %s73 = int_to_ptr.hbm [resolvable:$true] %s72
      %s74 = sshll.u32 [#allocation8], 4
      %s75 = int_to_ptr.vmem [resolvable:$true] %s74
      %77 = dma.hbm_to_vmem [thread:$0]  %s73, 64, %s75, [#allocation9]
    $region25: #{tpu_custom_call.1} parent=1 // pred_fallthru
      _
    // Predicated region
    $region26: #{tpu_custom_call.1} parent=1 // pred_check
      _
    $region27: #{tpu_custom_call.1} parent=1 // pred_check_branch
      %79 = sbr.rel (0) target = $region29
    $region28: #{tpu_custom_call.1} parent=1 // pred_region
      _
    $region29: #{tpu_custom_call.1} parent=1 // pred_fallthru
      _
    // Predicated region
    $region30: #{tpu_custom_call.1} parent=1 // pred_check
      _
    $region31: #{tpu_custom_call.1} parent=1 // pred_check_branch
      %81 = sbr.rel (0) target = $region33
    $region32: #{tpu_custom_call.1} parent=1 // pred_region
      %83 = vsyncadd [#allocation9], 0
      %s84 = sshll.u32 %s7, 4
      %s85 = int_to_ptr.hbm [resolvable:$true] %s84
      %s86 = sshll.u32 [#allocation10], 4
      %s87 = int_to_ptr.vmem [resolvable:$true] %s86
      %92 = dma.hbm_to_vmem [thread:$0]  %s85, 8192, %s87, [#allocation9], 256, 256, 16
    $region33: #{tpu_custom_call.1} parent=1 // pred_fallthru
      _
    // Predicated region
    $region34: #{tpu_custom_call.1} parent=1 // pred_check
      _
    $region35: #{tpu_custom_call.1} parent=1 // pred_check_branch
      %94 = sbr.rel (0) target = $region37
    $region36: #{tpu_custom_call.1} parent=1 // pred_region
      _
    $region37: #{tpu_custom_call.1} parent=1 // pred_fallthru
      _
    // Predicated region
    $region38: #{tpu_custom_call.1} parent=1 // pred_check
      _
    $region39: #{tpu_custom_call.1} parent=1 // pred_check_branch
      %96 = sbr.rel (0) target = $region41
    $region40: #{tpu_custom_call.1} parent=1 // pred_region
      %98 = vsyncadd [#allocation12], 0
      %s99 = sshll.u32 %s9, 4
      %s100 = int_to_ptr.hbm [resolvable:$true] %s99
      %s101 = sshll.u32 [#allocation11], 4
      %s102 = int_to_ptr.vmem [resolvable:$true] %s101
      %107 = dma.hbm_to_vmem [thread:$0]  %s100, 8192, %s102, [#allocation12], 256, 256, 16
    $region41: #{tpu_custom_call.1} parent=1 // pred_fallthru
      _
    // Predicated region
    $region42: #{tpu_custom_call.1} parent=1 // pred_check
      _
    $region43: #{tpu_custom_call.1} parent=1 // pred_check_branch
      %109 = sbr.rel (0) target = $region45
    $region44: #{tpu_custom_call.1} parent=1 // pred_region
      _
    $region45: #{tpu_custom_call.1} parent=1 // pred_fallthru
      _
    // Predicated region
    $region46: #{tpu_custom_call.1} parent=1 // pred_check
      _
    $region47: #{tpu_custom_call.1} parent=1 // pred_check_branch
      %111 = sbr.rel (0) target = $region49
    $region48: #{tpu_custom_call.1} parent=1 // pred_region
      %113 = dma.done [#allocation3], 8192
    $region49: #{tpu_custom_call.1} parent=1 // pred_fallthru
      _
    // Predicated region
    $region50: #{tpu_custom_call.1} parent=1 // pred_check
      _
    $region51: #{tpu_custom_call.1} parent=1 // pred_check_branch
      %115 = sbr.rel (0) target = $region53
    $region52: #{tpu_custom_call.1} parent=1 // pred_region
      %117 = dma.done [#allocation6], 8192
    $region53: #{tpu_custom_call.1} parent=1 // pred_fallthru
      _
    // Predicated region
    $region54: #{tpu_custom_call.1} parent=1 // pred_check
      _
    $region55: #{tpu_custom_call.1} parent=1 // pred_check_branch
      %119 = sbr.rel (0) target = $region57
    $region56: #{tpu_custom_call.1} parent=1 // pred_region
      %121 = dma.done [#allocation6], 8192
    $region57: #{tpu_custom_call.1} parent=1 // pred_fallthru
      _
    // Predicated region
    $region58: #{tpu_custom_call.1} parent=1 // pred_check
      _
    $region59: #{tpu_custom_call.1} parent=1 // pred_check_branch
      %123 = sbr.rel (0) target = $region61
    $region60: #{tpu_custom_call.1} parent=1 // pred_region
      %125 = dma.done [#allocation9], 64
    $region61: #{tpu_custom_call.1} parent=1 // pred_fallthru
      _
    // Predicated region
    $region62: #{tpu_custom_call.1} parent=1 // pred_check
      _
    $region63: #{tpu_custom_call.1} parent=1 // pred_check_branch
      %127 = sbr.rel (0) target = $region65
    $region64: #{tpu_custom_call.1} parent=1 // pred_region
      %129 = dma.done [#allocation9], 8192
    $region65: #{tpu_custom_call.1} parent=1 // pred_fallthru
      _
    // Predicated region
    $region66: #{tpu_custom_call.1} parent=1 // pred_check
      _
    $region67: #{tpu_custom_call.1} parent=1 // pred_check_branch
      %131 = sbr.rel (0) target = $region69
    $region68: #{tpu_custom_call.1} parent=1 // pred_region
      %133 = dma.done [#allocation12], 8192
    $region69: #{tpu_custom_call.1} parent=1 // pred_fallthru
      _
    %v134 = vld [vmem:[#allocation2] sm:$0xff]
    %v135 = vld [vmem:[#allocation2 + $0x8] sm:$0xff]
    %v136 = vld [vmem:[#allocation2 + $0x10] sm:$0xff]
    %v137 = vld [vmem:[#allocation2 + $0x18] sm:$0xff]
    %v138 = vld [vmem:[#allocation2 + $0x20] sm:$0xff]
    %v139 = vld [vmem:[#allocation2 + $0x28] sm:$0xff]
    %v140 = vld [vmem:[#allocation2 + $0x30] sm:$0xff]
    %v141 = vld [vmem:[#allocation2 + $0x38] sm:$0xff]
    %v142 = vld [vmem:[#allocation2 + $0x40] sm:$0xff]
    %v143 = vld [vmem:[#allocation2 + $0x48] sm:$0xff]
    %v144 = vld [vmem:[#allocation2 + $0x50] sm:$0xff]
    %v145 = vld [vmem:[#allocation2 + $0x58] sm:$0xff]
    %v146 = vld [vmem:[#allocation2 + $0x60] sm:$0xff]
    %v147 = vld [vmem:[#allocation2 + $0x68] sm:$0xff]
    %v148 = vld [vmem:[#allocation2 + $0x70] sm:$0xff]
    %v149 = vld [vmem:[#allocation2 + $0x78] sm:$0xff]
    %v150 = vld [vmem:[#allocation2 + $0x80] sm:$0xff]
    %v151 = vld [vmem:[#allocation2 + $0x88] sm:$0xff]
    %v152 = vld [vmem:[#allocation2 + $0x90] sm:$0xff]
    %v153 = vld [vmem:[#allocation2 + $0x98] sm:$0xff]
    %v154 = vld [vmem:[#allocation2 + $0xa0] sm:$0xff]
    %v155 = vld [vmem:[#allocation2 + $0xa8] sm:$0xff]
    %v156 = vld [vmem:[#allocation2 + $0xb0] sm:$0xff]
    %v157 = vld [vmem:[#allocation2 + $0xb8] sm:$0xff]
    %v158 = vld [vmem:[#allocation2 + $0xc0] sm:$0xff]
    %v159 = vld [vmem:[#allocation2 + $0xc8] sm:$0xff]
    %v160 = vld [vmem:[#allocation2 + $0xd0] sm:$0xff]
    %v161 = vld [vmem:[#allocation2 + $0xd8] sm:$0xff]
    %v162 = vld [vmem:[#allocation2 + $0xe0] sm:$0xff]
    %v163 = vld [vmem:[#allocation2 + $0xe8] sm:$0xff]
    %v164 = vld [vmem:[#allocation2 + $0xf0] sm:$0xff]
    %v165 = vld [vmem:[#allocation2 + $0xf8] sm:$0xff]
    %v166 = vld [vmem:[#allocation2 + $0x100] sm:$0xff]
    %v167 = vld [vmem:[#allocation2 + $0x108] sm:$0xff]
    %v168 = vld [vmem:[#allocation2 + $0x110] sm:$0xff]
    %v169 = vld [vmem:[#allocation2 + $0x118] sm:$0xff]
    %v170 = vld [vmem:[#allocation2 + $0x120] sm:$0xff]
    %v171 = vld [vmem:[#allocation2 + $0x128] sm:$0xff]
    %v172 = vld [vmem:[#allocation2 + $0x130] sm:$0xff]
    %v173 = vld [vmem:[#allocation2 + $0x138] sm:$0xff]
    %v174 = vld [vmem:[#allocation2 + $0x140] sm:$0xff]
    %v175 = vld [vmem:[#allocation2 + $0x148] sm:$0xff]
    %v176 = vld [vmem:[#allocation2 + $0x150] sm:$0xff]
    %v177 = vld [vmem:[#allocation2 + $0x158] sm:$0xff]
    %v178 = vld [vmem:[#allocation2 + $0x160] sm:$0xff]
    %v179 = vld [vmem:[#allocation2 + $0x168] sm:$0xff]
    %v180 = vld [vmem:[#allocation2 + $0x170] sm:$0xff]
    %v181 = vld [vmem:[#allocation2 + $0x178] sm:$0xff]
    %v182 = vld [vmem:[#allocation2 + $0x180] sm:$0xff]
    %v183 = vld [vmem:[#allocation2 + $0x188] sm:$0xff]
    %v184 = vld [vmem:[#allocation2 + $0x190] sm:$0xff]
    %v185 = vld [vmem:[#allocation2 + $0x198] sm:$0xff]
    %v186 = vld [vmem:[#allocation2 + $0x1a0] sm:$0xff]
    %v187 = vld [vmem:[#allocation2 + $0x1a8] sm:$0xff]
    %v188 = vld [vmem:[#allocation2 + $0x1b0] sm:$0xff]
    %v189 = vld [vmem:[#allocation2 + $0x1b8] sm:$0xff]
    %v190 = vld [vmem:[#allocation2 + $0x1c0] sm:$0xff]
    %v191 = vld [vmem:[#allocation2 + $0x1c8] sm:$0xff]
    %v192 = vld [vmem:[#allocation2 + $0x1d0] sm:$0xff]
    %v193 = vld [vmem:[#allocation2 + $0x1d8] sm:$0xff]
    %v194 = vld [vmem:[#allocation2 + $0x1e0] sm:$0xff]
    %v195 = vld [vmem:[#allocation2 + $0x1e8] sm:$0xff]
    %v196 = vld [vmem:[#allocation2 + $0x1f0] sm:$0xff]
    %v197 = vld [vmem:[#allocation2 + $0x1f8] sm:$0xff]
    %v198 = vld [vmem:[%s3] ss:$2 sm:$0x3]
    %v200 = vperm.slane %v198, 0
    %v201 = vperm.slane %v198, 1
    %v204 = vmul.f32 %v134, %v200
    %v205 = vmul.f32 %v135, %v201
    %v206 = vmul.f32 %v136, %v200
    %v207 = vmul.f32 %v137, %v201
    %v208 = vmul.f32 %v138, %v200
    %v209 = vmul.f32 %v139, %v201
    %v210 = vmul.f32 %v140, %v200
    %v211 = vmul.f32 %v141, %v201
    %v212 = vmul.f32 %v142, %v200
    %v213 = vmul.f32 %v143, %v201
    %v214 = vmul.f32 %v144, %v200
    %v215 = vmul.f32 %v145, %v201
    %v216 = vmul.f32 %v146, %v200
    %v217 = vmul.f32 %v147, %v201
    %v218 = vmul.f32 %v148, %v200
    %v219 = vmul.f32 %v149, %v201
    %v220 = vmul.f32 %v150, %v200
    %v221 = vmul.f32 %v151, %v201
    %v222 = vmul.f32 %v152, %v200
    %v223 = vmul.f32 %v153, %v201
    %v224 = vmul.f32 %v154, %v200
    %v225 = vmul.f32 %v155, %v201
    %v226 = vmul.f32 %v156, %v200
    %v227 = vmul.f32 %v157, %v201
    %v228 = vmul.f32 %v158, %v200
    %v229 = vmul.f32 %v159, %v201
    %v230 = vmul.f32 %v160, %v200
    %v231 = vmul.f32 %v161, %v201
    %v232 = vmul.f32 %v162, %v200
    %v233 = vmul.f32 %v163, %v201
    %v234 = vmul.f32 %v164, %v200
    %v235 = vmul.f32 %v165, %v201
    %v236 = vmul.f32 %v166, %v200
    %v237 = vmul.f32 %v167, %v201
    %v238 = vmul.f32 %v168, %v200
    %v239 = vmul.f32 %v169, %v201
    %v240 = vmul.f32 %v170, %v200
    %v241 = vmul.f32 %v171, %v201
    %v242 = vmul.f32 %v172, %v200
    %v243 = vmul.f32 %v173, %v201
    %v244 = vmul.f32 %v174, %v200
    %v245 = vmul.f32 %v175, %v201
    %v246 = vmul.f32 %v176, %v200
    %v247 = vmul.f32 %v177, %v201
    %v248 = vmul.f32 %v178, %v200
    %v249 = vmul.f32 %v179, %v201
    %v250 = vmul.f32 %v180, %v200
    %v251 = vmul.f32 %v181, %v201
    %v252 = vmul.f32 %v182, %v200
    %v253 = vmul.f32 %v183, %v201
    %v254 = vmul.f32 %v184, %v200
    %v255 = vmul.f32 %v185, %v201
    %v256 = vmul.f32 %v186, %v200
    %v257 = vmul.f32 %v187, %v201
    %v258 = vmul.f32 %v188, %v200
    %v259 = vmul.f32 %v189, %v201
    %v260 = vmul.f32 %v190, %v200
    %v261 = vmul.f32 %v191, %v201
    %v262 = vmul.f32 %v192, %v200
    %v263 = vmul.f32 %v193, %v201
    %v264 = vmul.f32 %v194, %v200
    %v265 = vmul.f32 %v195, %v201
    %v266 = vmul.f32 %v196, %v200
    %v267 = vmul.f32 %v197, %v201
    %v268 = vadd.f32 %v204, %v205
    %269 = vadd.xlane.f32.xlu0 %v268
    %v270 = vpop.xlane.xlu0 %269
    %v271 = vadd.f32 %v206, %v207
    %272 = vadd.xlane.f32.xlu0 %v271
    %v273 = vpop.xlane.xlu0 %272
    %v274 = vadd.f32 %v208, %v209
    %275 = vadd.xlane.f32.xlu0 %v274
    %v276 = vpop.xlane.xlu0 %275
    %v277 = vadd.f32 %v210, %v211
    %278 = vadd.xlane.f32.xlu0 %v277
    %v279 = vpop.xlane.xlu0 %278
    %v280 = vadd.f32 %v212, %v213
    %281 = vadd.xlane.f32.xlu0 %v280
    %v282 = vpop.xlane.xlu0 %281
    %v283 = vadd.f32 %v214, %v215
    %284 = vadd.xlane.f32.xlu0 %v283
    %v285 = vpop.xlane.xlu0 %284
    %v286 = vadd.f32 %v216, %v217
    %287 = vadd.xlane.f32.xlu0 %v286
    %v288 = vpop.xlane.xlu0 %287
    %v289 = vadd.f32 %v218, %v219
    %290 = vadd.xlane.f32.xlu0 %v289
    %v291 = vpop.xlane.xlu0 %290
    %v292 = vadd.f32 %v220, %v221
    %293 = vadd.xlane.f32.xlu0 %v292
    %v294 = vpop.xlane.xlu0 %293
    %v295 = vadd.f32 %v222, %v223
    %296 = vadd.xlane.f32.xlu0 %v295
    %v297 = vpop.xlane.xlu0 %296
    %v298 = vadd.f32 %v224, %v225
    %299 = vadd.xlane.f32.xlu0 %v298
    %v300 = vpop.xlane.xlu0 %299
    %v301 = vadd.f32 %v226, %v227
    %302 = vadd.xlane.f32.xlu0 %v301
    %v303 = vpop.xlane.xlu0 %302
    %v304 = vadd.f32 %v228, %v229
    %305 = vadd.xlane.f32.xlu0 %v304
    %v306 = vpop.xlane.xlu0 %305
    %v307 = vadd.f32 %v230, %v231
    %308 = vadd.xlane.f32.xlu0 %v307
    %v309 = vpop.xlane.xlu0 %308
    %v310 = vadd.f32 %v232, %v233
    %311 = vadd.xlane.f32.xlu0 %v310
    %v312 = vpop.xlane.xlu0 %311
    %v313 = vadd.f32 %v234, %v235
    %314 = vadd.xlane.f32.xlu0 %v313
    %v315 = vpop.xlane.xlu0 %314
    %v316 = vadd.f32 %v236, %v237
    %317 = vadd.xlane.f32.xlu0 %v316
    %v318 = vpop.xlane.xlu0 %317
    %v319 = vadd.f32 %v238, %v239
    %320 = vadd.xlane.f32.xlu0 %v319
    %v321 = vpop.xlane.xlu0 %320
    %v322 = vadd.f32 %v240, %v241
    %323 = vadd.xlane.f32.xlu0 %v322
    %v324 = vpop.xlane.xlu0 %323
    %v325 = vadd.f32 %v242, %v243
    %326 = vadd.xlane.f32.xlu0 %v325
    %v327 = vpop.xlane.xlu0 %326
    %v328 = vadd.f32 %v244, %v245
    %329 = vadd.xlane.f32.xlu0 %v328
    %v330 = vpop.xlane.xlu0 %329
    %v331 = vadd.f32 %v246, %v247
    %332 = vadd.xlane.f32.xlu0 %v331
    %v333 = vpop.xlane.xlu0 %332
    %v334 = vadd.f32 %v248, %v249
    %335 = vadd.xlane.f32.xlu0 %v334
    %v336 = vpop.xlane.xlu0 %335
    %v337 = vadd.f32 %v250, %v251
    %338 = vadd.xlane.f32.xlu0 %v337
    %v339 = vpop.xlane.xlu0 %338
    %v340 = vadd.f32 %v252, %v253
    %341 = vadd.xlane.f32.xlu0 %v340
    %v342 = vpop.xlane.xlu0 %341
    %v343 = vadd.f32 %v254, %v255
    %344 = vadd.xlane.f32.xlu0 %v343
    %v345 = vpop.xlane.xlu0 %344
    %v346 = vadd.f32 %v256, %v257
    %347 = vadd.xlane.f32.xlu0 %v346
    %v348 = vpop.xlane.xlu0 %347
    %v349 = vadd.f32 %v258, %v259
    %350 = vadd.xlane.f32.xlu0 %v349
    %v351 = vpop.xlane.xlu0 %350
    %v352 = vadd.f32 %v260, %v261
    %353 = vadd.xlane.f32.xlu0 %v352
    %v354 = vpop.xlane.xlu0 %353
    %v355 = vadd.f32 %v262, %v263
    %356 = vadd.xlane.f32.xlu0 %v355
    %v357 = vpop.xlane.xlu0 %356
    %v358 = vadd.f32 %v264, %v265
    %359 = vadd.xlane.f32.xlu0 %v358
    %v360 = vpop.xlane.xlu0 %359
    %v361 = vadd.f32 %v266, %v267
    %362 = vadd.xlane.f32.xlu0 %v361
    %v363 = vpop.xlane.xlu0 %362
    %v364 = vld [vmem:[%s4] sm:$0x1]
    %v365 = vperm.slane %v364, 0
    %v366 = vadd.f32 %v270, %v365
    %v367 = vadd.f32 %v273, %v365
    %v368 = vadd.f32 %v276, %v365
    %v369 = vadd.f32 %v279, %v365
    %v370 = vadd.f32 %v282, %v365
    %v371 = vadd.f32 %v285, %v365
    %v372 = vadd.f32 %v288, %v365
    %v373 = vadd.f32 %v291, %v365
    %v374 = vadd.f32 %v294, %v365
    %v375 = vadd.f32 %v297, %v365
    %v376 = vadd.f32 %v300, %v365
    %v377 = vadd.f32 %v303, %v365
    %v378 = vadd.f32 %v306, %v365
    %v379 = vadd.f32 %v309, %v365
    %v380 = vadd.f32 %v312, %v365
    %v381 = vadd.f32 %v315, %v365
    %v382 = vadd.f32 %v318, %v365
    %v383 = vadd.f32 %v321, %v365
    %v384 = vadd.f32 %v324, %v365
    %v385 = vadd.f32 %v327, %v365
    %v386 = vadd.f32 %v330, %v365
    %v387 = vadd.f32 %v333, %v365
    %v388 = vadd.f32 %v336, %v365
    %v389 = vadd.f32 %v339, %v365
    %v390 = vadd.f32 %v342, %v365
    %v391 = vadd.f32 %v345, %v365
    %v392 = vadd.f32 %v348, %v365
    %v393 = vadd.f32 %v351, %v365
    %v394 = vadd.f32 %v354, %v365
    %v395 = vadd.f32 %v357, %v365
    %v396 = vadd.f32 %v360, %v365
    %v397 = vadd.f32 %v363, %v365
    %v398 = vtanh.pop %v366
    %v399 = vtanh.pop %v367
    %v400 = vtanh.pop %v368
    %v401 = vtanh.pop %v369
    %v402 = vtanh.pop %v370
    %v403 = vtanh.pop %v371
    %v404 = vtanh.pop %v372
    %v405 = vtanh.pop %v373
    %v406 = vtanh.pop %v374
    %v407 = vtanh.pop %v375
    %v408 = vtanh.pop %v376
    %v409 = vtanh.pop %v377
    %v410 = vtanh.pop %v378
    %v411 = vtanh.pop %v379
    %v412 = vtanh.pop %v380
    %v413 = vtanh.pop %v381
    %v414 = vtanh.pop %v382
    %v415 = vtanh.pop %v383
    %v416 = vtanh.pop %v384
    %v417 = vtanh.pop %v385
    %v418 = vtanh.pop %v386
    %v419 = vtanh.pop %v387
    %v420 = vtanh.pop %v388
    %v421 = vtanh.pop %v389
    %v422 = vtanh.pop %v390
    %v423 = vtanh.pop %v391
    %v424 = vtanh.pop %v392
    %v425 = vtanh.pop %v393
    %v426 = vtanh.pop %v394
    %v427 = vtanh.pop %v395
    %v428 = vtanh.pop %v396
    %v429 = vtanh.pop %v397
    %s430 = scalar_lea.vmem %s3, 1
    %v431 = vld [vmem:[%s430] ss:$2 sm:$0x3]
    %v433 = vperm.slane %v431, 0
    %v434 = vperm.slane %v431, 1
    %v437 = vmul.f32 %v134, %v433
    %v438 = vmul.f32 %v135, %v434
    %v439 = vmul.f32 %v136, %v433
    %v440 = vmul.f32 %v137, %v434
    %v441 = vmul.f32 %v138, %v433
    %v442 = vmul.f32 %v139, %v434
    %v443 = vmul.f32 %v140, %v433
    %v444 = vmul.f32 %v141, %v434
    %v445 = vmul.f32 %v142, %v433
    %v446 = vmul.f32 %v143, %v434
    %v447 = vmul.f32 %v144, %v433
    %v448 = vmul.f32 %v145, %v434
    %v449 = vmul.f32 %v146, %v433
    %v450 = vmul.f32 %v147, %v434
    %v451 = vmul.f32 %v148, %v433
    %v452 = vmul.f32 %v149, %v434
    %v453 = vmul.f32 %v150, %v433
    %v454 = vmul.f32 %v151, %v434
    %v455 = vmul.f32 %v152, %v433
    %v456 = vmul.f32 %v153, %v434
    %v457 = vmul.f32 %v154, %v433
    %v458 = vmul.f32 %v155, %v434
    %v459 = vmul.f32 %v156, %v433
    %v460 = vmul.f32 %v157, %v434
    %v461 = vmul.f32 %v158, %v433
    %v462 = vmul.f32 %v159, %v434
    %v463 = vmul.f32 %v160, %v433
    %v464 = vmul.f32 %v161, %v434
    %v465 = vmul.f32 %v162, %v433
    %v466 = vmul.f32 %v163, %v434
    %v467 = vmul.f32 %v164, %v433
    %v468 = vmul.f32 %v165, %v434
    %v469 = vmul.f32 %v166, %v433
    %v470 = vmul.f32 %v167, %v434
    %v471 = vmul.f32 %v168, %v433
    %v472 = vmul.f32 %v169, %v434
    %v473 = vmul.f32 %v170, %v433
    %v474 = vmul.f32 %v171, %v434
    %v475 = vmul.f32 %v172, %v433
    %v476 = vmul.f32 %v173, %v434
    %v477 = vmul.f32 %v174, %v433
    %v478 = vmul.f32 %v175, %v434
    %v479 = vmul.f32 %v176, %v433
    %v480 = vmul.f32 %v177, %v434
    %v481 = vmul.f32 %v178, %v433
    %v482 = vmul.f32 %v179, %v434
    %v483 = vmul.f32 %v180, %v433
    %v484 = vmul.f32 %v181, %v434
    %v485 = vmul.f32 %v182, %v433
    %v486 = vmul.f32 %v183, %v434
    %v487 = vmul.f32 %v184, %v433
    %v488 = vmul.f32 %v185, %v434
    %v489 = vmul.f32 %v186, %v433
    %v490 = vmul.f32 %v187, %v434
    %v491 = vmul.f32 %v188, %v433
    %v492 = vmul.f32 %v189, %v434
    %v493 = vmul.f32 %v190, %v433
    %v494 = vmul.f32 %v191, %v434
    %v495 = vmul.f32 %v192, %v433
    %v496 = vmul.f32 %v193, %v434
    %v497 = vmul.f32 %v194, %v433
    %v498 = vmul.f32 %v195, %v434
    %v499 = vmul.f32 %v196, %v433
    %v500 = vmul.f32 %v197, %v434
    %v501 = vadd.f32 %v437, %v438
    %502 = vadd.xlane.f32.xlu0 %v501
    %v503 = vpop.xlane.xlu0 %502
    %v504 = vadd.f32 %v439, %v440
    %505 = vadd.xlane.f32.xlu0 %v504
    %v506 = vpop.xlane.xlu0 %505
    %v507 = vadd.f32 %v441, %v442
    %508 = vadd.xlane.f32.xlu0 %v507
    %v509 = vpop.xlane.xlu0 %508
    %v510 = vadd.f32 %v443, %v444
    %511 = vadd.xlane.f32.xlu0 %v510
    %v512 = vpop.xlane.xlu0 %511
    %v513 = vadd.f32 %v445, %v446
    %514 = vadd.xlane.f32.xlu0 %v513
    %v515 = vpop.xlane.xlu0 %514
    %v516 = vadd.f32 %v447, %v448
    %517 = vadd.xlane.f32.xlu0 %v516
    %v518 = vpop.xlane.xlu0 %517
    %v519 = vadd.f32 %v449, %v450
    %520 = vadd.xlane.f32.xlu0 %v519
    %v521 = vpop.xlane.xlu0 %520
    %v522 = vadd.f32 %v451, %v452
    %523 = vadd.xlane.f32.xlu0 %v522
    %v524 = vpop.xlane.xlu0 %523
    %v525 = vadd.f32 %v453, %v454
    %526 = vadd.xlane.f32.xlu0 %v525
    %v527 = vpop.xlane.xlu0 %526
    %v528 = vadd.f32 %v455, %v456
    %529 = vadd.xlane.f32.xlu0 %v528
    %v530 = vpop.xlane.xlu0 %529
    %v531 = vadd.f32 %v457, %v458
    %532 = vadd.xlane.f32.xlu0 %v531
    %v533 = vpop.xlane.xlu0 %532
    %v534 = vadd.f32 %v459, %v460
    %535 = vadd.xlane.f32.xlu0 %v534
    %v536 = vpop.xlane.xlu0 %535
    %v537 = vadd.f32 %v461, %v462
    %538 = vadd.xlane.f32.xlu0 %v537
    %v539 = vpop.xlane.xlu0 %538
    %v540 = vadd.f32 %v463, %v464
    %541 = vadd.xlane.f32.xlu0 %v540
    %v542 = vpop.xlane.xlu0 %541
    %v543 = vadd.f32 %v465, %v466
    %544 = vadd.xlane.f32.xlu0 %v543
    %v545 = vpop.xlane.xlu0 %544
    %v546 = vadd.f32 %v467, %v468
    %547 = vadd.xlane.f32.xlu0 %v546
    %v548 = vpop.xlane.xlu0 %547
    %v549 = vadd.f32 %v469, %v470
    %550 = vadd.xlane.f32.xlu0 %v549
    %v551 = vpop.xlane.xlu0 %550
    %v552 = vadd.f32 %v471, %v472
    %553 = vadd.xlane.f32.xlu0 %v552
    %v554 = vpop.xlane.xlu0 %553
    %v555 = vadd.f32 %v473, %v474
    %556 = vadd.xlane.f32.xlu0 %v555
    %v557 = vpop.xlane.xlu0 %556
    %v558 = vadd.f32 %v475, %v476
    %559 = vadd.xlane.f32.xlu0 %v558
    %v560 = vpop.xlane.xlu0 %559
    %v561 = vadd.f32 %v477, %v478
    %562 = vadd.xlane.f32.xlu0 %v561
    %v563 = vpop.xlane.xlu0 %562
    %v564 = vadd.f32 %v479, %v480
    %565 = vadd.xlane.f32.xlu0 %v564
    %v566 = vpop.xlane.xlu0 %565
    %v567 = vadd.f32 %v481, %v482
    %568 = vadd.xlane.f32.xlu0 %v567
    %v569 = vpop.xlane.xlu0 %568
    %v570 = vadd.f32 %v483, %v484
    %571 = vadd.xlane.f32.xlu0 %v570
    %v572 = vpop.xlane.xlu0 %571
    %v573 = vadd.f32 %v485, %v486
    %574 = vadd.xlane.f32.xlu0 %v573
    %v575 = vpop.xlane.xlu0 %574
    %v576 = vadd.f32 %v487, %v488
    %577 = vadd.xlane.f32.xlu0 %v576
    %v578 = vpop.xlane.xlu0 %577
    %v579 = vadd.f32 %v489, %v490
    %580 = vadd.xlane.f32.xlu0 %v579
    %v581 = vpop.xlane.xlu0 %580
    %v582 = vadd.f32 %v491, %v492
    %583 = vadd.xlane.f32.xlu0 %v582
    %v584 = vpop.xlane.xlu0 %583
    %v585 = vadd.f32 %v493, %v494
    %586 = vadd.xlane.f32.xlu0 %v585
    %v587 = vpop.xlane.xlu0 %586
    %v588 = vadd.f32 %v495, %v496
    %589 = vadd.xlane.f32.xlu0 %v588
    %v590 = vpop.xlane.xlu0 %589
    %v591 = vadd.f32 %v497, %v498
    %592 = vadd.xlane.f32.xlu0 %v591
    %v593 = vpop.xlane.xlu0 %592
    %v594 = vadd.f32 %v499, %v500
    %595 = vadd.xlane.f32.xlu0 %v594
    %v596 = vpop.xlane.xlu0 %595
    %v597 = vld [vmem:[%s4 + $0x1] sm:$0x1]
    %v598 = vperm.slane %v597, 0
    %v599 = vadd.f32 %v503, %v598
    %v600 = vadd.f32 %v506, %v598
    %v601 = vadd.f32 %v509, %v598
    %v602 = vadd.f32 %v512, %v598
    %v603 = vadd.f32 %v515, %v598
    %v604 = vadd.f32 %v518, %v598
    %v605 = vadd.f32 %v521, %v598
    %v606 = vadd.f32 %v524, %v598
    %v607 = vadd.f32 %v527, %v598
    %v608 = vadd.f32 %v530, %v598
    %v609 = vadd.f32 %v533, %v598
    %v610 = vadd.f32 %v536, %v598
    %v611 = vadd.f32 %v539, %v598
    %v612 = vadd.f32 %v542, %v598
    %v613 = vadd.f32 %v545, %v598
    %v614 = vadd.f32 %v548, %v598
    %v615 = vadd.f32 %v551, %v598
    %v616 = vadd.f32 %v554, %v598
    %v617 = vadd.f32 %v557, %v598
    %v618 = vadd.f32 %v560, %v598
    %v619 = vadd.f32 %v563, %v598
    %v620 = vadd.f32 %v566, %v598
    %v621 = vadd.f32 %v569, %v598
    %v622 = vadd.f32 %v572, %v598
    %v623 = vadd.f32 %v575, %v598
    %v624 = vadd.f32 %v578, %v598
    %v625 = vadd.f32 %v581, %v598
    %v626 = vadd.f32 %v584, %v598
    %v627 = vadd.f32 %v587, %v598
    %v628 = vadd.f32 %v590, %v598
    %v629 = vadd.f32 %v593, %v598
    %v630 = vadd.f32 %v596, %v598
    %v631 = vtanh.pop %v599
    %v632 = vtanh.pop %v600
    %v633 = vtanh.pop %v601
    %v634 = vtanh.pop %v602
    %v635 = vtanh.pop %v603
    %v636 = vtanh.pop %v604
    %v637 = vtanh.pop %v605
    %v638 = vtanh.pop %v606
    %v639 = vtanh.pop %v607
    %v640 = vtanh.pop %v608
    %v641 = vtanh.pop %v609
    %v642 = vtanh.pop %v610
    %v643 = vtanh.pop %v611
    %v644 = vtanh.pop %v612
    %v645 = vtanh.pop %v613
    %v646 = vtanh.pop %v614
    %v647 = vtanh.pop %v615
    %v648 = vtanh.pop %v616
    %v649 = vtanh.pop %v617
    %v650 = vtanh.pop %v618
    %v651 = vtanh.pop %v619
    %v652 = vtanh.pop %v620
    %v653 = vtanh.pop %v621
    %v654 = vtanh.pop %v622
    %v655 = vtanh.pop %v623
    %v656 = vtanh.pop %v624
    %v657 = vtanh.pop %v625
    %v658 = vtanh.pop %v626
    %v659 = vtanh.pop %v627
    %v660 = vtanh.pop %v628
    %v661 = vtanh.pop %v629
    %v662 = vtanh.pop %v630
    %v663 = vld [vmem:[#allocation5] sm:$0xff]
    %v664 = vld [vmem:[#allocation5 + $0x8] sm:$0xff]
    %v665 = vld [vmem:[#allocation5 + $0x10] sm:$0xff]
    %v666 = vld [vmem:[#allocation5 + $0x18] sm:$0xff]
    %v667 = vld [vmem:[#allocation5 + $0x20] sm:$0xff]
    %v668 = vld [vmem:[#allocation5 + $0x28] sm:$0xff]
    %v669 = vld [vmem:[#allocation5 + $0x30] sm:$0xff]
    %v670 = vld [vmem:[#allocation5 + $0x38] sm:$0xff]
    %v671 = vld [vmem:[#allocation5 + $0x40] sm:$0xff]
    %v672 = vld [vmem:[#allocation5 + $0x48] sm:$0xff]
    %v673 = vld [vmem:[#allocation5 + $0x50] sm:$0xff]
    %v674 = vld [vmem:[#allocation5 + $0x58] sm:$0xff]
    %v675 = vld [vmem:[#allocation5 + $0x60] sm:$0xff]
    %v676 = vld [vmem:[#allocation5 + $0x68] sm:$0xff]
    %v677 = vld [vmem:[#allocation5 + $0x70] sm:$0xff]
    %v678 = vld [vmem:[#allocation5 + $0x78] sm:$0xff]
    %v679 = vld [vmem:[#allocation5 + $0x80] sm:$0xff]
    %v680 = vld [vmem:[#allocation5 + $0x88] sm:$0xff]
    %v681 = vld [vmem:[#allocation5 + $0x90] sm:$0xff]
    %v682 = vld [vmem:[#allocation5 + $0x98] sm:$0xff]
    %v683 = vld [vmem:[#allocation5 + $0xa0] sm:$0xff]
    %v684 = vld [vmem:[#allocation5 + $0xa8] sm:$0xff]
    %v685 = vld [vmem:[#allocation5 + $0xb0] sm:$0xff]
    %v686 = vld [vmem:[#allocation5 + $0xb8] sm:$0xff]
    %v687 = vld [vmem:[#allocation5 + $0xc0] sm:$0xff]
    %v688 = vld [vmem:[#allocation5 + $0xc8] sm:$0xff]
    %v689 = vld [vmem:[#allocation5 + $0xd0] sm:$0xff]
    %v690 = vld [vmem:[#allocation5 + $0xd8] sm:$0xff]
    %v691 = vld [vmem:[#allocation5 + $0xe0] sm:$0xff]
    %v692 = vld [vmem:[#allocation5 + $0xe8] sm:$0xff]
    %v693 = vld [vmem:[#allocation5 + $0xf0] sm:$0xff]
    %v694 = vld [vmem:[#allocation5 + $0xf8] sm:$0xff]
    %v695 = vld [vmem:[#allocation5 + $0x100] sm:$0xff]
    %v696 = vld [vmem:[#allocation5 + $0x108] sm:$0xff]
    %v697 = vld [vmem:[#allocation5 + $0x110] sm:$0xff]
    %v698 = vld [vmem:[#allocation5 + $0x118] sm:$0xff]
    %v699 = vld [vmem:[#allocation5 + $0x120] sm:$0xff]
    %v700 = vld [vmem:[#allocation5 + $0x128] sm:$0xff]
    %v701 = vld [vmem:[#allocation5 + $0x130] sm:$0xff]
    %v702 = vld [vmem:[#allocation5 + $0x138] sm:$0xff]
    %v703 = vld [vmem:[#allocation5 + $0x140] sm:$0xff]
    %v704 = vld [vmem:[#allocation5 + $0x148] sm:$0xff]
    %v705 = vld [vmem:[#allocation5 + $0x150] sm:$0xff]
    %v706 = vld [vmem:[#allocation5 + $0x158] sm:$0xff]
    %v707 = vld [vmem:[#allocation5 + $0x160] sm:$0xff]
    %v708 = vld [vmem:[#allocation5 + $0x168] sm:$0xff]
    %v709 = vld [vmem:[#allocation5 + $0x170] sm:$0xff]
    %v710 = vld [vmem:[#allocation5 + $0x178] sm:$0xff]
    %v711 = vld [vmem:[#allocation5 + $0x180] sm:$0xff]
    %v712 = vld [vmem:[#allocation5 + $0x188] sm:$0xff]
    %v713 = vld [vmem:[#allocation5 + $0x190] sm:$0xff]
    %v714 = vld [vmem:[#allocation5 + $0x198] sm:$0xff]
    %v715 = vld [vmem:[#allocation5 + $0x1a0] sm:$0xff]
    %v716 = vld [vmem:[#allocation5 + $0x1a8] sm:$0xff]
    %v717 = vld [vmem:[#allocation5 + $0x1b0] sm:$0xff]
    %v718 = vld [vmem:[#allocation5 + $0x1b8] sm:$0xff]
    %v719 = vld [vmem:[#allocation5 + $0x1c0] sm:$0xff]
    %v720 = vld [vmem:[#allocation5 + $0x1c8] sm:$0xff]
    %v721 = vld [vmem:[#allocation5 + $0x1d0] sm:$0xff]
    %v722 = vld [vmem:[#allocation5 + $0x1d8] sm:$0xff]
    %v723 = vld [vmem:[#allocation5 + $0x1e0] sm:$0xff]
    %v724 = vld [vmem:[#allocation5 + $0x1e8] sm:$0xff]
    %v725 = vld [vmem:[#allocation5 + $0x1f0] sm:$0xff]
    %v726 = vld [vmem:[#allocation5 + $0x1f8] sm:$0xff]
    %v727 = vld [vmem:[#allocation10] sm:$0xff]
    %v728 = vld [vmem:[#allocation10 + $0x8] sm:$0xff]
    %v729 = vld [vmem:[#allocation10 + $0x10] sm:$0xff]
    %v730 = vld [vmem:[#allocation10 + $0x18] sm:$0xff]
    %v731 = vld [vmem:[#allocation10 + $0x20] sm:$0xff]
    %v732 = vld [vmem:[#allocation10 + $0x28] sm:$0xff]
    %v733 = vld [vmem:[#allocation10 + $0x30] sm:$0xff]
    %v734 = vld [vmem:[#allocation10 + $0x38] sm:$0xff]
    %v735 = vld [vmem:[#allocation10 + $0x40] sm:$0xff]
    %v736 = vld [vmem:[#allocation10 + $0x48] sm:$0xff]
    %v737 = vld [vmem:[#allocation10 + $0x50] sm:$0xff]
    %v738 = vld [vmem:[#allocation10 + $0x58] sm:$0xff]
    %v739 = vld [vmem:[#allocation10 + $0x60] sm:$0xff]
    %v740 = vld [vmem:[#allocation10 + $0x68] sm:$0xff]
    %v741 = vld [vmem:[#allocation10 + $0x70] sm:$0xff]
    %v742 = vld [vmem:[#allocation10 + $0x78] sm:$0xff]
    %v743 = vld [vmem:[#allocation10 + $0x80] sm:$0xff]
    %v744 = vld [vmem:[#allocation10 + $0x88] sm:$0xff]
    %v745 = vld [vmem:[#allocation10 + $0x90] sm:$0xff]
    %v746 = vld [vmem:[#allocation10 + $0x98] sm:$0xff]
    %v747 = vld [vmem:[#allocation10 + $0xa0] sm:$0xff]
    %v748 = vld [vmem:[#allocation10 + $0xa8] sm:$0xff]
    %v749 = vld [vmem:[#allocation10 + $0xb0] sm:$0xff]
    %v750 = vld [vmem:[#allocation10 + $0xb8] sm:$0xff]
    %v751 = vld [vmem:[#allocation10 + $0xc0] sm:$0xff]
    %v752 = vld [vmem:[#allocation10 + $0xc8] sm:$0xff]
    %v753 = vld [vmem:[#allocation10 + $0xd0] sm:$0xff]
    %v754 = vld [vmem:[#allocation10 + $0xd8] sm:$0xff]
    %v755 = vld [vmem:[#allocation10 + $0xe0] sm:$0xff]
    %v756 = vld [vmem:[#allocation10 + $0xe8] sm:$0xff]
    %v757 = vld [vmem:[#allocation10 + $0xf0] sm:$0xff]
    %v758 = vld [vmem:[#allocation10 + $0xf8] sm:$0xff]
    %v759 = vld [vmem:[#allocation10 + $0x100] sm:$0xff]
    %v760 = vld [vmem:[#allocation10 + $0x108] sm:$0xff]
    %v761 = vld [vmem:[#allocation10 + $0x110] sm:$0xff]
    %v762 = vld [vmem:[#allocation10 + $0x118] sm:$0xff]
    %v763 = vld [vmem:[#allocation10 + $0x120] sm:$0xff]
    %v764 = vld [vmem:[#allocation10 + $0x128] sm:$0xff]
    %v765 = vld [vmem:[#allocation10 + $0x130] sm:$0xff]
    %v766 = vld [vmem:[#allocation10 + $0x138] sm:$0xff]
    %v767 = vld [vmem:[#allocation10 + $0x140] sm:$0xff]
    %v768 = vld [vmem:[#allocation10 + $0x148] sm:$0xff]
    %v769 = vld [vmem:[#allocation10 + $0x150] sm:$0xff]
    %v770 = vld [vmem:[#allocation10 + $0x158] sm:$0xff]
    %v771 = vld [vmem:[#allocation10 + $0x160] sm:$0xff]
    %v772 = vld [vmem:[#allocation10 + $0x168] sm:$0xff]
    %v773 = vld [vmem:[#allocation10 + $0x170] sm:$0xff]
    %v774 = vld [vmem:[#allocation10 + $0x178] sm:$0xff]
    %v775 = vld [vmem:[#allocation10 + $0x180] sm:$0xff]
    %v776 = vld [vmem:[#allocation10 + $0x188] sm:$0xff]
    %v777 = vld [vmem:[#allocation10 + $0x190] sm:$0xff]
    %v778 = vld [vmem:[#allocation10 + $0x198] sm:$0xff]
    %v779 = vld [vmem:[#allocation10 + $0x1a0] sm:$0xff]
    %v780 = vld [vmem:[#allocation10 + $0x1a8] sm:$0xff]
    %v781 = vld [vmem:[#allocation10 + $0x1b0] sm:$0xff]
    %v782 = vld [vmem:[#allocation10 + $0x1b8] sm:$0xff]
    %v783 = vld [vmem:[#allocation10 + $0x1c0] sm:$0xff]
    %v784 = vld [vmem:[#allocation10 + $0x1c8] sm:$0xff]
    %v785 = vld [vmem:[#allocation10 + $0x1d0] sm:$0xff]
    %v786 = vld [vmem:[#allocation10 + $0x1d8] sm:$0xff]
    %v787 = vld [vmem:[#allocation10 + $0x1e0] sm:$0xff]
    %v788 = vld [vmem:[#allocation10 + $0x1e8] sm:$0xff]
    %v789 = vld [vmem:[#allocation10 + $0x1f0] sm:$0xff]
    %v790 = vld [vmem:[#allocation10 + $0x1f8] sm:$0xff]
    %v791 = vld [vmem:[%s8] sm:$0x3]
    %v793 = vperm.slane %v791, 0
    %v794 = vperm.slane %v791, 1
    %797 = vmatpush.msra.mxu0 %v757
    %798 = vmatpush.msra.mxu0 %v755
    %799 = vmatpush.msra.mxu0 %v753
    %800 = vmatpush.msra.mxu0 %v751
    %801 = vmatpush.msra.mxu0 %v749
    %802 = vmatpush.msra.mxu0 %v747
    %803 = vmatpush.msra.mxu0 %v745
    %804 = vmatpush.msra.mxu0 %v743
    %805 = vmatpush.msra.mxu0 %v741
    %806 = vmatpush.msra.mxu0 %v739
    %807 = vmatpush.msra.mxu0 %v737
    %808 = vmatpush.msra.mxu0 %v735
    %809 = vmatpush.msra.mxu0 %v733
    %810 = vmatpush.msra.mxu0 %v731
    %811 = vmatpush.msra.mxu0 %v729
    %812 = vmatpush.msra.mxu0 %v727
    %813 = vmatmul.f32.gmra.mxu0 %v663
    %v814 = vpop.f32.mrf.mxu0
    %v815 = vadd.f32 %v793, %v814
    %816 = vmatmul.f32.gmra.mxu0 %v665
    %v817 = vpop.f32.mrf.mxu0
    %v818 = vadd.f32 %v793, %v817
    %819 = vmatmul.f32.gmra.mxu0 %v667
    %v820 = vpop.f32.mrf.mxu0
    %v821 = vadd.f32 %v793, %v820
    %822 = vmatmul.f32.gmra.mxu0 %v669
    %v823 = vpop.f32.mrf.mxu0
    %v824 = vadd.f32 %v793, %v823
    %825 = vmatmul.f32.gmra.mxu0 %v671
    %v826 = vpop.f32.mrf.mxu0
    %v827 = vadd.f32 %v793, %v826
    %828 = vmatmul.f32.gmra.mxu0 %v673
    %v829 = vpop.f32.mrf.mxu0
    %v830 = vadd.f32 %v793, %v829
    %831 = vmatmul.f32.gmra.mxu0 %v675
    %v832 = vpop.f32.mrf.mxu0
    %v833 = vadd.f32 %v793, %v832
    %834 = vmatmul.f32.gmra.mxu0 %v677
    %v835 = vpop.f32.mrf.mxu0
    %v836 = vadd.f32 %v793, %v835
    %837 = vmatmul.f32.gmra.mxu0 %v679
    %v838 = vpop.f32.mrf.mxu0
    %v839 = vadd.f32 %v793, %v838
    %840 = vmatmul.f32.gmra.mxu0 %v681
    %v841 = vpop.f32.mrf.mxu0
    %v842 = vadd.f32 %v793, %v841
    %843 = vmatmul.f32.gmra.mxu0 %v683
    %v844 = vpop.f32.mrf.mxu0
    %v845 = vadd.f32 %v793, %v844
    %846 = vmatmul.f32.gmra.mxu0 %v685
    %v847 = vpop.f32.mrf.mxu0
    %v848 = vadd.f32 %v793, %v847
    %849 = vmatmul.f32.gmra.mxu0 %v687
    %v850 = vpop.f32.mrf.mxu0
    %v851 = vadd.f32 %v793, %v850
    %852 = vmatmul.f32.gmra.mxu0 %v689
    %v853 = vpop.f32.mrf.mxu0
    %v854 = vadd.f32 %v793, %v853
    %855 = vmatmul.f32.gmra.mxu0 %v691
    %v856 = vpop.f32.mrf.mxu0
    %v857 = vadd.f32 %v793, %v856
    %858 = vmatmul.f32.gmra.mxu0 %v693
    %v859 = vpop.f32.mrf.mxu0
    %v860 = vadd.f32 %v793, %v859
    %861 = vmatmul.f32.gmra.mxu0 %v695
    %v862 = vpop.f32.mrf.mxu0
    %v863 = vadd.f32 %v793, %v862
    %864 = vmatmul.f32.gmra.mxu0 %v697
    %v865 = vpop.f32.mrf.mxu0
    %v866 = vadd.f32 %v793, %v865
    %867 = vmatmul.f32.gmra.mxu0 %v699
    %v868 = vpop.f32.mrf.mxu0
    %v869 = vadd.f32 %v793, %v868
    %870 = vmatmul.f32.gmra.mxu0 %v701
    %v871 = vpop.f32.mrf.mxu0
    %v872 = vadd.f32 %v793, %v871
    %873 = vmatmul.f32.gmra.mxu0 %v703
    %v874 = vpop.f32.mrf.mxu0
    %v875 = vadd.f32 %v793, %v874
    %876 = vmatmul.f32.gmra.mxu0 %v705
    %v877 = vpop.f32.mrf.mxu0
    %v878 = vadd.f32 %v793, %v877
    %879 = vmatmul.f32.gmra.mxu0 %v707
    %v880 = vpop.f32.mrf.mxu0
    %v881 = vadd.f32 %v793, %v880
    %882 = vmatmul.f32.gmra.mxu0 %v709
    %v883 = vpop.f32.mrf.mxu0
    %v884 = vadd.f32 %v793, %v883
    %885 = vmatmul.f32.gmra.mxu0 %v711
    %v886 = vpop.f32.mrf.mxu0
    %v887 = vadd.f32 %v793, %v886
    %888 = vmatmul.f32.gmra.mxu0 %v713
    %v889 = vpop.f32.mrf.mxu0
    %v890 = vadd.f32 %v793, %v889
    %891 = vmatmul.f32.gmra.mxu0 %v715
    %v892 = vpop.f32.mrf.mxu0
    %v893 = vadd.f32 %v793, %v892
    %894 = vmatmul.f32.gmra.mxu0 %v717
    %v895 = vpop.f32.mrf.mxu0
    %v896 = vadd.f32 %v793, %v895
    %897 = vmatmul.f32.gmra.mxu0 %v719
    %v898 = vpop.f32.mrf.mxu0
    %v899 = vadd.f32 %v793, %v898
    %900 = vmatmul.f32.gmra.mxu0 %v721
    %v901 = vpop.f32.mrf.mxu0
    %v902 = vadd.f32 %v793, %v901
    %903 = vmatmul.f32.gmra.mxu0 %v723
    %v904 = vpop.f32.mrf.mxu0
    %v905 = vadd.f32 %v793, %v904
    %906 = vmatmul.f32.gmra.mxu0 %v725
    %v907 = vpop.f32.mrf.mxu0
    %v908 = vadd.f32 %v793, %v907
    %909 = vdwg.mxu0
    %910 = vmatpush.msra.mxu0 %v789
    %911 = vmatpush.msra.mxu0 %v787
    %912 = vmatpush.msra.mxu0 %v785
    %913 = vmatpush.msra.mxu0 %v783
    %914 = vmatpush.msra.mxu0 %v781
    %915 = vmatpush.msra.mxu0 %v779
    %916 = vmatpush.msra.mxu0 %v777
    %917 = vmatpush.msra.mxu0 %v775
    %918 = vmatpush.msra.mxu0 %v773
    %919 = vmatpush.msra.mxu0 %v771
    %920 = vmatpush.msra.mxu0 %v769
    %921 = vmatpush.msra.mxu0 %v767
    %922 = vmatpush.msra.mxu0 %v765
    %923 = vmatpush.msra.mxu0 %v763
    %924 = vmatpush.msra.mxu0 %v761
    %925 = vmatpush.msra.mxu0 %v759
    %926 = vmatmul.f32.gmra.mxu0 %v664
    %v927 = vpop.f32.mrf.mxu0
    %v928 = vadd.f32 %v815, %v927
    %929 = vmatmul.f32.gmra.mxu0 %v666
    %v930 = vpop.f32.mrf.mxu0
    %v931 = vadd.f32 %v818, %v930
    %932 = vmatmul.f32.gmra.mxu0 %v668
    %v933 = vpop.f32.mrf.mxu0
    %v934 = vadd.f32 %v821, %v933
    %935 = vmatmul.f32.gmra.mxu0 %v670
    %v936 = vpop.f32.mrf.mxu0
    %v937 = vadd.f32 %v824, %v936
    %938 = vmatmul.f32.gmra.mxu0 %v672
    %v939 = vpop.f32.mrf.mxu0
    %v940 = vadd.f32 %v827, %v939
    %941 = vmatmul.f32.gmra.mxu0 %v674
    %v942 = vpop.f32.mrf.mxu0
    %v943 = vadd.f32 %v830, %v942
    %944 = vmatmul.f32.gmra.mxu0 %v676
    %v945 = vpop.f32.mrf.mxu0
    %v946 = vadd.f32 %v833, %v945
    %947 = vmatmul.f32.gmra.mxu0 %v678
    %v948 = vpop.f32.mrf.mxu0
    %v949 = vadd.f32 %v836, %v948
    %950 = vmatmul.f32.gmra.mxu0 %v680
    %v951 = vpop.f32.mrf.mxu0
    %v952 = vadd.f32 %v839, %v951
    %953 = vmatmul.f32.gmra.mxu0 %v682
    %v954 = vpop.f32.mrf.mxu0
    %v955 = vadd.f32 %v842, %v954
    %956 = vmatmul.f32.gmra.mxu0 %v684
    %v957 = vpop.f32.mrf.mxu0
    %v958 = vadd.f32 %v845, %v957
    %959 = vmatmul.f32.gmra.mxu0 %v686
    %v960 = vpop.f32.mrf.mxu0
    %v961 = vadd.f32 %v848, %v960
    %962 = vmatmul.f32.gmra.mxu0 %v688
    %v963 = vpop.f32.mrf.mxu0
    %v964 = vadd.f32 %v851, %v963
    %965 = vmatmul.f32.gmra.mxu0 %v690
    %v966 = vpop.f32.mrf.mxu0
    %v967 = vadd.f32 %v854, %v966
    %968 = vmatmul.f32.gmra.mxu0 %v692
    %v969 = vpop.f32.mrf.mxu0
    %v970 = vadd.f32 %v857, %v969
    %971 = vmatmul.f32.gmra.mxu0 %v694
    %v972 = vpop.f32.mrf.mxu0
    %v973 = vadd.f32 %v860, %v972
    %974 = vmatmul.f32.gmra.mxu0 %v696
    %v975 = vpop.f32.mrf.mxu0
    %v976 = vadd.f32 %v863, %v975
    %977 = vmatmul.f32.gmra.mxu0 %v698
    %v978 = vpop.f32.mrf.mxu0
    %v979 = vadd.f32 %v866, %v978
    %980 = vmatmul.f32.gmra.mxu0 %v700
    %v981 = vpop.f32.mrf.mxu0
    %v982 = vadd.f32 %v869, %v981
    %983 = vmatmul.f32.gmra.mxu0 %v702
    %v984 = vpop.f32.mrf.mxu0
    %v985 = vadd.f32 %v872, %v984
    %986 = vmatmul.f32.gmra.mxu0 %v704
    %v987 = vpop.f32.mrf.mxu0
    %v988 = vadd.f32 %v875, %v987
    %989 = vmatmul.f32.gmra.mxu0 %v706
    %v990 = vpop.f32.mrf.mxu0
    %v991 = vadd.f32 %v878, %v990
    %992 = vmatmul.f32.gmra.mxu0 %v708
    %v993 = vpop.f32.mrf.mxu0
    %v994 = vadd.f32 %v881, %v993
    %995 = vmatmul.f32.gmra.mxu0 %v710
    %v996 = vpop.f32.mrf.mxu0
    %v997 = vadd.f32 %v884, %v996
    %998 = vmatmul.f32.gmra.mxu0 %v712
    %v999 = vpop.f32.mrf.mxu0
    %v1000 = vadd.f32 %v887, %v999
    %1001 = vmatmul.f32.gmra.mxu0 %v714
    %v1002 = vpop.f32.mrf.mxu0
    %v1003 = vadd.f32 %v890, %v1002
    %1004 = vmatmul.f32.gmra.mxu0 %v716
    %v1005 = vpop.f32.mrf.mxu0
    %v1006 = vadd.f32 %v893, %v1005
    %1007 = vmatmul.f32.gmra.mxu0 %v718
    %v1008 = vpop.f32.mrf.mxu0
    %v1009 = vadd.f32 %v896, %v1008
    %1010 = vmatmul.f32.gmra.mxu0 %v720
    %v1011 = vpop.f32.mrf.mxu0
    %v1012 = vadd.f32 %v899, %v1011
    %1013 = vmatmul.f32.gmra.mxu0 %v722
    %v1014 = vpop.f32.mrf.mxu0
    %v1015 = vadd.f32 %v902, %v1014
    %1016 = vmatmul.f32.gmra.mxu0 %v724
    %v1017 = vpop.f32.mrf.mxu0
    %v1018 = vadd.f32 %v905, %v1017
    %1019 = vmatmul.f32.gmra.mxu0 %v726
    %v1020 = vpop.f32.mrf.mxu0
    %v1021 = vadd.f32 %v908, %v1020
    %1022 = vdwg.mxu0
    %1023 = vmatpush.msra.mxu0 %v758
    %1024 = vmatpush.msra.mxu0 %v756
    %1025 = vmatpush.msra.mxu0 %v754
    %1026 = vmatpush.msra.mxu0 %v752
    %1027 = vmatpush.msra.mxu0 %v750
    %1028 = vmatpush.msra.mxu0 %v748
    %1029 = vmatpush.msra.mxu0 %v746
    %1030 = vmatpush.msra.mxu0 %v744
    %1031 = vmatpush.msra.mxu0 %v742
    %1032 = vmatpush.msra.mxu0 %v740
    %1033 = vmatpush.msra.mxu0 %v738
    %1034 = vmatpush.msra.mxu0 %v736
    %1035 = vmatpush.msra.mxu0 %v734
    %1036 = vmatpush.msra.mxu0 %v732
    %1037 = vmatpush.msra.mxu0 %v730
    %1038 = vmatpush.msra.mxu0 %v728
    %1039 = vmatmul.f32.gmra.mxu0 %v663
    %v1040 = vpop.f32.mrf.mxu0
    %v1041 = vadd.f32 %v794, %v1040
    %1042 = vmatmul.f32.gmra.mxu0 %v665
    %v1043 = vpop.f32.mrf.mxu0
    %v1044 = vadd.f32 %v794, %v1043
    %1045 = vmatmul.f32.gmra.mxu0 %v667
    %v1046 = vpop.f32.mrf.mxu0
    %v1047 = vadd.f32 %v794, %v1046
    %1048 = vmatmul.f32.gmra.mxu0 %v669
    %v1049 = vpop.f32.mrf.mxu0
    %v1050 = vadd.f32 %v794, %v1049
    %1051 = vmatmul.f32.gmra.mxu0 %v671
    %v1052 = vpop.f32.mrf.mxu0
    %v1053 = vadd.f32 %v794, %v1052
    %1054 = vmatmul.f32.gmra.mxu0 %v673
    %v1055 = vpop.f32.mrf.mxu0
    %v1056 = vadd.f32 %v794, %v1055
    %1057 = vmatmul.f32.gmra.mxu0 %v675
    %v1058 = vpop.f32.mrf.mxu0
    %v1059 = vadd.f32 %v794, %v1058
    %1060 = vmatmul.f32.gmra.mxu0 %v677
    %v1061 = vpop.f32.mrf.mxu0
    %v1062 = vadd.f32 %v794, %v1061
    %1063 = vmatmul.f32.gmra.mxu0 %v679
    %v1064 = vpop.f32.mrf.mxu0
    %v1065 = vadd.f32 %v794, %v1064
    %1066 = vmatmul.f32.gmra.mxu0 %v681
    %v1067 = vpop.f32.mrf.mxu0
    %v1068 = vadd.f32 %v794, %v1067
    %1069 = vmatmul.f32.gmra.mxu0 %v683
    %v1070 = vpop.f32.mrf.mxu0
    %v1071 = vadd.f32 %v794, %v1070
    %1072 = vmatmul.f32.gmra.mxu0 %v685
    %v1073 = vpop.f32.mrf.mxu0
    %v1074 = vadd.f32 %v794, %v1073
    %1075 = vmatmul.f32.gmra.mxu0 %v687
    %v1076 = vpop.f32.mrf.mxu0
    %v1077 = vadd.f32 %v794, %v1076
    %1078 = vmatmul.f32.gmra.mxu0 %v689
    %v1079 = vpop.f32.mrf.mxu0
    %v1080 = vadd.f32 %v794, %v1079
    %1081 = vmatmul.f32.gmra.mxu0 %v691
    %v1082 = vpop.f32.mrf.mxu0
    %v1083 = vadd.f32 %v794, %v1082
    %1084 = vmatmul.f32.gmra.mxu0 %v693
    %v1085 = vpop.f32.mrf.mxu0
    %v1086 = vadd.f32 %v794, %v1085
    %1087 = vmatmul.f32.gmra.mxu0 %v695
    %v1088 = vpop.f32.mrf.mxu0
    %v1089 = vadd.f32 %v794, %v1088
    %1090 = vmatmul.f32.gmra.mxu0 %v697
    %v1091 = vpop.f32.mrf.mxu0
    %v1092 = vadd.f32 %v794, %v1091
    %1093 = vmatmul.f32.gmra.mxu0 %v699
    %v1094 = vpop.f32.mrf.mxu0
    %v1095 = vadd.f32 %v794, %v1094
    %1096 = vmatmul.f32.gmra.mxu0 %v701
    %v1097 = vpop.f32.mrf.mxu0
    %v1098 = vadd.f32 %v794, %v1097
    %1099 = vmatmul.f32.gmra.mxu0 %v703
    %v1100 = vpop.f32.mrf.mxu0
    %v1101 = vadd.f32 %v794, %v1100
    %1102 = vmatmul.f32.gmra.mxu0 %v705
    %v1103 = vpop.f32.mrf.mxu0
    %v1104 = vadd.f32 %v794, %v1103
    %1105 = vmatmul.f32.gmra.mxu0 %v707
    %v1106 = vpop.f32.mrf.mxu0
    %v1107 = vadd.f32 %v794, %v1106
    %1108 = vmatmul.f32.gmra.mxu0 %v709
    %v1109 = vpop.f32.mrf.mxu0
    %v1110 = vadd.f32 %v794, %v1109
    %1111 = vmatmul.f32.gmra.mxu0 %v711
    %v1112 = vpop.f32.mrf.mxu0
    %v1113 = vadd.f32 %v794, %v1112
    %1114 = vmatmul.f32.gmra.mxu0 %v713
    %v1115 = vpop.f32.mrf.mxu0
    %v1116 = vadd.f32 %v794, %v1115
    %1117 = vmatmul.f32.gmra.mxu0 %v715
    %v1118 = vpop.f32.mrf.mxu0
    %v1119 = vadd.f32 %v794, %v1118
    %1120 = vmatmul.f32.gmra.mxu0 %v717
    %v1121 = vpop.f32.mrf.mxu0
    %v1122 = vadd.f32 %v794, %v1121
    %1123 = vmatmul.f32.gmra.mxu0 %v719
    %v1124 = vpop.f32.mrf.mxu0
    %v1125 = vadd.f32 %v794, %v1124
    %1126 = vmatmul.f32.gmra.mxu0 %v721
    %v1127 = vpop.f32.mrf.mxu0
    %v1128 = vadd.f32 %v794, %v1127
    %1129 = vmatmul.f32.gmra.mxu0 %v723
    %v1130 = vpop.f32.mrf.mxu0
    %v1131 = vadd.f32 %v794, %v1130
    %1132 = vmatmul.f32.gmra.mxu0 %v725
    %v1133 = vpop.f32.mrf.mxu0
    %v1134 = vadd.f32 %v794, %v1133
    %1135 = vdwg.mxu0
    %1136 = vmatpush.msra.mxu0 %v790
    %1137 = vmatpush.msra.mxu0 %v788
    %1138 = vmatpush.msra.mxu0 %v786
    %1139 = vmatpush.msra.mxu0 %v784
    %1140 = vmatpush.msra.mxu0 %v782
    %1141 = vmatpush.msra.mxu0 %v780
    %1142 = vmatpush.msra.mxu0 %v778
    %1143 = vmatpush.msra.mxu0 %v776
    %1144 = vmatpush.msra.mxu0 %v774
    %1145 = vmatpush.msra.mxu0 %v772
    %1146 = vmatpush.msra.mxu0 %v770
    %1147 = vmatpush.msra.mxu0 %v768
    %1148 = vmatpush.msra.mxu0 %v766
    %1149 = vmatpush.msra.mxu0 %v764
    %1150 = vmatpush.msra.mxu0 %v762
    %1151 = vmatpush.msra.mxu0 %v760
    %1152 = vmatmul.f32.gmra.mxu0 %v664
    %v1153 = vpop.f32.mrf.mxu0
    %v1154 = vadd.f32 %v1041, %v1153
    %1155 = vmatmul.f32.gmra.mxu0 %v666
    %v1156 = vpop.f32.mrf.mxu0
    %v1157 = vadd.f32 %v1044, %v1156
    %1158 = vmatmul.f32.gmra.mxu0 %v668
    %v1159 = vpop.f32.mrf.mxu0
    %v1160 = vadd.f32 %v1047, %v1159
    %1161 = vmatmul.f32.gmra.mxu0 %v670
    %v1162 = vpop.f32.mrf.mxu0
    %v1163 = vadd.f32 %v1050, %v1162
    %1164 = vmatmul.f32.gmra.mxu0 %v672
    %v1165 = vpop.f32.mrf.mxu0
    %v1166 = vadd.f32 %v1053, %v1165
    %1167 = vmatmul.f32.gmra.mxu0 %v674
    %v1168 = vpop.f32.mrf.mxu0
    %v1169 = vadd.f32 %v1056, %v1168
    %1170 = vmatmul.f32.gmra.mxu0 %v676
    %v1171 = vpop.f32.mrf.mxu0
    %v1172 = vadd.f32 %v1059, %v1171
    %1173 = vmatmul.f32.gmra.mxu0 %v678
    %v1174 = vpop.f32.mrf.mxu0
    %v1175 = vadd.f32 %v1062, %v1174
    %1176 = vmatmul.f32.gmra.mxu0 %v680
    %v1177 = vpop.f32.mrf.mxu0
    %v1178 = vadd.f32 %v1065, %v1177
    %1179 = vmatmul.f32.gmra.mxu0 %v682
    %v1180 = vpop.f32.mrf.mxu0
    %v1181 = vadd.f32 %v1068, %v1180
    %1182 = vmatmul.f32.gmra.mxu0 %v684
    %v1183 = vpop.f32.mrf.mxu0
    %v1184 = vadd.f32 %v1071, %v1183
    %1185 = vmatmul.f32.gmra.mxu0 %v686
    %v1186 = vpop.f32.mrf.mxu0
    %v1187 = vadd.f32 %v1074, %v1186
    %1188 = vmatmul.f32.gmra.mxu0 %v688
    %v1189 = vpop.f32.mrf.mxu0
    %v1190 = vadd.f32 %v1077, %v1189
    %1191 = vmatmul.f32.gmra.mxu0 %v690
    %v1192 = vpop.f32.mrf.mxu0
    %v1193 = vadd.f32 %v1080, %v1192
    %1194 = vmatmul.f32.gmra.mxu0 %v692
    %v1195 = vpop.f32.mrf.mxu0
    %v1196 = vadd.f32 %v1083, %v1195
    %1197 = vmatmul.f32.gmra.mxu0 %v694
    %v1198 = vpop.f32.mrf.mxu0
    %v1199 = vadd.f32 %v1086, %v1198
    %1200 = vmatmul.f32.gmra.mxu0 %v696
    %v1201 = vpop.f32.mrf.mxu0
    %v1202 = vadd.f32 %v1089, %v1201
    %1203 = vmatmul.f32.gmra.mxu0 %v698
    %v1204 = vpop.f32.mrf.mxu0
    %v1205 = vadd.f32 %v1092, %v1204
    %1206 = vmatmul.f32.gmra.mxu0 %v700
    %v1207 = vpop.f32.mrf.mxu0
    %v1208 = vadd.f32 %v1095, %v1207
    %1209 = vmatmul.f32.gmra.mxu0 %v702
    %v1210 = vpop.f32.mrf.mxu0
    %v1211 = vadd.f32 %v1098, %v1210
    %1212 = vmatmul.f32.gmra.mxu0 %v704
    %v1213 = vpop.f32.mrf.mxu0
    %v1214 = vadd.f32 %v1101, %v1213
    %1215 = vmatmul.f32.gmra.mxu0 %v706
    %v1216 = vpop.f32.mrf.mxu0
    %v1217 = vadd.f32 %v1104, %v1216
    %1218 = vmatmul.f32.gmra.mxu0 %v708
    %v1219 = vpop.f32.mrf.mxu0
    %v1220 = vadd.f32 %v1107, %v1219
    %1221 = vmatmul.f32.gmra.mxu0 %v710
    %v1222 = vpop.f32.mrf.mxu0
    %v1223 = vadd.f32 %v1110, %v1222
    %1224 = vmatmul.f32.gmra.mxu0 %v712
    %v1225 = vpop.f32.mrf.mxu0
    %v1226 = vadd.f32 %v1113, %v1225
    %1227 = vmatmul.f32.gmra.mxu0 %v714
    %v1228 = vpop.f32.mrf.mxu0
    %v1229 = vadd.f32 %v1116, %v1228
    %1230 = vmatmul.f32.gmra.mxu0 %v716
    %v1231 = vpop.f32.mrf.mxu0
    %v1232 = vadd.f32 %v1119, %v1231
    %1233 = vmatmul.f32.gmra.mxu0 %v718
    %v1234 = vpop.f32.mrf.mxu0
    %v1235 = vadd.f32 %v1122, %v1234
    %1236 = vmatmul.f32.gmra.mxu0 %v720
    %v1237 = vpop.f32.mrf.mxu0
    %v1238 = vadd.f32 %v1125, %v1237
    %1239 = vmatmul.f32.gmra.mxu0 %v722
    %v1240 = vpop.f32.mrf.mxu0
    %v1241 = vadd.f32 %v1128, %v1240
    %1242 = vmatmul.f32.gmra.mxu0 %v724
    %v1243 = vpop.f32.mrf.mxu0
    %v1244 = vadd.f32 %v1131, %v1243
    %1245 = vmatmul.f32.gmra.mxu0 %v726
    %v1246 = vpop.f32.mrf.mxu0
    %v1247 = vadd.f32 %v1134, %v1246
    %1248 = vdwg.mxu0
    %v1249 = vld [vmem:[#allocation8] ss:$2 sm:$0x3]
    %1251 = vset.pattern.permute.xlu0 0
    %1252 = vperm.xlu0 %1251, %v398
    %v1253 = vpop.permute.xlu0 %1252
    %1256 = vset.pattern.permute.xlu0 0
    %1257 = vperm.xlu0 %1256, %v399
    %v1258 = vpop.permute.xlu0 %1257
    %1261 = vset.pattern.permute.xlu0 0
    %1262 = vperm.xlu0 %1261, %v400
    %v1263 = vpop.permute.xlu0 %1262
    %1266 = vset.pattern.permute.xlu0 0
    %1267 = vperm.xlu0 %1266, %v401
    %v1268 = vpop.permute.xlu0 %1267
    %1271 = vset.pattern.permute.xlu0 0
    %1272 = vperm.xlu0 %1271, %v402
    %v1273 = vpop.permute.xlu0 %1272
    %1276 = vset.pattern.permute.xlu0 0
    %1277 = vperm.xlu0 %1276, %v403
    %v1278 = vpop.permute.xlu0 %1277
    %1281 = vset.pattern.permute.xlu0 0
    %1282 = vperm.xlu0 %1281, %v404
    %v1283 = vpop.permute.xlu0 %1282
    %1286 = vset.pattern.permute.xlu0 0
    %1287 = vperm.xlu0 %1286, %v405
    %v1288 = vpop.permute.xlu0 %1287
    %1291 = vset.pattern.permute.xlu0 0
    %1292 = vperm.xlu0 %1291, %v406
    %v1293 = vpop.permute.xlu0 %1292
    %1296 = vset.pattern.permute.xlu0 0
    %1297 = vperm.xlu0 %1296, %v407
    %v1298 = vpop.permute.xlu0 %1297
    %1301 = vset.pattern.permute.xlu0 0
    %1302 = vperm.xlu0 %1301, %v408
    %v1303 = vpop.permute.xlu0 %1302
    %1306 = vset.pattern.permute.xlu0 0
    %1307 = vperm.xlu0 %1306, %v409
    %v1308 = vpop.permute.xlu0 %1307
    %1311 = vset.pattern.permute.xlu0 0
    %1312 = vperm.xlu0 %1311, %v410
    %v1313 = vpop.permute.xlu0 %1312
    %1316 = vset.pattern.permute.xlu0 0
    %1317 = vperm.xlu0 %1316, %v411
    %v1318 = vpop.permute.xlu0 %1317
    %1321 = vset.pattern.permute.xlu0 0
    %1322 = vperm.xlu0 %1321, %v412
    %v1323 = vpop.permute.xlu0 %1322
    %1326 = vset.pattern.permute.xlu0 0
    %1327 = vperm.xlu0 %1326, %v413
    %v1328 = vpop.permute.xlu0 %1327
    %1331 = vset.pattern.permute.xlu0 0
    %1332 = vperm.xlu0 %1331, %v414
    %v1333 = vpop.permute.xlu0 %1332
    %1336 = vset.pattern.permute.xlu0 0
    %1337 = vperm.xlu0 %1336, %v415
    %v1338 = vpop.permute.xlu0 %1337
    %1341 = vset.pattern.permute.xlu0 0
    %1342 = vperm.xlu0 %1341, %v416
    %v1343 = vpop.permute.xlu0 %1342
    %1346 = vset.pattern.permute.xlu0 0
    %1347 = vperm.xlu0 %1346, %v417
    %v1348 = vpop.permute.xlu0 %1347
    %1351 = vset.pattern.permute.xlu0 0
    %1352 = vperm.xlu0 %1351, %v418
    %v1353 = vpop.permute.xlu0 %1352
    %1356 = vset.pattern.permute.xlu0 0
    %1357 = vperm.xlu0 %1356, %v419
    %v1358 = vpop.permute.xlu0 %1357
    %1361 = vset.pattern.permute.xlu0 0
    %1362 = vperm.xlu0 %1361, %v420
    %v1363 = vpop.permute.xlu0 %1362
    %1366 = vset.pattern.permute.xlu0 0
    %1367 = vperm.xlu0 %1366, %v421
    %v1368 = vpop.permute.xlu0 %1367
    %1371 = vset.pattern.permute.xlu0 0
    %1372 = vperm.xlu0 %1371, %v422
    %v1373 = vpop.permute.xlu0 %1372
    %1376 = vset.pattern.permute.xlu0 0
    %1377 = vperm.xlu0 %1376, %v423
    %v1378 = vpop.permute.xlu0 %1377
    %1381 = vset.pattern.permute.xlu0 0
    %1382 = vperm.xlu0 %1381, %v424
    %v1383 = vpop.permute.xlu0 %1382
    %1386 = vset.pattern.permute.xlu0 0
    %1387 = vperm.xlu0 %1386, %v425
    %v1388 = vpop.permute.xlu0 %1387
    %1391 = vset.pattern.permute.xlu0 0
    %1392 = vperm.xlu0 %1391, %v426
    %v1393 = vpop.permute.xlu0 %1392
    %1396 = vset.pattern.permute.xlu0 0
    %1397 = vperm.xlu0 %1396, %v427
    %v1398 = vpop.permute.xlu0 %1397
    %1401 = vset.pattern.permute.xlu0 0
    %1402 = vperm.xlu0 %1401, %v428
    %v1403 = vpop.permute.xlu0 %1402
    %1406 = vset.pattern.permute.xlu0 0
    %1407 = vperm.xlu0 %1406, %v429
    %v1408 = vpop.permute.xlu0 %1407
    %v1411 = vperm.slane %v1249, 0
    %v1412 = vperm.slane %v1249, 1
    %v1415 = vmul.f32 %v1253, %v1411
    %v1416 = vmul.f32 %v1253, %v1412
    %v1417 = vmul.f32 %v1258, %v1411
    %v1418 = vmul.f32 %v1258, %v1412
    %v1419 = vmul.f32 %v1263, %v1411
    %v1420 = vmul.f32 %v1263, %v1412
    %v1421 = vmul.f32 %v1268, %v1411
    %v1422 = vmul.f32 %v1268, %v1412
    %v1423 = vmul.f32 %v1273, %v1411
    %v1424 = vmul.f32 %v1273, %v1412
    %v1425 = vmul.f32 %v1278, %v1411
    %v1426 = vmul.f32 %v1278, %v1412
    %v1427 = vmul.f32 %v1283, %v1411
    %v1428 = vmul.f32 %v1283, %v1412
    %v1429 = vmul.f32 %v1288, %v1411
    %v1430 = vmul.f32 %v1288, %v1412
    %v1431 = vmul.f32 %v1293, %v1411
    %v1432 = vmul.f32 %v1293, %v1412
    %v1433 = vmul.f32 %v1298, %v1411
    %v1434 = vmul.f32 %v1298, %v1412
    %v1435 = vmul.f32 %v1303, %v1411
    %v1436 = vmul.f32 %v1303, %v1412
    %v1437 = vmul.f32 %v1308, %v1411
    %v1438 = vmul.f32 %v1308, %v1412
    %v1439 = vmul.f32 %v1313, %v1411
    %v1440 = vmul.f32 %v1313, %v1412
    %v1441 = vmul.f32 %v1318, %v1411
    %v1442 = vmul.f32 %v1318, %v1412
    %v1443 = vmul.f32 %v1323, %v1411
    %v1444 = vmul.f32 %v1323, %v1412
    %v1445 = vmul.f32 %v1328, %v1411
    %v1446 = vmul.f32 %v1328, %v1412
    %v1447 = vmul.f32 %v1333, %v1411
    %v1448 = vmul.f32 %v1333, %v1412
    %v1449 = vmul.f32 %v1338, %v1411
    %v1450 = vmul.f32 %v1338, %v1412
    %v1451 = vmul.f32 %v1343, %v1411
    %v1452 = vmul.f32 %v1343, %v1412
    %v1453 = vmul.f32 %v1348, %v1411
    %v1454 = vmul.f32 %v1348, %v1412
    %v1455 = vmul.f32 %v1353, %v1411
    %v1456 = vmul.f32 %v1353, %v1412
    %v1457 = vmul.f32 %v1358, %v1411
    %v1458 = vmul.f32 %v1358, %v1412
    %v1459 = vmul.f32 %v1363, %v1411
    %v1460 = vmul.f32 %v1363, %v1412
    %v1461 = vmul.f32 %v1368, %v1411
    %v1462 = vmul.f32 %v1368, %v1412
    %v1463 = vmul.f32 %v1373, %v1411
    %v1464 = vmul.f32 %v1373, %v1412
    %v1465 = vmul.f32 %v1378, %v1411
    %v1466 = vmul.f32 %v1378, %v1412
    %v1467 = vmul.f32 %v1383, %v1411
    %v1468 = vmul.f32 %v1383, %v1412
    %v1469 = vmul.f32 %v1388, %v1411
    %v1470 = vmul.f32 %v1388, %v1412
    %v1471 = vmul.f32 %v1393, %v1411
    %v1472 = vmul.f32 %v1393, %v1412
    %v1473 = vmul.f32 %v1398, %v1411
    %v1474 = vmul.f32 %v1398, %v1412
    %v1475 = vmul.f32 %v1403, %v1411
    %v1476 = vmul.f32 %v1403, %v1412
    %v1477 = vmul.f32 %v1408, %v1411
    %v1478 = vmul.f32 %v1408, %v1412
    %v1479 = vadd.f32 %v928, %v1415
    %v1480 = vadd.f32 %v1154, %v1416
    %v1481 = vadd.f32 %v931, %v1417
    %v1482 = vadd.f32 %v1157, %v1418
    %v1483 = vadd.f32 %v934, %v1419
    %v1484 = vadd.f32 %v1160, %v1420
    %v1485 = vadd.f32 %v937, %v1421
    %v1486 = vadd.f32 %v1163, %v1422
    %v1487 = vadd.f32 %v940, %v1423
    %v1488 = vadd.f32 %v1166, %v1424
    %v1489 = vadd.f32 %v943, %v1425
    %v1490 = vadd.f32 %v1169, %v1426
    %v1491 = vadd.f32 %v946, %v1427
    %v1492 = vadd.f32 %v1172, %v1428
    %v1493 = vadd.f32 %v949, %v1429
    %v1494 = vadd.f32 %v1175, %v1430
    %v1495 = vadd.f32 %v952, %v1431
    %v1496 = vadd.f32 %v1178, %v1432
    %v1497 = vadd.f32 %v955, %v1433
    %v1498 = vadd.f32 %v1181, %v1434
    %v1499 = vadd.f32 %v958, %v1435
    %v1500 = vadd.f32 %v1184, %v1436
    %v1501 = vadd.f32 %v961, %v1437
    %v1502 = vadd.f32 %v1187, %v1438
    %v1503 = vadd.f32 %v964, %v1439
    %v1504 = vadd.f32 %v1190, %v1440
    %v1505 = vadd.f32 %v967, %v1441
    %v1506 = vadd.f32 %v1193, %v1442
    %v1507 = vadd.f32 %v970, %v1443
    %v1508 = vadd.f32 %v1196, %v1444
    %v1509 = vadd.f32 %v973, %v1445
    %v1510 = vadd.f32 %v1199, %v1446
    %v1511 = vadd.f32 %v976, %v1447
    %v1512 = vadd.f32 %v1202, %v1448
    %v1513 = vadd.f32 %v979, %v1449
    %v1514 = vadd.f32 %v1205, %v1450
    %v1515 = vadd.f32 %v982, %v1451
    %v1516 = vadd.f32 %v1208, %v1452
    %v1517 = vadd.f32 %v985, %v1453
    %v1518 = vadd.f32 %v1211, %v1454
    %v1519 = vadd.f32 %v988, %v1455
    %v1520 = vadd.f32 %v1214, %v1456
    %v1521 = vadd.f32 %v991, %v1457
    %v1522 = vadd.f32 %v1217, %v1458
    %v1523 = vadd.f32 %v994, %v1459
    %v1524 = vadd.f32 %v1220, %v1460
    %v1525 = vadd.f32 %v997, %v1461
    %v1526 = vadd.f32 %v1223, %v1462
    %v1527 = vadd.f32 %v1000, %v1463
    %v1528 = vadd.f32 %v1226, %v1464
    %v1529 = vadd.f32 %v1003, %v1465
    %v1530 = vadd.f32 %v1229, %v1466
    %v1531 = vadd.f32 %v1006, %v1467
    %v1532 = vadd.f32 %v1232, %v1468
    %v1533 = vadd.f32 %v1009, %v1469
    %v1534 = vadd.f32 %v1235, %v1470
    %v1535 = vadd.f32 %v1012, %v1471
    %v1536 = vadd.f32 %v1238, %v1472
    %v1537 = vadd.f32 %v1015, %v1473
    %v1538 = vadd.f32 %v1241, %v1474
    %v1539 = vadd.f32 %v1018, %v1475
    %v1540 = vadd.f32 %v1244, %v1476
    %v1541 = vadd.f32 %v1021, %v1477
    %v1542 = vadd.f32 %v1247, %v1478
    %s1543 = scalar_lea.vmem [#allocation8], 1
    %v1544 = vld [vmem:[%s1543] ss:$2 sm:$0x3]
    %1546 = vset.pattern.permute.xlu0 0
    %1547 = vperm.xlu0 %1546, %v631
    %v1548 = vpop.permute.xlu0 %1547
    %1551 = vset.pattern.permute.xlu0 0
    %1552 = vperm.xlu0 %1551, %v632
    %v1553 = vpop.permute.xlu0 %1552
    %1556 = vset.pattern.permute.xlu0 0
    %1557 = vperm.xlu0 %1556, %v633
    %v1558 = vpop.permute.xlu0 %1557
    %1561 = vset.pattern.permute.xlu0 0
    %1562 = vperm.xlu0 %1561, %v634
    %v1563 = vpop.permute.xlu0 %1562
    %1566 = vset.pattern.permute.xlu0 0
    %1567 = vperm.xlu0 %1566, %v635
    %v1568 = vpop.permute.xlu0 %1567
    %1571 = vset.pattern.permute.xlu0 0
    %1572 = vperm.xlu0 %1571, %v636
    %v1573 = vpop.permute.xlu0 %1572
    %1576 = vset.pattern.permute.xlu0 0
    %1577 = vperm.xlu0 %1576, %v637
    %v1578 = vpop.permute.xlu0 %1577
    %1581 = vset.pattern.permute.xlu0 0
    %1582 = vperm.xlu0 %1581, %v638
    %v1583 = vpop.permute.xlu0 %1582
    %1586 = vset.pattern.permute.xlu0 0
    %1587 = vperm.xlu0 %1586, %v639
    %v1588 = vpop.permute.xlu0 %1587
    %1591 = vset.pattern.permute.xlu0 0
    %1592 = vperm.xlu0 %1591, %v640
    %v1593 = vpop.permute.xlu0 %1592
    %1596 = vset.pattern.permute.xlu0 0
    %1597 = vperm.xlu0 %1596, %v641
    %v1598 = vpop.permute.xlu0 %1597
    %1601 = vset.pattern.permute.xlu0 0
    %1602 = vperm.xlu0 %1601, %v642
    %v1603 = vpop.permute.xlu0 %1602
    %1606 = vset.pattern.permute.xlu0 0
    %1607 = vperm.xlu0 %1606, %v643
    %v1608 = vpop.permute.xlu0 %1607
    %1611 = vset.pattern.permute.xlu0 0
    %1612 = vperm.xlu0 %1611, %v644
    %v1613 = vpop.permute.xlu0 %1612
    %1616 = vset.pattern.permute.xlu0 0
    %1617 = vperm.xlu0 %1616, %v645
    %v1618 = vpop.permute.xlu0 %1617
    %1621 = vset.pattern.permute.xlu0 0
    %1622 = vperm.xlu0 %1621, %v646
    %v1623 = vpop.permute.xlu0 %1622
    %1626 = vset.pattern.permute.xlu0 0
    %1627 = vperm.xlu0 %1626, %v647
    %v1628 = vpop.permute.xlu0 %1627
    %1631 = vset.pattern.permute.xlu0 0
    %1632 = vperm.xlu0 %1631, %v648
    %v1633 = vpop.permute.xlu0 %1632
    %1636 = vset.pattern.permute.xlu0 0
    %1637 = vperm.xlu0 %1636, %v649
    %v1638 = vpop.permute.xlu0 %1637
    %1641 = vset.pattern.permute.xlu0 0
    %1642 = vperm.xlu0 %1641, %v650
    %v1643 = vpop.permute.xlu0 %1642
    %1646 = vset.pattern.permute.xlu0 0
    %1647 = vperm.xlu0 %1646, %v651
    %v1648 = vpop.permute.xlu0 %1647
    %1651 = vset.pattern.permute.xlu0 0
    %1652 = vperm.xlu0 %1651, %v652
    %v1653 = vpop.permute.xlu0 %1652
    %1656 = vset.pattern.permute.xlu0 0
    %1657 = vperm.xlu0 %1656, %v653
    %v1658 = vpop.permute.xlu0 %1657
    %1661 = vset.pattern.permute.xlu0 0
    %1662 = vperm.xlu0 %1661, %v654
    %v1663 = vpop.permute.xlu0 %1662
    %1666 = vset.pattern.permute.xlu0 0
    %1667 = vperm.xlu0 %1666, %v655
    %v1668 = vpop.permute.xlu0 %1667
    %1671 = vset.pattern.permute.xlu0 0
    %1672 = vperm.xlu0 %1671, %v656
    %v1673 = vpop.permute.xlu0 %1672
    %1676 = vset.pattern.permute.xlu0 0
    %1677 = vperm.xlu0 %1676, %v657
    %v1678 = vpop.permute.xlu0 %1677
    %1681 = vset.pattern.permute.xlu0 0
    %1682 = vperm.xlu0 %1681, %v658
    %v1683 = vpop.permute.xlu0 %1682
    %1686 = vset.pattern.permute.xlu0 0
    %1687 = vperm.xlu0 %1686, %v659
    %v1688 = vpop.permute.xlu0 %1687
    %1691 = vset.pattern.permute.xlu0 0
    %1692 = vperm.xlu0 %1691, %v660
    %v1693 = vpop.permute.xlu0 %1692
    %1696 = vset.pattern.permute.xlu0 0
    %1697 = vperm.xlu0 %1696, %v661
    %v1698 = vpop.permute.xlu0 %1697
    %1701 = vset.pattern.permute.xlu0 0
    %1702 = vperm.xlu0 %1701, %v662
    %v1703 = vpop.permute.xlu0 %1702
    %v1706 = vperm.slane %v1544, 0
    %v1707 = vperm.slane %v1544, 1
    %v1710 = vmul.f32 %v1548, %v1706
    %v1711 = vmul.f32 %v1548, %v1707
    %v1712 = vmul.f32 %v1553, %v1706
    %v1713 = vmul.f32 %v1553, %v1707
    %v1714 = vmul.f32 %v1558, %v1706
    %v1715 = vmul.f32 %v1558, %v1707
    %v1716 = vmul.f32 %v1563, %v1706
    %v1717 = vmul.f32 %v1563, %v1707
    %v1718 = vmul.f32 %v1568, %v1706
    %v1719 = vmul.f32 %v1568, %v1707
    %v1720 = vmul.f32 %v1573, %v1706
    %v1721 = vmul.f32 %v1573, %v1707
    %v1722 = vmul.f32 %v1578, %v1706
    %v1723 = vmul.f32 %v1578, %v1707
    %v1724 = vmul.f32 %v1583, %v1706
    %v1725 = vmul.f32 %v1583, %v1707
    %v1726 = vmul.f32 %v1588, %v1706
    %v1727 = vmul.f32 %v1588, %v1707
    %v1728 = vmul.f32 %v1593, %v1706
    %v1729 = vmul.f32 %v1593, %v1707
    %v1730 = vmul.f32 %v1598, %v1706
    %v1731 = vmul.f32 %v1598, %v1707
    %v1732 = vmul.f32 %v1603, %v1706
    %v1733 = vmul.f32 %v1603, %v1707
    %v1734 = vmul.f32 %v1608, %v1706
    %v1735 = vmul.f32 %v1608, %v1707
    %v1736 = vmul.f32 %v1613, %v1706
    %v1737 = vmul.f32 %v1613, %v1707
    %v1738 = vmul.f32 %v1618, %v1706
    %v1739 = vmul.f32 %v1618, %v1707
    %v1740 = vmul.f32 %v1623, %v1706
    %v1741 = vmul.f32 %v1623, %v1707
    %v1742 = vmul.f32 %v1628, %v1706
    %v1743 = vmul.f32 %v1628, %v1707
    %v1744 = vmul.f32 %v1633, %v1706
    %v1745 = vmul.f32 %v1633, %v1707
    %v1746 = vmul.f32 %v1638, %v1706
    %v1747 = vmul.f32 %v1638, %v1707
    %v1748 = vmul.f32 %v1643, %v1706
    %v1749 = vmul.f32 %v1643, %v1707
    %v1750 = vmul.f32 %v1648, %v1706
    %v1751 = vmul.f32 %v1648, %v1707
    %v1752 = vmul.f32 %v1653, %v1706
    %v1753 = vmul.f32 %v1653, %v1707
    %v1754 = vmul.f32 %v1658, %v1706
    %v1755 = vmul.f32 %v1658, %v1707
    %v1756 = vmul.f32 %v1663, %v1706
    %v1757 = vmul.f32 %v1663, %v1707
    %v1758 = vmul.f32 %v1668, %v1706
    %v1759 = vmul.f32 %v1668, %v1707
    %v1760 = vmul.f32 %v1673, %v1706
    %v1761 = vmul.f32 %v1673, %v1707
    %v1762 = vmul.f32 %v1678, %v1706
    %v1763 = vmul.f32 %v1678, %v1707
    %v1764 = vmul.f32 %v1683, %v1706
    %v1765 = vmul.f32 %v1683, %v1707
    %v1766 = vmul.f32 %v1688, %v1706
    %v1767 = vmul.f32 %v1688, %v1707
    %v1768 = vmul.f32 %v1693, %v1706
    %v1769 = vmul.f32 %v1693, %v1707
    %v1770 = vmul.f32 %v1698, %v1706
    %v1771 = vmul.f32 %v1698, %v1707
    %v1772 = vmul.f32 %v1703, %v1706
    %v1773 = vmul.f32 %v1703, %v1707
    %v1774 = vadd.f32 %v1479, %v1710
    %v1775 = vadd.f32 %v1480, %v1711
    %v1776 = vadd.f32 %v1481, %v1712
    %v1777 = vadd.f32 %v1482, %v1713
    %v1778 = vadd.f32 %v1483, %v1714
    %v1779 = vadd.f32 %v1484, %v1715
    %v1780 = vadd.f32 %v1485, %v1716
    %v1781 = vadd.f32 %v1486, %v1717
    %v1782 = vadd.f32 %v1487, %v1718
    %v1783 = vadd.f32 %v1488, %v1719
    %v1784 = vadd.f32 %v1489, %v1720
    %v1785 = vadd.f32 %v1490, %v1721
    %v1786 = vadd.f32 %v1491, %v1722
    %v1787 = vadd.f32 %v1492, %v1723
    %v1788 = vadd.f32 %v1493, %v1724
    %v1789 = vadd.f32 %v1494, %v1725
    %v1790 = vadd.f32 %v1495, %v1726
    %v1791 = vadd.f32 %v1496, %v1727
    %v1792 = vadd.f32 %v1497, %v1728
    %v1793 = vadd.f32 %v1498, %v1729
    %v1794 = vadd.f32 %v1499, %v1730
    %v1795 = vadd.f32 %v1500, %v1731
    %v1796 = vadd.f32 %v1501, %v1732
    %v1797 = vadd.f32 %v1502, %v1733
    %v1798 = vadd.f32 %v1503, %v1734
    %v1799 = vadd.f32 %v1504, %v1735
    %v1800 = vadd.f32 %v1505, %v1736
    %v1801 = vadd.f32 %v1506, %v1737
    %v1802 = vadd.f32 %v1507, %v1738
    %v1803 = vadd.f32 %v1508, %v1739
    %v1804 = vadd.f32 %v1509, %v1740
    %v1805 = vadd.f32 %v1510, %v1741
    %v1806 = vadd.f32 %v1511, %v1742
    %v1807 = vadd.f32 %v1512, %v1743
    %v1808 = vadd.f32 %v1513, %v1744
    %v1809 = vadd.f32 %v1514, %v1745
    %v1810 = vadd.f32 %v1515, %v1746
    %v1811 = vadd.f32 %v1516, %v1747
    %v1812 = vadd.f32 %v1517, %v1748
    %v1813 = vadd.f32 %v1518, %v1749
    %v1814 = vadd.f32 %v1519, %v1750
    %v1815 = vadd.f32 %v1520, %v1751
    %v1816 = vadd.f32 %v1521, %v1752
    %v1817 = vadd.f32 %v1522, %v1753
    %v1818 = vadd.f32 %v1523, %v1754
    %v1819 = vadd.f32 %v1524, %v1755
    %v1820 = vadd.f32 %v1525, %v1756
    %v1821 = vadd.f32 %v1526, %v1757
    %v1822 = vadd.f32 %v1527, %v1758
    %v1823 = vadd.f32 %v1528, %v1759
    %v1824 = vadd.f32 %v1529, %v1760
    %v1825 = vadd.f32 %v1530, %v1761
    %v1826 = vadd.f32 %v1531, %v1762
    %v1827 = vadd.f32 %v1532, %v1763
    %v1828 = vadd.f32 %v1533, %v1764
    %v1829 = vadd.f32 %v1534, %v1765
    %v1830 = vadd.f32 %v1535, %v1766
    %v1831 = vadd.f32 %v1536, %v1767
    %v1832 = vadd.f32 %v1537, %v1768
    %v1833 = vadd.f32 %v1538, %v1769
    %v1834 = vadd.f32 %v1539, %v1770
    %v1835 = vadd.f32 %v1540, %v1771
    %v1836 = vadd.f32 %v1541, %v1772
    %v1837 = vadd.f32 %v1542, %v1773
    %v1838 = vtanh.pop %v1774
    %v1839 = vtanh.pop %v1775
    %v1840 = vtanh.pop %v1776
    %v1841 = vtanh.pop %v1777
    %v1842 = vtanh.pop %v1778
    %v1843 = vtanh.pop %v1779
    %v1844 = vtanh.pop %v1780
    %v1845 = vtanh.pop %v1781
    %v1846 = vtanh.pop %v1782
    %v1847 = vtanh.pop %v1783
    %v1848 = vtanh.pop %v1784
    %v1849 = vtanh.pop %v1785
    %v1850 = vtanh.pop %v1786
    %v1851 = vtanh.pop %v1787
    %v1852 = vtanh.pop %v1788
    %v1853 = vtanh.pop %v1789
    %v1854 = vtanh.pop %v1790
    %v1855 = vtanh.pop %v1791
    %v1856 = vtanh.pop %v1792
    %v1857 = vtanh.pop %v1793
    %v1858 = vtanh.pop %v1794
    %v1859 = vtanh.pop %v1795
    %v1860 = vtanh.pop %v1796
    %v1861 = vtanh.pop %v1797
    %v1862 = vtanh.pop %v1798
    %v1863 = vtanh.pop %v1799
    %v1864 = vtanh.pop %v1800
    %v1865 = vtanh.pop %v1801
    %v1866 = vtanh.pop %v1802
    %v1867 = vtanh.pop %v1803
    %v1868 = vtanh.pop %v1804
    %v1869 = vtanh.pop %v1805
    %v1870 = vtanh.pop %v1806
    %v1871 = vtanh.pop %v1807
    %v1872 = vtanh.pop %v1808
    %v1873 = vtanh.pop %v1809
    %v1874 = vtanh.pop %v1810
    %v1875 = vtanh.pop %v1811
    %v1876 = vtanh.pop %v1812
    %v1877 = vtanh.pop %v1813
    %v1878 = vtanh.pop %v1814
    %v1879 = vtanh.pop %v1815
    %v1880 = vtanh.pop %v1816
    %v1881 = vtanh.pop %v1817
    %v1882 = vtanh.pop %v1818
    %v1883 = vtanh.pop %v1819
    %v1884 = vtanh.pop %v1820
    %v1885 = vtanh.pop %v1821
    %v1886 = vtanh.pop %v1822
    %v1887 = vtanh.pop %v1823
    %v1888 = vtanh.pop %v1824
    %v1889 = vtanh.pop %v1825
    %v1890 = vtanh.pop %v1826
    %v1891 = vtanh.pop %v1827
    %v1892 = vtanh.pop %v1828
    %v1893 = vtanh.pop %v1829
    %v1894 = vtanh.pop %v1830
    %v1895 = vtanh.pop %v1831
    %v1896 = vtanh.pop %v1832
    %v1897 = vtanh.pop %v1833
    %v1898 = vtanh.pop %v1834
    %v1899 = vtanh.pop %v1835
    %v1900 = vtanh.pop %v1836
    %v1901 = vtanh.pop %v1837
    %1902 = vst [vmem:[#allocation13] sm:$0xff] %v1838
    %1903 = vst [vmem:[#allocation13 + $0x8] sm:$0xff] %v1839
    %1904 = vst [vmem:[#allocation13 + $0x10] sm:$0xff] %v1840
    %1905 = vst [vmem:[#allocation13 + $0x18] sm:$0xff] %v1841
    %1906 = vst [vmem:[#allocation13 + $0x20] sm:$0xff] %v1842
    %1907 = vst [vmem:[#allocation13 + $0x28] sm:$0xff] %v1843
    %1908 = vst [vmem:[#allocation13 + $0x30] sm:$0xff] %v1844
    %1909 = vst [vmem:[#allocation13 + $0x38] sm:$0xff] %v1845
    %1910 = vst [vmem:[#allocation13 + $0x40] sm:$0xff] %v1846
    %1911 = vst [vmem:[#allocation13 + $0x48] sm:$0xff] %v1847
    %1912 = vst [vmem:[#allocation13 + $0x50] sm:$0xff] %v1848
    %1913 = vst [vmem:[#allocation13 + $0x58] sm:$0xff] %v1849
    %1914 = vst [vmem:[#allocation13 + $0x60] sm:$0xff] %v1850
    %1915 = vst [vmem:[#allocation13 + $0x68] sm:$0xff] %v1851
    %1916 = vst [vmem:[#allocation13 + $0x70] sm:$0xff] %v1852
    %1917 = vst [vmem:[#allocation13 + $0x78] sm:$0xff] %v1853
    %1918 = vst [vmem:[#allocation13 + $0x80] sm:$0xff] %v1854
    %1919 = vst [vmem:[#allocation13 + $0x88] sm:$0xff] %v1855
    %1920 = vst [vmem:[#allocation13 + $0x90] sm:$0xff] %v1856
    %1921 = vst [vmem:[#allocation13 + $0x98] sm:$0xff] %v1857
    %1922 = vst [vmem:[#allocation13 + $0xa0] sm:$0xff] %v1858
    %1923 = vst [vmem:[#allocation13 + $0xa8] sm:$0xff] %v1859
    %1924 = vst [vmem:[#allocation13 + $0xb0] sm:$0xff] %v1860
    %1925 = vst [vmem:[#allocation13 + $0xb8] sm:$0xff] %v1861
    %1926 = vst [vmem:[#allocation13 + $0xc0] sm:$0xff] %v1862
    %1927 = vst [vmem:[#allocation13 + $0xc8] sm:$0xff] %v1863
    %1928 = vst [vmem:[#allocation13 + $0xd0] sm:$0xff] %v1864
    %1929 = vst [vmem:[#allocation13 + $0xd8] sm:$0xff] %v1865
    %1930 = vst [vmem:[#allocation13 + $0xe0] sm:$0xff] %v1866
    %1931 = vst [vmem:[#allocation13 + $0xe8] sm:$0xff] %v1867
    %1932 = vst [vmem:[#allocation13 + $0xf0] sm:$0xff] %v1868
    %1933 = vst [vmem:[#allocation13 + $0xf8] sm:$0xff] %v1869
    %1934 = vst [vmem:[#allocation13 + $0x100] sm:$0xff] %v1870
    %1935 = vst [vmem:[#allocation13 + $0x108] sm:$0xff] %v1871
    %1936 = vst [vmem:[#allocation13 + $0x110] sm:$0xff] %v1872
    %1937 = vst [vmem:[#allocation13 + $0x118] sm:$0xff] %v1873
    %1938 = vst [vmem:[#allocation13 + $0x120] sm:$0xff] %v1874
    %1939 = vst [vmem:[#allocation13 + $0x128] sm:$0xff] %v1875
    %1940 = vst [vmem:[#allocation13 + $0x130] sm:$0xff] %v1876
    %1941 = vst [vmem:[#allocation13 + $0x138] sm:$0xff] %v1877
    %1942 = vst [vmem:[#allocation13 + $0x140] sm:$0xff] %v1878
    %1943 = vst [vmem:[#allocation13 + $0x148] sm:$0xff] %v1879
    %1944 = vst [vmem:[#allocation13 + $0x150] sm:$0xff] %v1880
    %1945 = vst [vmem:[#allocation13 + $0x158] sm:$0xff] %v1881
    %1946 = vst [vmem:[#allocation13 + $0x160] sm:$0xff] %v1882
    %1947 = vst [vmem:[#allocation13 + $0x168] sm:$0xff] %v1883
    %1948 = vst [vmem:[#allocation13 + $0x170] sm:$0xff] %v1884
    %1949 = vst [vmem:[#allocation13 + $0x178] sm:$0xff] %v1885
    %1950 = vst [vmem:[#allocation13 + $0x180] sm:$0xff] %v1886
    %1951 = vst [vmem:[#allocation13 + $0x188] sm:$0xff] %v1887
    %1952 = vst [vmem:[#allocation13 + $0x190] sm:$0xff] %v1888
    %1953 = vst [vmem:[#allocation13 + $0x198] sm:$0xff] %v1889
    %1954 = vst [vmem:[#allocation13 + $0x1a0] sm:$0xff] %v1890
    %1955 = vst [vmem:[#allocation13 + $0x1a8] sm:$0xff] %v1891
    %1956 = vst [vmem:[#allocation13 + $0x1b0] sm:$0xff] %v1892
    %1957 = vst [vmem:[#allocation13 + $0x1b8] sm:$0xff] %v1893
    %1958 = vst [vmem:[#allocation13 + $0x1c0] sm:$0xff] %v1894
    %1959 = vst [vmem:[#allocation13 + $0x1c8] sm:$0xff] %v1895
    %1960 = vst [vmem:[#allocation13 + $0x1d0] sm:$0xff] %v1896
    %1961 = vst [vmem:[#allocation13 + $0x1d8] sm:$0xff] %v1897
    %1962 = vst [vmem:[#allocation13 + $0x1e0] sm:$0xff] %v1898
    %1963 = vst [vmem:[#allocation13 + $0x1e8] sm:$0xff] %v1899
    %1964 = vst [vmem:[#allocation13 + $0x1f0] sm:$0xff] %v1900
    %1965 = vst [vmem:[#allocation13 + $0x1f8] sm:$0xff] %v1901
    %v1966 = vld [vmem:[#allocation7] sm:$0xff]
    %v1967 = vld [vmem:[#allocation7 + $0x8] sm:$0xff]
    %v1968 = vld [vmem:[#allocation7 + $0x10] sm:$0xff]
    %v1969 = vld [vmem:[#allocation7 + $0x18] sm:$0xff]
    %v1970 = vld [vmem:[#allocation7 + $0x20] sm:$0xff]
    %v1971 = vld [vmem:[#allocation7 + $0x28] sm:$0xff]
    %v1972 = vld [vmem:[#allocation7 + $0x30] sm:$0xff]
    %v1973 = vld [vmem:[#allocation7 + $0x38] sm:$0xff]
    %v1974 = vld [vmem:[#allocation7 + $0x40] sm:$0xff]
    %v1975 = vld [vmem:[#allocation7 + $0x48] sm:$0xff]
    %v1976 = vld [vmem:[#allocation7 + $0x50] sm:$0xff]
    %v1977 = vld [vmem:[#allocation7 + $0x58] sm:$0xff]
    %v1978 = vld [vmem:[#allocation7 + $0x60] sm:$0xff]
    %v1979 = vld [vmem:[#allocation7 + $0x68] sm:$0xff]
    %v1980 = vld [vmem:[#allocation7 + $0x70] sm:$0xff]
    %v1981 = vld [vmem:[#allocation7 + $0x78] sm:$0xff]
    %v1982 = vld [vmem:[#allocation7 + $0x80] sm:$0xff]
    %v1983 = vld [vmem:[#allocation7 + $0x88] sm:$0xff]
    %v1984 = vld [vmem:[#allocation7 + $0x90] sm:$0xff]
    %v1985 = vld [vmem:[#allocation7 + $0x98] sm:$0xff]
    %v1986 = vld [vmem:[#allocation7 + $0xa0] sm:$0xff]
    %v1987 = vld [vmem:[#allocation7 + $0xa8] sm:$0xff]
    %v1988 = vld [vmem:[#allocation7 + $0xb0] sm:$0xff]
    %v1989 = vld [vmem:[#allocation7 + $0xb8] sm:$0xff]
    %v1990 = vld [vmem:[#allocation7 + $0xc0] sm:$0xff]
    %v1991 = vld [vmem:[#allocation7 + $0xc8] sm:$0xff]
    %v1992 = vld [vmem:[#allocation7 + $0xd0] sm:$0xff]
    %v1993 = vld [vmem:[#allocation7 + $0xd8] sm:$0xff]
    %v1994 = vld [vmem:[#allocation7 + $0xe0] sm:$0xff]
    %v1995 = vld [vmem:[#allocation7 + $0xe8] sm:$0xff]
    %v1996 = vld [vmem:[#allocation7 + $0xf0] sm:$0xff]
    %v1997 = vld [vmem:[#allocation7 + $0xf8] sm:$0xff]
    %v1998 = vld [vmem:[#allocation7 + $0x100] sm:$0xff]
    %v1999 = vld [vmem:[#allocation7 + $0x108] sm:$0xff]
    %v2000 = vld [vmem:[#allocation7 + $0x110] sm:$0xff]
    %v2001 = vld [vmem:[#allocation7 + $0x118] sm:$0xff]
    %v2002 = vld [vmem:[#allocation7 + $0x120] sm:$0xff]
    %v2003 = vld [vmem:[#allocation7 + $0x128] sm:$0xff]
    %v2004 = vld [vmem:[#allocation7 + $0x130] sm:$0xff]
    %v2005 = vld [vmem:[#allocation7 + $0x138] sm:$0xff]
    %v2006 = vld [vmem:[#allocation7 + $0x140] sm:$0xff]
    %v2007 = vld [vmem:[#allocation7 + $0x148] sm:$0xff]
    %v2008 = vld [vmem:[#allocation7 + $0x150] sm:$0xff]
    %v2009 = vld [vmem:[#allocation7 + $0x158] sm:$0xff]
    %v2010 = vld [vmem:[#allocation7 + $0x160] sm:$0xff]
    %v2011 = vld [vmem:[#allocation7 + $0x168] sm:$0xff]
    %v2012 = vld [vmem:[#allocation7 + $0x170] sm:$0xff]
    %v2013 = vld [vmem:[#allocation7 + $0x178] sm:$0xff]
    %v2014 = vld [vmem:[#allocation7 + $0x180] sm:$0xff]
    %v2015 = vld [vmem:[#allocation7 + $0x188] sm:$0xff]
    %v2016 = vld [vmem:[#allocation7 + $0x190] sm:$0xff]
    %v2017 = vld [vmem:[#allocation7 + $0x198] sm:$0xff]
    %v2018 = vld [vmem:[#allocation7 + $0x1a0] sm:$0xff]
    %v2019 = vld [vmem:[#allocation7 + $0x1a8] sm:$0xff]
    %v2020 = vld [vmem:[#allocation7 + $0x1b0] sm:$0xff]
    %v2021 = vld [vmem:[#allocation7 + $0x1b8] sm:$0xff]
    %v2022 = vld [vmem:[#allocation7 + $0x1c0] sm:$0xff]
    %v2023 = vld [vmem:[#allocation7 + $0x1c8] sm:$0xff]
    %v2024 = vld [vmem:[#allocation7 + $0x1d0] sm:$0xff]
    %v2025 = vld [vmem:[#allocation7 + $0x1d8] sm:$0xff]
    %v2026 = vld [vmem:[#allocation7 + $0x1e0] sm:$0xff]
    %v2027 = vld [vmem:[#allocation7 + $0x1e8] sm:$0xff]
    %v2028 = vld [vmem:[#allocation7 + $0x1f0] sm:$0xff]
    %v2029 = vld [vmem:[#allocation7 + $0x1f8] sm:$0xff]
    %v2030 = vld [vmem:[#allocation11] sm:$0xff]
    %v2031 = vld [vmem:[#allocation11 + $0x8] sm:$0xff]
    %v2032 = vld [vmem:[#allocation11 + $0x10] sm:$0xff]
    %v2033 = vld [vmem:[#allocation11 + $0x18] sm:$0xff]
    %v2034 = vld [vmem:[#allocation11 + $0x20] sm:$0xff]
    %v2035 = vld [vmem:[#allocation11 + $0x28] sm:$0xff]
    %v2036 = vld [vmem:[#allocation11 + $0x30] sm:$0xff]
    %v2037 = vld [vmem:[#allocation11 + $0x38] sm:$0xff]
    %v2038 = vld [vmem:[#allocation11 + $0x40] sm:$0xff]
    %v2039 = vld [vmem:[#allocation11 + $0x48] sm:$0xff]
    %v2040 = vld [vmem:[#allocation11 + $0x50] sm:$0xff]
    %v2041 = vld [vmem:[#allocation11 + $0x58] sm:$0xff]
    %v2042 = vld [vmem:[#allocation11 + $0x60] sm:$0xff]
    %v2043 = vld [vmem:[#allocation11 + $0x68] sm:$0xff]
    %v2044 = vld [vmem:[#allocation11 + $0x70] sm:$0xff]
    %v2045 = vld [vmem:[#allocation11 + $0x78] sm:$0xff]
    %v2046 = vld [vmem:[#allocation11 + $0x80] sm:$0xff]
    %v2047 = vld [vmem:[#allocation11 + $0x88] sm:$0xff]
    %v2048 = vld [vmem:[#allocation11 + $0x90] sm:$0xff]
    %v2049 = vld [vmem:[#allocation11 + $0x98] sm:$0xff]
    %v2050 = vld [vmem:[#allocation11 + $0xa0] sm:$0xff]
    %v2051 = vld [vmem:[#allocation11 + $0xa8] sm:$0xff]
    %v2052 = vld [vmem:[#allocation11 + $0xb0] sm:$0xff]
    %v2053 = vld [vmem:[#allocation11 + $0xb8] sm:$0xff]
    %v2054 = vld [vmem:[#allocation11 + $0xc0] sm:$0xff]
    %v2055 = vld [vmem:[#allocation11 + $0xc8] sm:$0xff]
    %v2056 = vld [vmem:[#allocation11 + $0xd0] sm:$0xff]
    %v2057 = vld [vmem:[#allocation11 + $0xd8] sm:$0xff]
    %v2058 = vld [vmem:[#allocation11 + $0xe0] sm:$0xff]
    %v2059 = vld [vmem:[#allocation11 + $0xe8] sm:$0xff]
    %v2060 = vld [vmem:[#allocation11 + $0xf0] sm:$0xff]
    %v2061 = vld [vmem:[#allocation11 + $0xf8] sm:$0xff]
    %v2062 = vld [vmem:[#allocation11 + $0x100] sm:$0xff]
    %v2063 = vld [vmem:[#allocation11 + $0x108] sm:$0xff]
    %v2064 = vld [vmem:[#allocation11 + $0x110] sm:$0xff]
    %v2065 = vld [vmem:[#allocation11 + $0x118] sm:$0xff]
    %v2066 = vld [vmem:[#allocation11 + $0x120] sm:$0xff]
    %v2067 = vld [vmem:[#allocation11 + $0x128] sm:$0xff]
    %v2068 = vld [vmem:[#allocation11 + $0x130] sm:$0xff]
    %v2069 = vld [vmem:[#allocation11 + $0x138] sm:$0xff]
    %v2070 = vld [vmem:[#allocation11 + $0x140] sm:$0xff]
    %v2071 = vld [vmem:[#allocation11 + $0x148] sm:$0xff]
    %v2072 = vld [vmem:[#allocation11 + $0x150] sm:$0xff]
    %v2073 = vld [vmem:[#allocation11 + $0x158] sm:$0xff]
    %v2074 = vld [vmem:[#allocation11 + $0x160] sm:$0xff]
    %v2075 = vld [vmem:[#allocation11 + $0x168] sm:$0xff]
    %v2076 = vld [vmem:[#allocation11 + $0x170] sm:$0xff]
    %v2077 = vld [vmem:[#allocation11 + $0x178] sm:$0xff]
    %v2078 = vld [vmem:[#allocation11 + $0x180] sm:$0xff]
    %v2079 = vld [vmem:[#allocation11 + $0x188] sm:$0xff]
    %v2080 = vld [vmem:[#allocation11 + $0x190] sm:$0xff]
    %v2081 = vld [vmem:[#allocation11 + $0x198] sm:$0xff]
    %v2082 = vld [vmem:[#allocation11 + $0x1a0] sm:$0xff]
    %v2083 = vld [vmem:[#allocation11 + $0x1a8] sm:$0xff]
    %v2084 = vld [vmem:[#allocation11 + $0x1b0] sm:$0xff]
    %v2085 = vld [vmem:[#allocation11 + $0x1b8] sm:$0xff]
    %v2086 = vld [vmem:[#allocation11 + $0x1c0] sm:$0xff]
    %v2087 = vld [vmem:[#allocation11 + $0x1c8] sm:$0xff]
    %v2088 = vld [vmem:[#allocation11 + $0x1d0] sm:$0xff]
    %v2089 = vld [vmem:[#allocation11 + $0x1d8] sm:$0xff]
    %v2090 = vld [vmem:[#allocation11 + $0x1e0] sm:$0xff]
    %v2091 = vld [vmem:[#allocation11 + $0x1e8] sm:$0xff]
    %v2092 = vld [vmem:[#allocation11 + $0x1f0] sm:$0xff]
    %v2093 = vld [vmem:[#allocation11 + $0x1f8] sm:$0xff]
    %v2094 = vld [vmem:[%s10] sm:$0x3]
    %v2096 = vperm.slane %v2094, 0
    %v2097 = vperm.slane %v2094, 1
    %2100 = vmatpush.msra.mxu0 %v2060
    %2101 = vmatpush.msra.mxu0 %v2058
    %2102 = vmatpush.msra.mxu0 %v2056
    %2103 = vmatpush.msra.mxu0 %v2054
    %2104 = vmatpush.msra.mxu0 %v2052
    %2105 = vmatpush.msra.mxu0 %v2050
    %2106 = vmatpush.msra.mxu0 %v2048
    %2107 = vmatpush.msra.mxu0 %v2046
    %2108 = vmatpush.msra.mxu0 %v2044
    %2109 = vmatpush.msra.mxu0 %v2042
    %2110 = vmatpush.msra.mxu0 %v2040
    %2111 = vmatpush.msra.mxu0 %v2038
    %2112 = vmatpush.msra.mxu0 %v2036
    %2113 = vmatpush.msra.mxu0 %v2034
    %2114 = vmatpush.msra.mxu0 %v2032
    %2115 = vmatpush.msra.mxu0 %v2030
    %2116 = vmatmul.f32.gmra.mxu0 %v1966
    %v2117 = vpop.f32.mrf.mxu0
    %v2118 = vadd.f32 %v2096, %v2117
    %2119 = vmatmul.f32.gmra.mxu0 %v1968
    %v2120 = vpop.f32.mrf.mxu0
    %v2121 = vadd.f32 %v2096, %v2120
    %2122 = vmatmul.f32.gmra.mxu0 %v1970
    %v2123 = vpop.f32.mrf.mxu0
    %v2124 = vadd.f32 %v2096, %v2123
    %2125 = vmatmul.f32.gmra.mxu0 %v1972
    %v2126 = vpop.f32.mrf.mxu0
    %v2127 = vadd.f32 %v2096, %v2126
    %2128 = vmatmul.f32.gmra.mxu0 %v1974
    %v2129 = vpop.f32.mrf.mxu0
    %v2130 = vadd.f32 %v2096, %v2129
    %2131 = vmatmul.f32.gmra.mxu0 %v1976
    %v2132 = vpop.f32.mrf.mxu0
    %v2133 = vadd.f32 %v2096, %v2132
    %2134 = vmatmul.f32.gmra.mxu0 %v1978
    %v2135 = vpop.f32.mrf.mxu0
    %v2136 = vadd.f32 %v2096, %v2135
    %2137 = vmatmul.f32.gmra.mxu0 %v1980
    %v2138 = vpop.f32.mrf.mxu0
    %v2139 = vadd.f32 %v2096, %v2138
    %2140 = vmatmul.f32.gmra.mxu0 %v1982
    %v2141 = vpop.f32.mrf.mxu0
    %v2142 = vadd.f32 %v2096, %v2141
    %2143 = vmatmul.f32.gmra.mxu0 %v1984
    %v2144 = vpop.f32.mrf.mxu0
    %v2145 = vadd.f32 %v2096, %v2144
    %2146 = vmatmul.f32.gmra.mxu0 %v1986
    %v2147 = vpop.f32.mrf.mxu0
    %v2148 = vadd.f32 %v2096, %v2147
    %2149 = vmatmul.f32.gmra.mxu0 %v1988
    %v2150 = vpop.f32.mrf.mxu0
    %v2151 = vadd.f32 %v2096, %v2150
    %2152 = vmatmul.f32.gmra.mxu0 %v1990
    %v2153 = vpop.f32.mrf.mxu0
    %v2154 = vadd.f32 %v2096, %v2153
    %2155 = vmatmul.f32.gmra.mxu0 %v1992
    %v2156 = vpop.f32.mrf.mxu0
    %v2157 = vadd.f32 %v2096, %v2156
    %2158 = vmatmul.f32.gmra.mxu0 %v1994
    %v2159 = vpop.f32.mrf.mxu0
    %v2160 = vadd.f32 %v2096, %v2159
    %2161 = vmatmul.f32.gmra.mxu0 %v1996
    %v2162 = vpop.f32.mrf.mxu0
    %v2163 = vadd.f32 %v2096, %v2162
    %2164 = vmatmul.f32.gmra.mxu0 %v1998
    %v2165 = vpop.f32.mrf.mxu0
    %v2166 = vadd.f32 %v2096, %v2165
    %2167 = vmatmul.f32.gmra.mxu0 %v2000
    %v2168 = vpop.f32.mrf.mxu0
    %v2169 = vadd.f32 %v2096, %v2168
    %2170 = vmatmul.f32.gmra.mxu0 %v2002
    %v2171 = vpop.f32.mrf.mxu0
    %v2172 = vadd.f32 %v2096, %v2171
    %2173 = vmatmul.f32.gmra.mxu0 %v2004
    %v2174 = vpop.f32.mrf.mxu0
    %v2175 = vadd.f32 %v2096, %v2174
    %2176 = vmatmul.f32.gmra.mxu0 %v2006
    %v2177 = vpop.f32.mrf.mxu0
    %v2178 = vadd.f32 %v2096, %v2177
    %2179 = vmatmul.f32.gmra.mxu0 %v2008
    %v2180 = vpop.f32.mrf.mxu0
    %v2181 = vadd.f32 %v2096, %v2180
    %2182 = vmatmul.f32.gmra.mxu0 %v2010
    %v2183 = vpop.f32.mrf.mxu0
    %v2184 = vadd.f32 %v2096, %v2183
    %2185 = vmatmul.f32.gmra.mxu0 %v2012
    %v2186 = vpop.f32.mrf.mxu0
    %v2187 = vadd.f32 %v2096, %v2186
    %2188 = vmatmul.f32.gmra.mxu0 %v2014
    %v2189 = vpop.f32.mrf.mxu0
    %v2190 = vadd.f32 %v2096, %v2189
    %2191 = vmatmul.f32.gmra.mxu0 %v2016
    %v2192 = vpop.f32.mrf.mxu0
    %v2193 = vadd.f32 %v2096, %v2192
    %2194 = vmatmul.f32.gmra.mxu0 %v2018
    %v2195 = vpop.f32.mrf.mxu0
    %v2196 = vadd.f32 %v2096, %v2195
    %2197 = vmatmul.f32.gmra.mxu0 %v2020
    %v2198 = vpop.f32.mrf.mxu0
    %v2199 = vadd.f32 %v2096, %v2198
    %2200 = vmatmul.f32.gmra.mxu0 %v2022
    %v2201 = vpop.f32.mrf.mxu0
    %v2202 = vadd.f32 %v2096, %v2201
    %2203 = vmatmul.f32.gmra.mxu0 %v2024
    %v2204 = vpop.f32.mrf.mxu0
    %v2205 = vadd.f32 %v2096, %v2204
    %2206 = vmatmul.f32.gmra.mxu0 %v2026
    %v2207 = vpop.f32.mrf.mxu0
    %v2208 = vadd.f32 %v2096, %v2207
    %2209 = vmatmul.f32.gmra.mxu0 %v2028
    %v2210 = vpop.f32.mrf.mxu0
    %v2211 = vadd.f32 %v2096, %v2210
    %2212 = vdwg.mxu0
    %2213 = vmatpush.msra.mxu0 %v2092
    %2214 = vmatpush.msra.mxu0 %v2090
    %2215 = vmatpush.msra.mxu0 %v2088
    %2216 = vmatpush.msra.mxu0 %v2086
    %2217 = vmatpush.msra.mxu0 %v2084
    %2218 = vmatpush.msra.mxu0 %v2082
    %2219 = vmatpush.msra.mxu0 %v2080
    %2220 = vmatpush.msra.mxu0 %v2078
    %2221 = vmatpush.msra.mxu0 %v2076
    %2222 = vmatpush.msra.mxu0 %v2074
    %2223 = vmatpush.msra.mxu0 %v2072
    %2224 = vmatpush.msra.mxu0 %v2070
    %2225 = vmatpush.msra.mxu0 %v2068
    %2226 = vmatpush.msra.mxu0 %v2066
    %2227 = vmatpush.msra.mxu0 %v2064
    %2228 = vmatpush.msra.mxu0 %v2062
    %2229 = vmatmul.f32.gmra.mxu0 %v1967
    %v2230 = vpop.f32.mrf.mxu0
    %v2231 = vadd.f32 %v2118, %v2230
    %2232 = vmatmul.f32.gmra.mxu0 %v1969
    %v2233 = vpop.f32.mrf.mxu0
    %v2234 = vadd.f32 %v2121, %v2233
    %2235 = vmatmul.f32.gmra.mxu0 %v1971
    %v2236 = vpop.f32.mrf.mxu0
    %v2237 = vadd.f32 %v2124, %v2236
    %2238 = vmatmul.f32.gmra.mxu0 %v1973
    %v2239 = vpop.f32.mrf.mxu0
    %v2240 = vadd.f32 %v2127, %v2239
    %2241 = vmatmul.f32.gmra.mxu0 %v1975
    %v2242 = vpop.f32.mrf.mxu0
    %v2243 = vadd.f32 %v2130, %v2242
    %2244 = vmatmul.f32.gmra.mxu0 %v1977
    %v2245 = vpop.f32.mrf.mxu0
    %v2246 = vadd.f32 %v2133, %v2245
    %2247 = vmatmul.f32.gmra.mxu0 %v1979
    %v2248 = vpop.f32.mrf.mxu0
    %v2249 = vadd.f32 %v2136, %v2248
    %2250 = vmatmul.f32.gmra.mxu0 %v1981
    %v2251 = vpop.f32.mrf.mxu0
    %v2252 = vadd.f32 %v2139, %v2251
    %2253 = vmatmul.f32.gmra.mxu0 %v1983
    %v2254 = vpop.f32.mrf.mxu0
    %v2255 = vadd.f32 %v2142, %v2254
    %2256 = vmatmul.f32.gmra.mxu0 %v1985
    %v2257 = vpop.f32.mrf.mxu0
    %v2258 = vadd.f32 %v2145, %v2257
    %2259 = vmatmul.f32.gmra.mxu0 %v1987
    %v2260 = vpop.f32.mrf.mxu0
    %v2261 = vadd.f32 %v2148, %v2260
    %2262 = vmatmul.f32.gmra.mxu0 %v1989
    %v2263 = vpop.f32.mrf.mxu0
    %v2264 = vadd.f32 %v2151, %v2263
    %2265 = vmatmul.f32.gmra.mxu0 %v1991
    %v2266 = vpop.f32.mrf.mxu0
    %v2267 = vadd.f32 %v2154, %v2266
    %2268 = vmatmul.f32.gmra.mxu0 %v1993
    %v2269 = vpop.f32.mrf.mxu0
    %v2270 = vadd.f32 %v2157, %v2269
    %2271 = vmatmul.f32.gmra.mxu0 %v1995
    %v2272 = vpop.f32.mrf.mxu0
    %v2273 = vadd.f32 %v2160, %v2272
    %2274 = vmatmul.f32.gmra.mxu0 %v1997
    %v2275 = vpop.f32.mrf.mxu0
    %v2276 = vadd.f32 %v2163, %v2275
    %2277 = vmatmul.f32.gmra.mxu0 %v1999
    %v2278 = vpop.f32.mrf.mxu0
    %v2279 = vadd.f32 %v2166, %v2278
    %2280 = vmatmul.f32.gmra.mxu0 %v2001
    %v2281 = vpop.f32.mrf.mxu0
    %v2282 = vadd.f32 %v2169, %v2281
    %2283 = vmatmul.f32.gmra.mxu0 %v2003
    %v2284 = vpop.f32.mrf.mxu0
    %v2285 = vadd.f32 %v2172, %v2284
    %2286 = vmatmul.f32.gmra.mxu0 %v2005
    %v2287 = vpop.f32.mrf.mxu0
    %v2288 = vadd.f32 %v2175, %v2287
    %2289 = vmatmul.f32.gmra.mxu0 %v2007
    %v2290 = vpop.f32.mrf.mxu0
    %v2291 = vadd.f32 %v2178, %v2290
    %2292 = vmatmul.f32.gmra.mxu0 %v2009
    %v2293 = vpop.f32.mrf.mxu0
    %v2294 = vadd.f32 %v2181, %v2293
    %2295 = vmatmul.f32.gmra.mxu0 %v2011
    %v2296 = vpop.f32.mrf.mxu0
    %v2297 = vadd.f32 %v2184, %v2296
    %2298 = vmatmul.f32.gmra.mxu0 %v2013
    %v2299 = vpop.f32.mrf.mxu0
    %v2300 = vadd.f32 %v2187, %v2299
    %2301 = vmatmul.f32.gmra.mxu0 %v2015
    %v2302 = vpop.f32.mrf.mxu0
    %v2303 = vadd.f32 %v2190, %v2302
    %2304 = vmatmul.f32.gmra.mxu0 %v2017
    %v2305 = vpop.f32.mrf.mxu0
    %v2306 = vadd.f32 %v2193, %v2305
    %2307 = vmatmul.f32.gmra.mxu0 %v2019
    %v2308 = vpop.f32.mrf.mxu0
    %v2309 = vadd.f32 %v2196, %v2308
    %2310 = vmatmul.f32.gmra.mxu0 %v2021
    %v2311 = vpop.f32.mrf.mxu0
    %v2312 = vadd.f32 %v2199, %v2311
    %2313 = vmatmul.f32.gmra.mxu0 %v2023
    %v2314 = vpop.f32.mrf.mxu0
    %v2315 = vadd.f32 %v2202, %v2314
    %2316 = vmatmul.f32.gmra.mxu0 %v2025
    %v2317 = vpop.f32.mrf.mxu0
    %v2318 = vadd.f32 %v2205, %v2317
    %2319 = vmatmul.f32.gmra.mxu0 %v2027
    %v2320 = vpop.f32.mrf.mxu0
    %v2321 = vadd.f32 %v2208, %v2320
    %2322 = vmatmul.f32.gmra.mxu0 %v2029
    %v2323 = vpop.f32.mrf.mxu0
    %v2324 = vadd.f32 %v2211, %v2323
    %2325 = vdwg.mxu0
    %2326 = vmatpush.msra.mxu0 %v2061
    %2327 = vmatpush.msra.mxu0 %v2059
    %2328 = vmatpush.msra.mxu0 %v2057
    %2329 = vmatpush.msra.mxu0 %v2055
    %2330 = vmatpush.msra.mxu0 %v2053
    %2331 = vmatpush.msra.mxu0 %v2051
    %2332 = vmatpush.msra.mxu0 %v2049
    %2333 = vmatpush.msra.mxu0 %v2047
    %2334 = vmatpush.msra.mxu0 %v2045
    %2335 = vmatpush.msra.mxu0 %v2043
    %2336 = vmatpush.msra.mxu0 %v2041
    %2337 = vmatpush.msra.mxu0 %v2039
    %2338 = vmatpush.msra.mxu0 %v2037
    %2339 = vmatpush.msra.mxu0 %v2035
    %2340 = vmatpush.msra.mxu0 %v2033
    %2341 = vmatpush.msra.mxu0 %v2031
    %2342 = vmatmul.f32.gmra.mxu0 %v1966
    %v2343 = vpop.f32.mrf.mxu0
    %v2344 = vadd.f32 %v2097, %v2343
    %2345 = vmatmul.f32.gmra.mxu0 %v1968
    %v2346 = vpop.f32.mrf.mxu0
    %v2347 = vadd.f32 %v2097, %v2346
    %2348 = vmatmul.f32.gmra.mxu0 %v1970
    %v2349 = vpop.f32.mrf.mxu0
    %v2350 = vadd.f32 %v2097, %v2349
    %2351 = vmatmul.f32.gmra.mxu0 %v1972
    %v2352 = vpop.f32.mrf.mxu0
    %v2353 = vadd.f32 %v2097, %v2352
    %2354 = vmatmul.f32.gmra.mxu0 %v1974
    %v2355 = vpop.f32.mrf.mxu0
    %v2356 = vadd.f32 %v2097, %v2355
    %2357 = vmatmul.f32.gmra.mxu0 %v1976
    %v2358 = vpop.f32.mrf.mxu0
    %v2359 = vadd.f32 %v2097, %v2358
    %2360 = vmatmul.f32.gmra.mxu0 %v1978
    %v2361 = vpop.f32.mrf.mxu0
    %v2362 = vadd.f32 %v2097, %v2361
    %2363 = vmatmul.f32.gmra.mxu0 %v1980
    %v2364 = vpop.f32.mrf.mxu0
    %v2365 = vadd.f32 %v2097, %v2364
    %2366 = vmatmul.f32.gmra.mxu0 %v1982
    %v2367 = vpop.f32.mrf.mxu0
    %v2368 = vadd.f32 %v2097, %v2367
    %2369 = vmatmul.f32.gmra.mxu0 %v1984
    %v2370 = vpop.f32.mrf.mxu0
    %v2371 = vadd.f32 %v2097, %v2370
    %2372 = vmatmul.f32.gmra.mxu0 %v1986
    %v2373 = vpop.f32.mrf.mxu0
    %v2374 = vadd.f32 %v2097, %v2373
    %2375 = vmatmul.f32.gmra.mxu0 %v1988
    %v2376 = vpop.f32.mrf.mxu0
    %v2377 = vadd.f32 %v2097, %v2376
    %2378 = vmatmul.f32.gmra.mxu0 %v1990
    %v2379 = vpop.f32.mrf.mxu0
    %v2380 = vadd.f32 %v2097, %v2379
    %2381 = vmatmul.f32.gmra.mxu0 %v1992
    %v2382 = vpop.f32.mrf.mxu0
    %v2383 = vadd.f32 %v2097, %v2382
    %2384 = vmatmul.f32.gmra.mxu0 %v1994
    %v2385 = vpop.f32.mrf.mxu0
    %v2386 = vadd.f32 %v2097, %v2385
    %2387 = vmatmul.f32.gmra.mxu0 %v1996
    %v2388 = vpop.f32.mrf.mxu0
    %v2389 = vadd.f32 %v2097, %v2388
    %2390 = vmatmul.f32.gmra.mxu0 %v1998
    %v2391 = vpop.f32.mrf.mxu0
    %v2392 = vadd.f32 %v2097, %v2391
    %2393 = vmatmul.f32.gmra.mxu0 %v2000
    %v2394 = vpop.f32.mrf.mxu0
    %v2395 = vadd.f32 %v2097, %v2394
    %2396 = vmatmul.f32.gmra.mxu0 %v2002
    %v2397 = vpop.f32.mrf.mxu0
    %v2398 = vadd.f32 %v2097, %v2397
    %2399 = vmatmul.f32.gmra.mxu0 %v2004
    %v2400 = vpop.f32.mrf.mxu0
    %v2401 = vadd.f32 %v2097, %v2400
    %2402 = vmatmul.f32.gmra.mxu0 %v2006
    %v2403 = vpop.f32.mrf.mxu0
    %v2404 = vadd.f32 %v2097, %v2403
    %2405 = vmatmul.f32.gmra.mxu0 %v2008
    %v2406 = vpop.f32.mrf.mxu0
    %v2407 = vadd.f32 %v2097, %v2406
    %2408 = vmatmul.f32.gmra.mxu0 %v2010
    %v2409 = vpop.f32.mrf.mxu0
    %v2410 = vadd.f32 %v2097, %v2409
    %2411 = vmatmul.f32.gmra.mxu0 %v2012
    %v2412 = vpop.f32.mrf.mxu0
    %v2413 = vadd.f32 %v2097, %v2412
    %2414 = vmatmul.f32.gmra.mxu0 %v2014
    %v2415 = vpop.f32.mrf.mxu0
    %v2416 = vadd.f32 %v2097, %v2415
    %2417 = vmatmul.f32.gmra.mxu0 %v2016
    %v2418 = vpop.f32.mrf.mxu0
    %v2419 = vadd.f32 %v2097, %v2418
    %2420 = vmatmul.f32.gmra.mxu0 %v2018
    %v2421 = vpop.f32.mrf.mxu0
    %v2422 = vadd.f32 %v2097, %v2421
    %2423 = vmatmul.f32.gmra.mxu0 %v2020
    %v2424 = vpop.f32.mrf.mxu0
    %v2425 = vadd.f32 %v2097, %v2424
    %2426 = vmatmul.f32.gmra.mxu0 %v2022
    %v2427 = vpop.f32.mrf.mxu0
    %v2428 = vadd.f32 %v2097, %v2427
    %2429 = vmatmul.f32.gmra.mxu0 %v2024
    %v2430 = vpop.f32.mrf.mxu0
    %v2431 = vadd.f32 %v2097, %v2430
    %2432 = vmatmul.f32.gmra.mxu0 %v2026
    %v2433 = vpop.f32.mrf.mxu0
    %v2434 = vadd.f32 %v2097, %v2433
    %2435 = vmatmul.f32.gmra.mxu0 %v2028
    %v2436 = vpop.f32.mrf.mxu0
    %v2437 = vadd.f32 %v2097, %v2436
    %2438 = vdwg.mxu0
    %2439 = vmatpush.msra.mxu0 %v2093
    %2440 = vmatpush.msra.mxu0 %v2091
    %2441 = vmatpush.msra.mxu0 %v2089
    %2442 = vmatpush.msra.mxu0 %v2087
    %2443 = vmatpush.msra.mxu0 %v2085
    %2444 = vmatpush.msra.mxu0 %v2083
    %2445 = vmatpush.msra.mxu0 %v2081
    %2446 = vmatpush.msra.mxu0 %v2079
    %2447 = vmatpush.msra.mxu0 %v2077
    %2448 = vmatpush.msra.mxu0 %v2075
    %2449 = vmatpush.msra.mxu0 %v2073
    %2450 = vmatpush.msra.mxu0 %v2071
    %2451 = vmatpush.msra.mxu0 %v2069
    %2452 = vmatpush.msra.mxu0 %v2067
    %2453 = vmatpush.msra.mxu0 %v2065
    %2454 = vmatpush.msra.mxu0 %v2063
    %2455 = vmatmul.f32.gmra.mxu0 %v1967
    %v2456 = vpop.f32.mrf.mxu0
    %v2457 = vadd.f32 %v2344, %v2456
    %2458 = vmatmul.f32.gmra.mxu0 %v1969
    %v2459 = vpop.f32.mrf.mxu0
    %v2460 = vadd.f32 %v2347, %v2459
    %2461 = vmatmul.f32.gmra.mxu0 %v1971
    %v2462 = vpop.f32.mrf.mxu0
    %v2463 = vadd.f32 %v2350, %v2462
    %2464 = vmatmul.f32.gmra.mxu0 %v1973
    %v2465 = vpop.f32.mrf.mxu0
    %v2466 = vadd.f32 %v2353, %v2465
    %2467 = vmatmul.f32.gmra.mxu0 %v1975
    %v2468 = vpop.f32.mrf.mxu0
    %v2469 = vadd.f32 %v2356, %v2468
    %2470 = vmatmul.f32.gmra.mxu0 %v1977
    %v2471 = vpop.f32.mrf.mxu0
    %v2472 = vadd.f32 %v2359, %v2471
    %2473 = vmatmul.f32.gmra.mxu0 %v1979
    %v2474 = vpop.f32.mrf.mxu0
    %v2475 = vadd.f32 %v2362, %v2474
    %2476 = vmatmul.f32.gmra.mxu0 %v1981
    %v2477 = vpop.f32.mrf.mxu0
    %v2478 = vadd.f32 %v2365, %v2477
    %2479 = vmatmul.f32.gmra.mxu0 %v1983
    %v2480 = vpop.f32.mrf.mxu0
    %v2481 = vadd.f32 %v2368, %v2480
    %2482 = vmatmul.f32.gmra.mxu0 %v1985
    %v2483 = vpop.f32.mrf.mxu0
    %v2484 = vadd.f32 %v2371, %v2483
    %2485 = vmatmul.f32.gmra.mxu0 %v1987
    %v2486 = vpop.f32.mrf.mxu0
    %v2487 = vadd.f32 %v2374, %v2486
    %2488 = vmatmul.f32.gmra.mxu0 %v1989
    %v2489 = vpop.f32.mrf.mxu0
    %v2490 = vadd.f32 %v2377, %v2489
    %2491 = vmatmul.f32.gmra.mxu0 %v1991
    %v2492 = vpop.f32.mrf.mxu0
    %v2493 = vadd.f32 %v2380, %v2492
    %2494 = vmatmul.f32.gmra.mxu0 %v1993
    %v2495 = vpop.f32.mrf.mxu0
    %v2496 = vadd.f32 %v2383, %v2495
    %2497 = vmatmul.f32.gmra.mxu0 %v1995
    %v2498 = vpop.f32.mrf.mxu0
    %v2499 = vadd.f32 %v2386, %v2498
    %2500 = vmatmul.f32.gmra.mxu0 %v1997
    %v2501 = vpop.f32.mrf.mxu0
    %v2502 = vadd.f32 %v2389, %v2501
    %2503 = vmatmul.f32.gmra.mxu0 %v1999
    %v2504 = vpop.f32.mrf.mxu0
    %v2505 = vadd.f32 %v2392, %v2504
    %2506 = vmatmul.f32.gmra.mxu0 %v2001
    %v2507 = vpop.f32.mrf.mxu0
    %v2508 = vadd.f32 %v2395, %v2507
    %2509 = vmatmul.f32.gmra.mxu0 %v2003
    %v2510 = vpop.f32.mrf.mxu0
    %v2511 = vadd.f32 %v2398, %v2510
    %2512 = vmatmul.f32.gmra.mxu0 %v2005
    %v2513 = vpop.f32.mrf.mxu0
    %v2514 = vadd.f32 %v2401, %v2513
    %2515 = vmatmul.f32.gmra.mxu0 %v2007
    %v2516 = vpop.f32.mrf.mxu0
    %v2517 = vadd.f32 %v2404, %v2516
    %2518 = vmatmul.f32.gmra.mxu0 %v2009
    %v2519 = vpop.f32.mrf.mxu0
    %v2520 = vadd.f32 %v2407, %v2519
    %2521 = vmatmul.f32.gmra.mxu0 %v2011
    %v2522 = vpop.f32.mrf.mxu0
    %v2523 = vadd.f32 %v2410, %v2522
    %2524 = vmatmul.f32.gmra.mxu0 %v2013
    %v2525 = vpop.f32.mrf.mxu0
    %v2526 = vadd.f32 %v2413, %v2525
    %2527 = vmatmul.f32.gmra.mxu0 %v2015
    %v2528 = vpop.f32.mrf.mxu0
    %v2529 = vadd.f32 %v2416, %v2528
    %2530 = vmatmul.f32.gmra.mxu0 %v2017
    %v2531 = vpop.f32.mrf.mxu0
    %v2532 = vadd.f32 %v2419, %v2531
    %2533 = vmatmul.f32.gmra.mxu0 %v2019
    %v2534 = vpop.f32.mrf.mxu0
    %v2535 = vadd.f32 %v2422, %v2534
    %2536 = vmatmul.f32.gmra.mxu0 %v2021
    %v2537 = vpop.f32.mrf.mxu0
    %v2538 = vadd.f32 %v2425, %v2537
    %2539 = vmatmul.f32.gmra.mxu0 %v2023
    %v2540 = vpop.f32.mrf.mxu0
    %v2541 = vadd.f32 %v2428, %v2540
    %2542 = vmatmul.f32.gmra.mxu0 %v2025
    %v2543 = vpop.f32.mrf.mxu0
    %v2544 = vadd.f32 %v2431, %v2543
    %2545 = vmatmul.f32.gmra.mxu0 %v2027
    %v2546 = vpop.f32.mrf.mxu0
    %v2547 = vadd.f32 %v2434, %v2546
    %2548 = vmatmul.f32.gmra.mxu0 %v2029
    %v2549 = vpop.f32.mrf.mxu0
    %v2550 = vadd.f32 %v2437, %v2549
    %2551 = vdwg.mxu0
    %v2552 = vld [vmem:[%s6] ss:$2 sm:$0x3]
    %v2554 = vperm.slane %v2552, 0
    %v2555 = vperm.slane %v2552, 1
    %v2558 = vmul.f32 %v1253, %v2554
    %v2559 = vmul.f32 %v1253, %v2555
    %v2560 = vmul.f32 %v1258, %v2554
    %v2561 = vmul.f32 %v1258, %v2555
    %v2562 = vmul.f32 %v1263, %v2554
    %v2563 = vmul.f32 %v1263, %v2555
    %v2564 = vmul.f32 %v1268, %v2554
    %v2565 = vmul.f32 %v1268, %v2555
    %v2566 = vmul.f32 %v1273, %v2554
    %v2567 = vmul.f32 %v1273, %v2555
    %v2568 = vmul.f32 %v1278, %v2554
    %v2569 = vmul.f32 %v1278, %v2555
    %v2570 = vmul.f32 %v1283, %v2554
    %v2571 = vmul.f32 %v1283, %v2555
    %v2572 = vmul.f32 %v1288, %v2554
    %v2573 = vmul.f32 %v1288, %v2555
    %v2574 = vmul.f32 %v1293, %v2554
    %v2575 = vmul.f32 %v1293, %v2555
    %v2576 = vmul.f32 %v1298, %v2554
    %v2577 = vmul.f32 %v1298, %v2555
    %v2578 = vmul.f32 %v1303, %v2554
    %v2579 = vmul.f32 %v1303, %v2555
    %v2580 = vmul.f32 %v1308, %v2554
    %v2581 = vmul.f32 %v1308, %v2555
    %v2582 = vmul.f32 %v1313, %v2554
    %v2583 = vmul.f32 %v1313, %v2555
    %v2584 = vmul.f32 %v1318, %v2554
    %v2585 = vmul.f32 %v1318, %v2555
    %v2586 = vmul.f32 %v1323, %v2554
    %v2587 = vmul.f32 %v1323, %v2555
    %v2588 = vmul.f32 %v1328, %v2554
    %v2589 = vmul.f32 %v1328, %v2555
    %v2590 = vmul.f32 %v1333, %v2554
    %v2591 = vmul.f32 %v1333, %v2555
    %v2592 = vmul.f32 %v1338, %v2554
    %v2593 = vmul.f32 %v1338, %v2555
    %v2594 = vmul.f32 %v1343, %v2554
    %v2595 = vmul.f32 %v1343, %v2555
    %v2596 = vmul.f32 %v1348, %v2554
    %v2597 = vmul.f32 %v1348, %v2555
    %v2598 = vmul.f32 %v1353, %v2554
    %v2599 = vmul.f32 %v1353, %v2555
    %v2600 = vmul.f32 %v1358, %v2554
    %v2601 = vmul.f32 %v1358, %v2555
    %v2602 = vmul.f32 %v1363, %v2554
    %v2603 = vmul.f32 %v1363, %v2555
    %v2604 = vmul.f32 %v1368, %v2554
    %v2605 = vmul.f32 %v1368, %v2555
    %v2606 = vmul.f32 %v1373, %v2554
    %v2607 = vmul.f32 %v1373, %v2555
    %v2608 = vmul.f32 %v1378, %v2554
    %v2609 = vmul.f32 %v1378, %v2555
    %v2610 = vmul.f32 %v1383, %v2554
    %v2611 = vmul.f32 %v1383, %v2555
    %v2612 = vmul.f32 %v1388, %v2554
    %v2613 = vmul.f32 %v1388, %v2555
    %v2614 = vmul.f32 %v1393, %v2554
    %v2615 = vmul.f32 %v1393, %v2555
    %v2616 = vmul.f32 %v1398, %v2554
    %v2617 = vmul.f32 %v1398, %v2555
    %v2618 = vmul.f32 %v1403, %v2554
    %v2619 = vmul.f32 %v1403, %v2555
    %v2620 = vmul.f32 %v1408, %v2554
    %v2621 = vmul.f32 %v1408, %v2555
    %v2622 = vadd.f32 %v2231, %v2558
    %v2623 = vadd.f32 %v2457, %v2559
    %v2624 = vadd.f32 %v2234, %v2560
    %v2625 = vadd.f32 %v2460, %v2561
    %v2626 = vadd.f32 %v2237, %v2562
    %v2627 = vadd.f32 %v2463, %v2563
    %v2628 = vadd.f32 %v2240, %v2564
    %v2629 = vadd.f32 %v2466, %v2565
    %v2630 = vadd.f32 %v2243, %v2566
    %v2631 = vadd.f32 %v2469, %v2567
    %v2632 = vadd.f32 %v2246, %v2568
    %v2633 = vadd.f32 %v2472, %v2569
    %v2634 = vadd.f32 %v2249, %v2570
    %v2635 = vadd.f32 %v2475, %v2571
    %v2636 = vadd.f32 %v2252, %v2572
    %v2637 = vadd.f32 %v2478, %v2573
    %v2638 = vadd.f32 %v2255, %v2574
    %v2639 = vadd.f32 %v2481, %v2575
    %v2640 = vadd.f32 %v2258, %v2576
    %v2641 = vadd.f32 %v2484, %v2577
    %v2642 = vadd.f32 %v2261, %v2578
    %v2643 = vadd.f32 %v2487, %v2579
    %v2644 = vadd.f32 %v2264, %v2580
    %v2645 = vadd.f32 %v2490, %v2581
    %v2646 = vadd.f32 %v2267, %v2582
    %v2647 = vadd.f32 %v2493, %v2583
    %v2648 = vadd.f32 %v2270, %v2584
    %v2649 = vadd.f32 %v2496, %v2585
    %v2650 = vadd.f32 %v2273, %v2586
    %v2651 = vadd.f32 %v2499, %v2587
    %v2652 = vadd.f32 %v2276, %v2588
    %v2653 = vadd.f32 %v2502, %v2589
    %v2654 = vadd.f32 %v2279, %v2590
    %v2655 = vadd.f32 %v2505, %v2591
    %v2656 = vadd.f32 %v2282, %v2592
    %v2657 = vadd.f32 %v2508, %v2593
    %v2658 = vadd.f32 %v2285, %v2594
    %v2659 = vadd.f32 %v2511, %v2595
    %v2660 = vadd.f32 %v2288, %v2596
    %v2661 = vadd.f32 %v2514, %v2597
    %v2662 = vadd.f32 %v2291, %v2598
    %v2663 = vadd.f32 %v2517, %v2599
    %v2664 = vadd.f32 %v2294, %v2600
    %v2665 = vadd.f32 %v2520, %v2601
    %v2666 = vadd.f32 %v2297, %v2602
    %v2667 = vadd.f32 %v2523, %v2603
    %v2668 = vadd.f32 %v2300, %v2604
    %v2669 = vadd.f32 %v2526, %v2605
    %v2670 = vadd.f32 %v2303, %v2606
    %v2671 = vadd.f32 %v2529, %v2607
    %v2672 = vadd.f32 %v2306, %v2608
    %v2673 = vadd.f32 %v2532, %v2609
    %v2674 = vadd.f32 %v2309, %v2610
    %v2675 = vadd.f32 %v2535, %v2611
    %v2676 = vadd.f32 %v2312, %v2612
    %v2677 = vadd.f32 %v2538, %v2613
    %v2678 = vadd.f32 %v2315, %v2614
    %v2679 = vadd.f32 %v2541, %v2615
    %v2680 = vadd.f32 %v2318, %v2616
    %v2681 = vadd.f32 %v2544, %v2617
    %v2682 = vadd.f32 %v2321, %v2618
    %v2683 = vadd.f32 %v2547, %v2619
    %v2684 = vadd.f32 %v2324, %v2620
    %v2685 = vadd.f32 %v2550, %v2621
    %s2686 = scalar_lea.vmem %s6, 1
    %v2687 = vld [vmem:[%s2686] ss:$2 sm:$0x3]
    %v2689 = vperm.slane %v2687, 0
    %v2690 = vperm.slane %v2687, 1
    %v2693 = vmul.f32 %v1548, %v2689
    %v2694 = vmul.f32 %v1548, %v2690
    %v2695 = vmul.f32 %v1553, %v2689
    %v2696 = vmul.f32 %v1553, %v2690
    %v2697 = vmul.f32 %v1558, %v2689
    %v2698 = vmul.f32 %v1558, %v2690
    %v2699 = vmul.f32 %v1563, %v2689
    %v2700 = vmul.f32 %v1563, %v2690
    %v2701 = vmul.f32 %v1568, %v2689
    %v2702 = vmul.f32 %v1568, %v2690
    %v2703 = vmul.f32 %v1573, %v2689
    %v2704 = vmul.f32 %v1573, %v2690
    %v2705 = vmul.f32 %v1578, %v2689
    %v2706 = vmul.f32 %v1578, %v2690
    %v2707 = vmul.f32 %v1583, %v2689
    %v2708 = vmul.f32 %v1583, %v2690
    %v2709 = vmul.f32 %v1588, %v2689
    %v2710 = vmul.f32 %v1588, %v2690
    %v2711 = vmul.f32 %v1593, %v2689
    %v2712 = vmul.f32 %v1593, %v2690
    %v2713 = vmul.f32 %v1598, %v2689
    %v2714 = vmul.f32 %v1598, %v2690
    %v2715 = vmul.f32 %v1603, %v2689
    %v2716 = vmul.f32 %v1603, %v2690
    %v2717 = vmul.f32 %v1608, %v2689
    %v2718 = vmul.f32 %v1608, %v2690
    %v2719 = vmul.f32 %v1613, %v2689
    %v2720 = vmul.f32 %v1613, %v2690
    %v2721 = vmul.f32 %v1618, %v2689
    %v2722 = vmul.f32 %v1618, %v2690
    %v2723 = vmul.f32 %v1623, %v2689
    %v2724 = vmul.f32 %v1623, %v2690
    %v2725 = vmul.f32 %v1628, %v2689
    %v2726 = vmul.f32 %v1628, %v2690
    %v2727 = vmul.f32 %v1633, %v2689
    %v2728 = vmul.f32 %v1633, %v2690
    %v2729 = vmul.f32 %v1638, %v2689
    %v2730 = vmul.f32 %v1638, %v2690
    %v2731 = vmul.f32 %v1643, %v2689
    %v2732 = vmul.f32 %v1643, %v2690
    %v2733 = vmul.f32 %v1648, %v2689
    %v2734 = vmul.f32 %v1648, %v2690
    %v2735 = vmul.f32 %v1653, %v2689
    %v2736 = vmul.f32 %v1653, %v2690
    %v2737 = vmul.f32 %v1658, %v2689
    %v2738 = vmul.f32 %v1658, %v2690
    %v2739 = vmul.f32 %v1663, %v2689
    %v2740 = vmul.f32 %v1663, %v2690
    %v2741 = vmul.f32 %v1668, %v2689
    %v2742 = vmul.f32 %v1668, %v2690
    %v2743 = vmul.f32 %v1673, %v2689
    %v2744 = vmul.f32 %v1673, %v2690
    %v2745 = vmul.f32 %v1678, %v2689
    %v2746 = vmul.f32 %v1678, %v2690
    %v2747 = vmul.f32 %v1683, %v2689
    %v2748 = vmul.f32 %v1683, %v2690
    %v2749 = vmul.f32 %v1688, %v2689
    %v2750 = vmul.f32 %v1688, %v2690
    %v2751 = vmul.f32 %v1693, %v2689
    %v2752 = vmul.f32 %v1693, %v2690
    %v2753 = vmul.f32 %v1698, %v2689
    %v2754 = vmul.f32 %v1698, %v2690
    %v2755 = vmul.f32 %v1703, %v2689
    %v2756 = vmul.f32 %v1703, %v2690
    %v2757 = vadd.f32 %v2622, %v2693
    %v2758 = vadd.f32 %v2623, %v2694
    %v2759 = vadd.f32 %v2624, %v2695
    %v2760 = vadd.f32 %v2625, %v2696
    %v2761 = vadd.f32 %v2626, %v2697
    %v2762 = vadd.f32 %v2627, %v2698
    %v2763 = vadd.f32 %v2628, %v2699
    %v2764 = vadd.f32 %v2629, %v2700
    %v2765 = vadd.f32 %v2630, %v2701
    %v2766 = vadd.f32 %v2631, %v2702
    %v2767 = vadd.f32 %v2632, %v2703
    %v2768 = vadd.f32 %v2633, %v2704
    %v2769 = vadd.f32 %v2634, %v2705
    %v2770 = vadd.f32 %v2635, %v2706
    %v2771 = vadd.f32 %v2636, %v2707
    %v2772 = vadd.f32 %v2637, %v2708
    %v2773 = vadd.f32 %v2638, %v2709
    %v2774 = vadd.f32 %v2639, %v2710
    %v2775 = vadd.f32 %v2640, %v2711
    %v2776 = vadd.f32 %v2641, %v2712
    %v2777 = vadd.f32 %v2642, %v2713
    %v2778 = vadd.f32 %v2643, %v2714
    %v2779 = vadd.f32 %v2644, %v2715
    %v2780 = vadd.f32 %v2645, %v2716
    %v2781 = vadd.f32 %v2646, %v2717
    %v2782 = vadd.f32 %v2647, %v2718
    %v2783 = vadd.f32 %v2648, %v2719
    %v2784 = vadd.f32 %v2649, %v2720
    %v2785 = vadd.f32 %v2650, %v2721
    %v2786 = vadd.f32 %v2651, %v2722
    %v2787 = vadd.f32 %v2652, %v2723
    %v2788 = vadd.f32 %v2653, %v2724
    %v2789 = vadd.f32 %v2654, %v2725
    %v2790 = vadd.f32 %v2655, %v2726
    %v2791 = vadd.f32 %v2656, %v2727
    %v2792 = vadd.f32 %v2657, %v2728
    %v2793 = vadd.f32 %v2658, %v2729
    %v2794 = vadd.f32 %v2659, %v2730
    %v2795 = vadd.f32 %v2660, %v2731
    %v2796 = vadd.f32 %v2661, %v2732
    %v2797 = vadd.f32 %v2662, %v2733
    %v2798 = vadd.f32 %v2663, %v2734
    %v2799 = vadd.f32 %v2664, %v2735
    %v2800 = vadd.f32 %v2665, %v2736
    %v2801 = vadd.f32 %v2666, %v2737
    %v2802 = vadd.f32 %v2667, %v2738
    %v2803 = vadd.f32 %v2668, %v2739
    %v2804 = vadd.f32 %v2669, %v2740
    %v2805 = vadd.f32 %v2670, %v2741
    %v2806 = vadd.f32 %v2671, %v2742
    %v2807 = vadd.f32 %v2672, %v2743
    %v2808 = vadd.f32 %v2673, %v2744
    %v2809 = vadd.f32 %v2674, %v2745
    %v2810 = vadd.f32 %v2675, %v2746
    %v2811 = vadd.f32 %v2676, %v2747
    %v2812 = vadd.f32 %v2677, %v2748
    %v2813 = vadd.f32 %v2678, %v2749
    %v2814 = vadd.f32 %v2679, %v2750
    %v2815 = vadd.f32 %v2680, %v2751
    %v2816 = vadd.f32 %v2681, %v2752
    %v2817 = vadd.f32 %v2682, %v2753
    %v2818 = vadd.f32 %v2683, %v2754
    %v2819 = vadd.f32 %v2684, %v2755
    %v2820 = vadd.f32 %v2685, %v2756
    %v2821 = vtanh.pop %v2757
    %v2822 = vtanh.pop %v2758
    %v2823 = vtanh.pop %v2759
    %v2824 = vtanh.pop %v2760
    %v2825 = vtanh.pop %v2761
    %v2826 = vtanh.pop %v2762
    %v2827 = vtanh.pop %v2763
    %v2828 = vtanh.pop %v2764
    %v2829 = vtanh.pop %v2765
    %v2830 = vtanh.pop %v2766
    %v2831 = vtanh.pop %v2767
    %v2832 = vtanh.pop %v2768
    %v2833 = vtanh.pop %v2769
    %v2834 = vtanh.pop %v2770
    %v2835 = vtanh.pop %v2771
    %v2836 = vtanh.pop %v2772
    %v2837 = vtanh.pop %v2773
    %v2838 = vtanh.pop %v2774
    %v2839 = vtanh.pop %v2775
    %v2840 = vtanh.pop %v2776
    %v2841 = vtanh.pop %v2777
    %v2842 = vtanh.pop %v2778
    %v2843 = vtanh.pop %v2779
    %v2844 = vtanh.pop %v2780
    %v2845 = vtanh.pop %v2781
    %v2846 = vtanh.pop %v2782
    %v2847 = vtanh.pop %v2783
    %v2848 = vtanh.pop %v2784
    %v2849 = vtanh.pop %v2785
    %v2850 = vtanh.pop %v2786
    %v2851 = vtanh.pop %v2787
    %v2852 = vtanh.pop %v2788
    %v2853 = vtanh.pop %v2789
    %v2854 = vtanh.pop %v2790
    %v2855 = vtanh.pop %v2791
    %v2856 = vtanh.pop %v2792
    %v2857 = vtanh.pop %v2793
    %v2858 = vtanh.pop %v2794
    %v2859 = vtanh.pop %v2795
    %v2860 = vtanh.pop %v2796
    %v2861 = vtanh.pop %v2797
    %v2862 = vtanh.pop %v2798
    %v2863 = vtanh.pop %v2799
    %v2864 = vtanh.pop %v2800
    %v2865 = vtanh.pop %v2801
    %v2866 = vtanh.pop %v2802
    %v2867 = vtanh.pop %v2803
    %v2868 = vtanh.pop %v2804
    %v2869 = vtanh.pop %v2805
    %v2870 = vtanh.pop %v2806
    %v2871 = vtanh.pop %v2807
    %v2872 = vtanh.pop %v2808
    %v2873 = vtanh.pop %v2809
    %v2874 = vtanh.pop %v2810
    %v2875 = vtanh.pop %v2811
    %v2876 = vtanh.pop %v2812
    %v2877 = vtanh.pop %v2813
    %v2878 = vtanh.pop %v2814
    %v2879 = vtanh.pop %v2815
    %v2880 = vtanh.pop %v2816
    %v2881 = vtanh.pop %v2817
    %v2882 = vtanh.pop %v2818
    %v2883 = vtanh.pop %v2819
    %v2884 = vtanh.pop %v2820
    %2885 = vst [vmem:[#allocation14] sm:$0xff] %v2821
    %2886 = vst [vmem:[#allocation14 + $0x8] sm:$0xff] %v2822
    %2887 = vst [vmem:[#allocation14 + $0x10] sm:$0xff] %v2823
    %2888 = vst [vmem:[#allocation14 + $0x18] sm:$0xff] %v2824
    %2889 = vst [vmem:[#allocation14 + $0x20] sm:$0xff] %v2825
    %2890 = vst [vmem:[#allocation14 + $0x28] sm:$0xff] %v2826
    %2891 = vst [vmem:[#allocation14 + $0x30] sm:$0xff] %v2827
    %2892 = vst [vmem:[#allocation14 + $0x38] sm:$0xff] %v2828
    %2893 = vst [vmem:[#allocation14 + $0x40] sm:$0xff] %v2829
    %2894 = vst [vmem:[#allocation14 + $0x48] sm:$0xff] %v2830
    %2895 = vst [vmem:[#allocation14 + $0x50] sm:$0xff] %v2831
    %2896 = vst [vmem:[#allocation14 + $0x58] sm:$0xff] %v2832
    %2897 = vst [vmem:[#allocation14 + $0x60] sm:$0xff] %v2833
    %2898 = vst [vmem:[#allocation14 + $0x68] sm:$0xff] %v2834
    %2899 = vst [vmem:[#allocation14 + $0x70] sm:$0xff] %v2835
    %2900 = vst [vmem:[#allocation14 + $0x78] sm:$0xff] %v2836
    %2901 = vst [vmem:[#allocation14 + $0x80] sm:$0xff] %v2837
    %2902 = vst [vmem:[#allocation14 + $0x88] sm:$0xff] %v2838
    %2903 = vst [vmem:[#allocation14 + $0x90] sm:$0xff] %v2839
    %2904 = vst [vmem:[#allocation14 + $0x98] sm:$0xff] %v2840
    %2905 = vst [vmem:[#allocation14 + $0xa0] sm:$0xff] %v2841
    %2906 = vst [vmem:[#allocation14 + $0xa8] sm:$0xff] %v2842
    %2907 = vst [vmem:[#allocation14 + $0xb0] sm:$0xff] %v2843
    %2908 = vst [vmem:[#allocation14 + $0xb8] sm:$0xff] %v2844
    %2909 = vst [vmem:[#allocation14 + $0xc0] sm:$0xff] %v2845
    %2910 = vst [vmem:[#allocation14 + $0xc8] sm:$0xff] %v2846
    %2911 = vst [vmem:[#allocation14 + $0xd0] sm:$0xff] %v2847
    %2912 = vst [vmem:[#allocation14 + $0xd8] sm:$0xff] %v2848
    %2913 = vst [vmem:[#allocation14 + $0xe0] sm:$0xff] %v2849
    %2914 = vst [vmem:[#allocation14 + $0xe8] sm:$0xff] %v2850
    %2915 = vst [vmem:[#allocation14 + $0xf0] sm:$0xff] %v2851
    %2916 = vst [vmem:[#allocation14 + $0xf8] sm:$0xff] %v2852
    %2917 = vst [vmem:[#allocation14 + $0x100] sm:$0xff] %v2853
    %2918 = vst [vmem:[#allocation14 + $0x108] sm:$0xff] %v2854
    %2919 = vst [vmem:[#allocation14 + $0x110] sm:$0xff] %v2855
    %2920 = vst [vmem:[#allocation14 + $0x118] sm:$0xff] %v2856
    %2921 = vst [vmem:[#allocation14 + $0x120] sm:$0xff] %v2857
    %2922 = vst [vmem:[#allocation14 + $0x128] sm:$0xff] %v2858
    %2923 = vst [vmem:[#allocation14 + $0x130] sm:$0xff] %v2859
    %2924 = vst [vmem:[#allocation14 + $0x138] sm:$0xff] %v2860
    %2925 = vst [vmem:[#allocation14 + $0x140] sm:$0xff] %v2861
    %2926 = vst [vmem:[#allocation14 + $0x148] sm:$0xff] %v2862
    %2927 = vst [vmem:[#allocation14 + $0x150] sm:$0xff] %v2863
    %2928 = vst [vmem:[#allocation14 + $0x158] sm:$0xff] %v2864
    %2929 = vst [vmem:[#allocation14 + $0x160] sm:$0xff] %v2865
    %2930 = vst [vmem:[#allocation14 + $0x168] sm:$0xff] %v2866
    %2931 = vst [vmem:[#allocation14 + $0x170] sm:$0xff] %v2867
    %2932 = vst [vmem:[#allocation14 + $0x178] sm:$0xff] %v2868
    %2933 = vst [vmem:[#allocation14 + $0x180] sm:$0xff] %v2869
    %2934 = vst [vmem:[#allocation14 + $0x188] sm:$0xff] %v2870
    %2935 = vst [vmem:[#allocation14 + $0x190] sm:$0xff] %v2871
    %2936 = vst [vmem:[#allocation14 + $0x198] sm:$0xff] %v2872
    %2937 = vst [vmem:[#allocation14 + $0x1a0] sm:$0xff] %v2873
    %2938 = vst [vmem:[#allocation14 + $0x1a8] sm:$0xff] %v2874
    %2939 = vst [vmem:[#allocation14 + $0x1b0] sm:$0xff] %v2875
    %2940 = vst [vmem:[#allocation14 + $0x1b8] sm:$0xff] %v2876
    %2941 = vst [vmem:[#allocation14 + $0x1c0] sm:$0xff] %v2877
    %2942 = vst [vmem:[#allocation14 + $0x1c8] sm:$0xff] %v2878
    %2943 = vst [vmem:[#allocation14 + $0x1d0] sm:$0xff] %v2879
    %2944 = vst [vmem:[#allocation14 + $0x1d8] sm:$0xff] %v2880
    %2945 = vst [vmem:[#allocation14 + $0x1e0] sm:$0xff] %v2881
    %2946 = vst [vmem:[#allocation14 + $0x1e8] sm:$0xff] %v2882
    %2947 = vst [vmem:[#allocation14 + $0x1f0] sm:$0xff] %v2883
    %2948 = vst [vmem:[#allocation14 + $0x1f8] sm:$0xff] %v2884
    // Predicated region
    $region70: #{tpu_custom_call.1} parent=1 // pred_check
      _
    $region71: #{tpu_custom_call.1} parent=1 // pred_check_branch
      %2950 = sbr.rel (0) target = $region73
    $region72: #{tpu_custom_call.1} parent=1 // pred_region
      %2952 = vsyncadd [#allocation4], 0
      %s2953 = sshll.u32 [#allocation13], 4
      %s2954 = int_to_ptr.vmem [resolvable:$true] %s2953
      %s2955 = sshll.u32 %s11, 4
      %s2956 = int_to_ptr.hbm [resolvable:$true] %s2955
      %2961 = dma.vmem_to_hbm [thread:$0]  %s2954, 8192, %s2956, [#allocation4], 256, 256, 16
    $region73: #{tpu_custom_call.1} parent=1 // pred_fallthru
      _
    // Predicated region
    $region74: #{tpu_custom_call.1} parent=1 // pred_check
      _
    $region75: #{tpu_custom_call.1} parent=1 // pred_check_branch
      %2963 = sbr.rel (0) target = $region77
    $region76: #{tpu_custom_call.1} parent=1 // pred_region
      %2965 = vsyncadd [#allocation15], 0
      %s2966 = sshll.u32 [#allocation14], 4
      %s2967 = int_to_ptr.vmem [resolvable:$true] %s2966
      %s2968 = sshll.u32 %s12, 4
      %s2969 = int_to_ptr.hbm [resolvable:$true] %s2968
      %2974 = dma.vmem_to_hbm [thread:$0]  %s2967, 8192, %s2969, [#allocation15], 256, 256, 16
    $region77: #{tpu_custom_call.1} parent=1 // pred_fallthru
      _
    // Predicated region
    $region78: #{tpu_custom_call.1} parent=1 // pred_check
      _
    $region79: #{tpu_custom_call.1} parent=1 // pred_check_branch
      %2976 = sbr.rel (0) target = $region81
    $region80: #{tpu_custom_call.1} parent=1 // pred_region
      %2978 = dma.done [#allocation4], 8192
    $region81: #{tpu_custom_call.1} parent=1 // pred_fallthru
      _
    // Predicated region
    $region82: #{tpu_custom_call.1} parent=1 // pred_check
      _
    $region83: #{tpu_custom_call.1} parent=1 // pred_check_branch
      %2980 = sbr.rel (0) target = $region85
    $region84: #{tpu_custom_call.1} parent=1 // pred_region
      %2982 = dma.done [#allocation15], 8192
    $region85: #{tpu_custom_call.1} parent=1 // pred_fallthru
      _
    %2983 = vsyncpa [#allocation3], 1
    %2984 = vsyncpa [#allocation6], 1
    %2985 = vsyncpa [#allocation9], 1
    %2986 = vsyncpa [#allocation12], 1
    %2987 = vsyncpa [#allocation4], 1
    %2988 = vsyncpa [#allocation15], 1

// kernel: tpu_custom_call.1
$region0: #{tpu_custom_call.1}
  #allocation0 [shape = 'u32[]', space=smem, size = 0x4, offset = 0x4, fixed_abs, tag = 'smem constant byte address 0x4 - core index']
  #allocation1 [shape = 'u32[72,128]{1,0:T(1,128)}', space=vmem, size = 0x9000, scoped, tag = 'internal scratch']
  %s0 = inlined_call_operand.hbm [shape: f32[256,256], index: 0, kind: input, shape index: {}]
  %s1 = inlined_call_operand.hbm [shape: f32[256,256], index: 1, kind: input, shape index: {}]
  %s2 = inlined_call_operand.hbm [shape: f32[256,256], index: 2, kind: input, shape index: {}]
  %s3 = inlined_call_operand.vmem [shape: f32[2,256], index: 3, kind: input, shape index: {}]
  %s4 = inlined_call_operand.vmem [shape: f32[2,1], index: 4, kind: input, shape index: {}]
  %s5 = inlined_call_operand.hbm [shape: f32[2,256], index: 5, kind: input, shape index: {}]
  %s6 = inlined_call_operand.vmem [shape: f32[2,256], index: 6, kind: input, shape index: {}]
  %s7 = inlined_call_operand.hbm [shape: f32[256,256], index: 7, kind: input, shape index: {}]
  %s8 = inlined_call_operand.vmem [shape: f32[1,256], index: 8, kind: input, shape index: {}]
  %s9 = inlined_call_operand.hbm [shape: f32[256,256], index: 9, kind: input, shape index: {}]
  %s10 = inlined_call_operand.vmem [shape: f32[1,256], index: 10, kind: input, shape index: {}]
  %s11 = inlined_call_operand.hbm [shape: f32[256,256], index: 11, kind: output, shape index: {0}]
  %s12 = inlined_call_operand.hbm [shape: f32[256,256], index: 12, kind: output, shape index: {1}]
  %13 = xla_tuple %s11, %s12
  %s14 = sld [smem:[#allocation0]]
  $region86: #{tpu_custom_call.1} parent=0
    _
  %s16 = ssub.s32 1, %s14
  %s17 = scalar_select 0, %s16, %s14
  $region1: #{tpu_custom_call.1} parent=0
    #allocation2 [shape = 'u8[262144]{0}', space=vmem, size = 0x40000, scoped, tag = 'input window, operand 0, single buffered']
    #allocation3 [shape = 's32[1]{0}', space=sflag, size = 0x4, scoped, tag = 'scoped memory for tpu_custom_call.1']
    #allocation4 [shape = 's32[1]{0}', space=sflag, size = 0x4, scoped, tag = 'scoped memory for tpu_custom_call.1']
    #allocation5 [shape = 'u8[262144]{0}', space=vmem, size = 0x40000, scoped, tag = 'input window, operand 1, single buffered']
    #allocation6 [shape = 's32[1]{0}', space=sflag, size = 0x4, scoped, tag = 'scoped memory for tpu_custom_call.1']
    #allocation7 [shape = 'u8[262144]{0}', space=vmem, size = 0x40000, scoped, tag = 'input window, operand 2, single buffered']
    #allocation8 [shape = 'u8[2048]{0}', space=vmem, size = 0x800, scoped, tag = 'input window, operand 5, single buffered']
    #allocation9 [shape = 's32[1]{0}', space=sflag, size = 0x4, scoped, tag = 'scoped memory for tpu_custom_call.1']
    #allocation10 [shape = 'u8[262144]{0}', space=vmem, size = 0x40000, scoped, tag = 'input window, operand 7, single buffered']
    #allocation11 [shape = 'u8[262144]{0}', space=vmem, size = 0x40000, scoped, tag = 'input window, operand 9, single buffered']
    #allocation12 [shape = 's32[1]{0}', space=sflag, size = 0x4, scoped, tag = 'scoped memory for tpu_custom_call.1']
    #allocation13 [shape = 'u8[262144]{0}', space=vmem, size = 0x40000, scoped, tag = 'output window, operand 0, single buffered']
    #allocation14 [shape = 'u8[262144]{0}', space=vmem, size = 0x40000, scoped, tag = 'output window, operand 1, single buffered']
    #allocation15 [shape = 's32[1]{0}', space=sflag, size = 0x4, scoped, tag = 'scoped memory for tpu_custom_call.1']
    %18 = vsyncpa [#allocation3], 0
    %19 = vsyncpa [#allocation6], 0
    %20 = vsyncpa [#allocation9], 0
    %21 = vsyncpa [#allocation12], 0
    %22 = vsyncpa [#allocation4], 0
    %23 = vsyncpa [#allocation15], 0
    // Predicated region
    $region2: #{tpu_custom_call.1} parent=1 // pred_check
      _
    $region3: #{tpu_custom_call.1} parent=1 // pred_check_branch
      %25 = sbr.rel (0) target = $region5
    $region4: #{tpu_custom_call.1} parent=1 // pred_region
      %27 = vsyncadd [#allocation3], 0
      %s28 = sshll.u32 %s0, 4
      %s29 = int_to_ptr.hbm [resolvable:$true] %s28
      %s30 = sshll.u32 [#allocation2], 4
      %s31 = int_to_ptr.vmem [resolvable:$true] %s30
      %36 = dma.hbm_to_vmem [thread:$0]  %s29, 8192, %s31, [#allocation3], 256, 256, 16
    $region5: #{tpu_custom_call.1} parent=1 // pred_fallthru
      _
    // Predicated region
    $region6: #{tpu_custom_call.1} parent=1 // pred_check
      _
    $region7: #{tpu_custom_call.1} parent=1 // pred_check_branch
      %38 = sbr.rel (0) target = $region9
    $region8: #{tpu_custom_call.1} parent=1 // pred_region
      %40 = vsyncadd [#allocation6], 0
      %s41 = sshll.u32 %s1, 4
      %s42 = int_to_ptr.hbm [resolvable:$true] %s41
      %s43 = sshll.u32 [#allocation5], 4
      %s44 = int_to_ptr.vmem [resolvable:$true] %s43
      %49 = dma.hbm_to_vmem [thread:$0]  %s42, 8192, %s44, [#allocation6], 256, 256, 16
    $region9: #{tpu_custom_call.1} parent=1 // pred_fallthru
      _
    // Predicated region
    $region10: #{tpu_custom_call.1} parent=1 // pred_check
      _
    $region11: #{tpu_custom_call.1} parent=1 // pred_check_branch
      %51 = sbr.rel (0) target = $region13
    $region12: #{tpu_custom_call.1} parent=1 // pred_region
      %53 = vsyncadd [#allocation6], 0
      %s54 = sshll.u32 %s2, 4
      %s55 = int_to_ptr.hbm [resolvable:$true] %s54
      %s56 = sshll.u32 [#allocation7], 4
      %s57 = int_to_ptr.vmem [resolvable:$true] %s56
      %62 = dma.hbm_to_vmem [thread:$0]  %s55, 8192, %s57, [#allocation6], 256, 256, 16
    $region13: #{tpu_custom_call.1} parent=1 // pred_fallthru
      _
    // Predicated region
    $region14: #{tpu_custom_call.1} parent=1 // pred_check
      _
    $region15: #{tpu_custom_call.1} parent=1 // pred_check_branch
      %64 = sbr.rel (0) target = $region17
    $region16: #{tpu_custom_call.1} parent=1 // pred_region
      _
    $region17: #{tpu_custom_call.1} parent=1 // pred_fallthru
      _
    // Predicated region
    $region18: #{tpu_custom_call.1} parent=1 // pred_check
      _
    $region19: #{tpu_custom_call.1} parent=1 // pred_check_branch
      %66 = sbr.rel (0) target = $region21
    $region20: #{tpu_custom_call.1} parent=1 // pred_region
      _
    $region21: #{tpu_custom_call.1} parent=1 // pred_fallthru
      _
    // Predicated region
    $region22: #{tpu_custom_call.1} parent=1 // pred_check
      _
    $region23: #{tpu_custom_call.1} parent=1 // pred_check_branch
      %68 = sbr.rel (0) target = $region25
    $region24: #{tpu_custom_call.1} parent=1 // pred_region
      %70 = vsyncadd [#allocation9], 0
      %s72 = sshll.u32 %s5, 4
      %s73 = int_to_ptr.hbm [resolvable:$true] %s72
      %s74 = sshll.u32 [#allocation8], 4
      %s75 = int_to_ptr.vmem [resolvable:$true] %s74
      %77 = dma.hbm_to_vmem [thread:$0]  %s73, 64, %s75, [#allocation9]
    $region25: #{tpu_custom_call.1} parent=1 // pred_fallthru
      _
    // Predicated region
    $region26: #{tpu_custom_call.1} parent=1 // pred_check
      _
    $region27: #{tpu_custom_call.1} parent=1 // pred_check_branch
      %79 = sbr.rel (0) target = $region29
    $region28: #{tpu_custom_call.1} parent=1 // pred_region
      _
    $region29: #{tpu_custom_call.1} parent=1 // pred_fallthru
      _
    // Predicated region
    $region30: #{tpu_custom_call.1} parent=1 // pred_check
      _
    $region31: #{tpu_custom_call.1} parent=1 // pred_check_branch
      %81 = sbr.rel (0) target = $region33
    $region32: #{tpu_custom_call.1} parent=1 // pred_region
      %83 = vsyncadd [#allocation9], 0
      %s84 = sshll.u32 %s7, 4
      %s85 = int_to_ptr.hbm [resolvable:$true] %s84
      %s86 = sshll.u32 [#allocation10], 4
      %s87 = int_to_ptr.vmem [resolvable:$true] %s86
      %92 = dma.hbm_to_vmem [thread:$0]  %s85, 8192, %s87, [#allocation9], 256, 256, 16
    $region33: #{tpu_custom_call.1} parent=1 // pred_fallthru
      _
    // Predicated region
    $region34: #{tpu_custom_call.1} parent=1 // pred_check
      _
    $region35: #{tpu_custom_call.1} parent=1 // pred_check_branch
      %94 = sbr.rel (0) target = $region37
    $region36: #{tpu_custom_call.1} parent=1 // pred_region
      _
    $region37: #{tpu_custom_call.1} parent=1 // pred_fallthru
      _
    // Predicated region
    $region38: #{tpu_custom_call.1} parent=1 // pred_check
      _
    $region39: #{tpu_custom_call.1} parent=1 // pred_check_branch
      %96 = sbr.rel (0) target = $region41
    $region40: #{tpu_custom_call.1} parent=1 // pred_region
      %98 = vsyncadd [#allocation12], 0
      %s99 = sshll.u32 %s9, 4
      %s100 = int_to_ptr.hbm [resolvable:$true] %s99
      %s101 = sshll.u32 [#allocation11], 4
      %s102 = int_to_ptr.vmem [resolvable:$true] %s101
      %107 = dma.hbm_to_vmem [thread:$0]  %s100, 8192, %s102, [#allocation12], 256, 256, 16
    $region41: #{tpu_custom_call.1} parent=1 // pred_fallthru
      _
    // Predicated region
    $region42: #{tpu_custom_call.1} parent=1 // pred_check
      _
    $region43: #{tpu_custom_call.1} parent=1 // pred_check_branch
      %109 = sbr.rel (0) target = $region45
    $region44: #{tpu_custom_call.1} parent=1 // pred_region
      _
    $region45: #{tpu_custom_call.1} parent=1 // pred_fallthru
      _
    // Predicated region
    $region46: #{tpu_custom_call.1} parent=1 // pred_check
      _
    $region47: #{tpu_custom_call.1} parent=1 // pred_check_branch
      %111 = sbr.rel (0) target = $region49
    $region48: #{tpu_custom_call.1} parent=1 // pred_region
      %113 = dma.done [#allocation3], 8192
    $region49: #{tpu_custom_call.1} parent=1 // pred_fallthru
      _
    // Predicated region
    $region50: #{tpu_custom_call.1} parent=1 // pred_check
      _
    $region51: #{tpu_custom_call.1} parent=1 // pred_check_branch
      %115 = sbr.rel (0) target = $region53
    $region52: #{tpu_custom_call.1} parent=1 // pred_region
      %117 = dma.done [#allocation6], 8192
    $region53: #{tpu_custom_call.1} parent=1 // pred_fallthru
      _
    // Predicated region
    $region54: #{tpu_custom_call.1} parent=1 // pred_check
      _
    $region55: #{tpu_custom_call.1} parent=1 // pred_check_branch
      %119 = sbr.rel (0) target = $region57
    $region56: #{tpu_custom_call.1} parent=1 // pred_region
      %121 = dma.done [#allocation6], 8192
    $region57: #{tpu_custom_call.1} parent=1 // pred_fallthru
      _
    // Predicated region
    $region58: #{tpu_custom_call.1} parent=1 // pred_check
      _
    $region59: #{tpu_custom_call.1} parent=1 // pred_check_branch
      %123 = sbr.rel (0) target = $region61
    $region60: #{tpu_custom_call.1} parent=1 // pred_region
      %125 = dma.done [#allocation9], 64
    $region61: #{tpu_custom_call.1} parent=1 // pred_fallthru
      _
    // Predicated region
    $region62: #{tpu_custom_call.1} parent=1 // pred_check
      _
    $region63: #{tpu_custom_call.1} parent=1 // pred_check_branch
      %127 = sbr.rel (0) target = $region65
    $region64: #{tpu_custom_call.1} parent=1 // pred_region
      %129 = dma.done [#allocation9], 8192
    $region65: #{tpu_custom_call.1} parent=1 // pred_fallthru
      _
    // Predicated region
    $region66: #{tpu_custom_call.1} parent=1 // pred_check
      _
    $region67: #{tpu_custom_call.1} parent=1 // pred_check_branch
      %131 = sbr.rel (0) target = $region69
    $region68: #{tpu_custom_call.1} parent=1 // pred_region
      %133 = dma.done [#allocation12], 8192
    $region69: #{tpu_custom_call.1} parent=1 // pred_fallthru
      _
    %v134 = vld [vmem:[#allocation2] sm:$0xff]
    %v135 = vld [vmem:[#allocation2 + $0x8] sm:$0xff]
    %v136 = vld [vmem:[#allocation2 + $0x10] sm:$0xff]
    %v137 = vld [vmem:[#allocation2 + $0x18] sm:$0xff]
    %v138 = vld [vmem:[#allocation2 + $0x20] sm:$0xff]
    %v139 = vld [vmem:[#allocation2 + $0x28] sm:$0xff]
    %v140 = vld [vmem:[#allocation2 + $0x30] sm:$0xff]
    %v141 = vld [vmem:[#allocation2 + $0x38] sm:$0xff]
    %v142 = vld [vmem:[#allocation2 + $0x40] sm:$0xff]
    %v143 = vld [vmem:[#allocation2 + $0x48] sm:$0xff]
    %v144 = vld [vmem:[#allocation2 + $0x50] sm:$0xff]
    %v145 = vld [vmem:[#allocation2 + $0x58] sm:$0xff]
    %v146 = vld [vmem:[#allocation2 + $0x60] sm:$0xff]
    %v147 = vld [vmem:[#allocation2 + $0x68] sm:$0xff]
    %v148 = vld [vmem:[#allocation2 + $0x70] sm:$0xff]
    %v149 = vld [vmem:[#allocation2 + $0x78] sm:$0xff]
    %v150 = vld [vmem:[#allocation2 + $0x80] sm:$0xff]
    %v151 = vld [vmem:[#allocation2 + $0x88] sm:$0xff]
    %v152 = vld [vmem:[#allocation2 + $0x90] sm:$0xff]
    %v153 = vld [vmem:[#allocation2 + $0x98] sm:$0xff]
    %v154 = vld [vmem:[#allocation2 + $0xa0] sm:$0xff]
    %v155 = vld [vmem:[#allocation2 + $0xa8] sm:$0xff]
    %v156 = vld [vmem:[#allocation2 + $0xb0] sm:$0xff]
    %v157 = vld [vmem:[#allocation2 + $0xb8] sm:$0xff]
    %v158 = vld [vmem:[#allocation2 + $0xc0] sm:$0xff]
    %v159 = vld [vmem:[#allocation2 + $0xc8] sm:$0xff]
    %v160 = vld [vmem:[#allocation2 + $0xd0] sm:$0xff]
    %v161 = vld [vmem:[#allocation2 + $0xd8] sm:$0xff]
    %v162 = vld [vmem:[#allocation2 + $0xe0] sm:$0xff]
    %v163 = vld [vmem:[#allocation2 + $0xe8] sm:$0xff]
    %v164 = vld [vmem:[#allocation2 + $0xf0] sm:$0xff]
    %v165 = vld [vmem:[#allocation2 + $0xf8] sm:$0xff]
    %v166 = vld [vmem:[#allocation2 + $0x100] sm:$0xff]
    %v167 = vld [vmem:[#allocation2 + $0x108] sm:$0xff]
    %v168 = vld [vmem:[#allocation2 + $0x110] sm:$0xff]
    %v169 = vld [vmem:[#allocation2 + $0x118] sm:$0xff]
    %v170 = vld [vmem:[#allocation2 + $0x120] sm:$0xff]
    %v171 = vld [vmem:[#allocation2 + $0x128] sm:$0xff]
    %v172 = vld [vmem:[#allocation2 + $0x130] sm:$0xff]
    %v173 = vld [vmem:[#allocation2 + $0x138] sm:$0xff]
    %v174 = vld [vmem:[#allocation2 + $0x140] sm:$0xff]
    %v175 = vld [vmem:[#allocation2 + $0x148] sm:$0xff]
    %v176 = vld [vmem:[#allocation2 + $0x150] sm:$0xff]
    %v177 = vld [vmem:[#allocation2 + $0x158] sm:$0xff]
    %v178 = vld [vmem:[#allocation2 + $0x160] sm:$0xff]
    %v179 = vld [vmem:[#allocation2 + $0x168] sm:$0xff]
    %v180 = vld [vmem:[#allocation2 + $0x170] sm:$0xff]
    %v181 = vld [vmem:[#allocation2 + $0x178] sm:$0xff]
    %v182 = vld [vmem:[#allocation2 + $0x180] sm:$0xff]
    %v183 = vld [vmem:[#allocation2 + $0x188] sm:$0xff]
    %v184 = vld [vmem:[#allocation2 + $0x190] sm:$0xff]
    %v185 = vld [vmem:[#allocation2 + $0x198] sm:$0xff]
    %v186 = vld [vmem:[#allocation2 + $0x1a0] sm:$0xff]
    %v187 = vld [vmem:[#allocation2 + $0x1a8] sm:$0xff]
    %v188 = vld [vmem:[#allocation2 + $0x1b0] sm:$0xff]
    %v189 = vld [vmem:[#allocation2 + $0x1b8] sm:$0xff]
    %v190 = vld [vmem:[#allocation2 + $0x1c0] sm:$0xff]
    %v191 = vld [vmem:[#allocation2 + $0x1c8] sm:$0xff]
    %v192 = vld [vmem:[#allocation2 + $0x1d0] sm:$0xff]
    %v193 = vld [vmem:[#allocation2 + $0x1d8] sm:$0xff]
    %v194 = vld [vmem:[#allocation2 + $0x1e0] sm:$0xff]
    %v195 = vld [vmem:[#allocation2 + $0x1e8] sm:$0xff]
    %v196 = vld [vmem:[#allocation2 + $0x1f0] sm:$0xff]
    %v197 = vld [vmem:[#allocation2 + $0x1f8] sm:$0xff]
    %v198 = vld [vmem:[%s3] ss:$2 sm:$0x3]
    %v200 = vperm.slane %v198, 0
    %v201 = vperm.slane %v198, 1
    %v204 = vmul.f32 %v134, %v200
    %v205 = vmul.f32 %v135, %v201
    %v206 = vmul.f32 %v136, %v200
    %v207 = vmul.f32 %v137, %v201
    %v208 = vmul.f32 %v138, %v200
    %v209 = vmul.f32 %v139, %v201
    %v210 = vmul.f32 %v140, %v200
    %v211 = vmul.f32 %v141, %v201
    %v212 = vmul.f32 %v142, %v200
    %v213 = vmul.f32 %v143, %v201
    %v214 = vmul.f32 %v144, %v200
    %v215 = vmul.f32 %v145, %v201
    %v216 = vmul.f32 %v146, %v200
    %v217 = vmul.f32 %v147, %v201
    %v218 = vmul.f32 %v148, %v200
    %v219 = vmul.f32 %v149, %v201
    %v220 = vmul.f32 %v150, %v200
    %v221 = vmul.f32 %v151, %v201
    %v222 = vmul.f32 %v152, %v200
    %v223 = vmul.f32 %v153, %v201
    %v224 = vmul.f32 %v154, %v200
    %v225 = vmul.f32 %v155, %v201
    %v226 = vmul.f32 %v156, %v200
    %v227 = vmul.f32 %v157, %v201
    %v228 = vmul.f32 %v158, %v200
    %v229 = vmul.f32 %v159, %v201
    %v230 = vmul.f32 %v160, %v200
    %v231 = vmul.f32 %v161, %v201
    %v232 = vmul.f32 %v162, %v200
    %v233 = vmul.f32 %v163, %v201
    %v234 = vmul.f32 %v164, %v200
    %v235 = vmul.f32 %v165, %v201
    %v236 = vmul.f32 %v166, %v200
    %v237 = vmul.f32 %v167, %v201
    %v238 = vmul.f32 %v168, %v200
    %v239 = vmul.f32 %v169, %v201
    %v240 = vmul.f32 %v170, %v200
    %v241 = vmul.f32 %v171, %v201
    %v242 = vmul.f32 %v172, %v200
    %v243 = vmul.f32 %v173, %v201
    %v244 = vmul.f32 %v174, %v200
    %v245 = vmul.f32 %v175, %v201
    %v246 = vmul.f32 %v176, %v200
    %v247 = vmul.f32 %v177, %v201
    %v248 = vmul.f32 %v178, %v200
    %v249 = vmul.f32 %v179, %v201
    %v250 = vmul.f32 %v180, %v200
    %v251 = vmul.f32 %v181, %v201
    %v252 = vmul.f32 %v182, %v200
    %v253 = vmul.f32 %v183, %v201
    %v254 = vmul.f32 %v184, %v200
    %v255 = vmul.f32 %v185, %v201
    %v256 = vmul.f32 %v186, %v200
    %v257 = vmul.f32 %v187, %v201
    %v258 = vmul.f32 %v188, %v200
    %v259 = vmul.f32 %v189, %v201
    %v260 = vmul.f32 %v190, %v200
    %v261 = vmul.f32 %v191, %v201
    %v262 = vmul.f32 %v192, %v200
    %v263 = vmul.f32 %v193, %v201
    %v264 = vmul.f32 %v194, %v200
    %v265 = vmul.f32 %v195, %v201
    %v266 = vmul.f32 %v196, %v200
    %v267 = vmul.f32 %v197, %v201
    %v268 = vadd.f32 %v204, %v205
    %269 = vadd.xlane.f32.xlu0 %v268
    %v270 = vpop.xlane.xlu0 %269
    %v271 = vadd.f32 %v206, %v207
    %272 = vadd.xlane.f32.xlu0 %v271
    %v273 = vpop.xlane.xlu0 %272
    %v274 = vadd.f32 %v208, %v209
    %275 = vadd.xlane.f32.xlu0 %v274
    %v276 = vpop.xlane.xlu0 %275
    %v277 = vadd.f32 %v210, %v211
    %278 = vadd.xlane.f32.xlu0 %v277
    %v279 = vpop.xlane.xlu0 %278
    %v280 = vadd.f32 %v212, %v213
    %281 = vadd.xlane.f32.xlu0 %v280
    %v282 = vpop.xlane.xlu0 %281
    %v283 = vadd.f32 %v214, %v215
    %284 = vadd.xlane.f32.xlu0 %v283
    %v285 = vpop.xlane.xlu0 %284
    %v286 = vadd.f32 %v216, %v217
    %287 = vadd.xlane.f32.xlu0 %v286
    %v288 = vpop.xlane.xlu0 %287
    %v289 = vadd.f32 %v218, %v219
    %290 = vadd.xlane.f32.xlu0 %v289
    %v291 = vpop.xlane.xlu0 %290
    %v292 = vadd.f32 %v220, %v221
    %293 = vadd.xlane.f32.xlu0 %v292
    %v294 = vpop.xlane.xlu0 %293
    %v295 = vadd.f32 %v222, %v223
    %296 = vadd.xlane.f32.xlu0 %v295
    %v297 = vpop.xlane.xlu0 %296
    %v298 = vadd.f32 %v224, %v225
    %299 = vadd.xlane.f32.xlu0 %v298
    %v300 = vpop.xlane.xlu0 %299
    %v301 = vadd.f32 %v226, %v227
    %302 = vadd.xlane.f32.xlu0 %v301
    %v303 = vpop.xlane.xlu0 %302
    %v304 = vadd.f32 %v228, %v229
    %305 = vadd.xlane.f32.xlu0 %v304
    %v306 = vpop.xlane.xlu0 %305
    %v307 = vadd.f32 %v230, %v231
    %308 = vadd.xlane.f32.xlu0 %v307
    %v309 = vpop.xlane.xlu0 %308
    %v310 = vadd.f32 %v232, %v233
    %311 = vadd.xlane.f32.xlu0 %v310
    %v312 = vpop.xlane.xlu0 %311
    %v313 = vadd.f32 %v234, %v235
    %314 = vadd.xlane.f32.xlu0 %v313
    %v315 = vpop.xlane.xlu0 %314
    %v316 = vadd.f32 %v236, %v237
    %317 = vadd.xlane.f32.xlu0 %v316
    %v318 = vpop.xlane.xlu0 %317
    %v319 = vadd.f32 %v238, %v239
    %320 = vadd.xlane.f32.xlu0 %v319
    %v321 = vpop.xlane.xlu0 %320
    %v322 = vadd.f32 %v240, %v241
    %323 = vadd.xlane.f32.xlu0 %v322
    %v324 = vpop.xlane.xlu0 %323
    %v325 = vadd.f32 %v242, %v243
    %326 = vadd.xlane.f32.xlu0 %v325
    %v327 = vpop.xlane.xlu0 %326
    %v328 = vadd.f32 %v244, %v245
    %329 = vadd.xlane.f32.xlu0 %v328
    %v330 = vpop.xlane.xlu0 %329
    %v331 = vadd.f32 %v246, %v247
    %332 = vadd.xlane.f32.xlu0 %v331
    %v333 = vpop.xlane.xlu0 %332
    %v334 = vadd.f32 %v248, %v249
    %335 = vadd.xlane.f32.xlu0 %v334
    %v336 = vpop.xlane.xlu0 %335
    %v337 = vadd.f32 %v250, %v251
    %338 = vadd.xlane.f32.xlu0 %v337
    %v339 = vpop.xlane.xlu0 %338
    %v340 = vadd.f32 %v252, %v253
    %341 = vadd.xlane.f32.xlu0 %v340
    %v342 = vpop.xlane.xlu0 %341
    %v343 = vadd.f32 %v254, %v255
    %344 = vadd.xlane.f32.xlu0 %v343
    %v345 = vpop.xlane.xlu0 %344
    %v346 = vadd.f32 %v256, %v257
    %347 = vadd.xlane.f32.xlu0 %v346
    %v348 = vpop.xlane.xlu0 %347
    %v349 = vadd.f32 %v258, %v259
    %350 = vadd.xlane.f32.xlu0 %v349
    %v351 = vpop.xlane.xlu0 %350
    %v352 = vadd.f32 %v260, %v261
    %353 = vadd.xlane.f32.xlu0 %v352
    %v354 = vpop.xlane.xlu0 %353
    %v355 = vadd.f32 %v262, %v263
    %356 = vadd.xlane.f32.xlu0 %v355
    %v357 = vpop.xlane.xlu0 %356
    %v358 = vadd.f32 %v264, %v265
    %359 = vadd.xlane.f32.xlu0 %v358
    %v360 = vpop.xlane.xlu0 %359
    %v361 = vadd.f32 %v266, %v267
    %362 = vadd.xlane.f32.xlu0 %v361
    %v363 = vpop.xlane.xlu0 %362
    %v364 = vld [vmem:[%s4] sm:$0x1]
    %v365 = vperm.slane %v364, 0
    %v366 = vadd.f32 %v270, %v365
    %v367 = vadd.f32 %v273, %v365
    %v368 = vadd.f32 %v276, %v365
    %v369 = vadd.f32 %v279, %v365
    %v370 = vadd.f32 %v282, %v365
    %v371 = vadd.f32 %v285, %v365
    %v372 = vadd.f32 %v288, %v365
    %v373 = vadd.f32 %v291, %v365
    %v374 = vadd.f32 %v294, %v365
    %v375 = vadd.f32 %v297, %v365
    %v376 = vadd.f32 %v300, %v365
    %v377 = vadd.f32 %v303, %v365
    %v378 = vadd.f32 %v306, %v365
    %v379 = vadd.f32 %v309, %v365
    %v380 = vadd.f32 %v312, %v365
    %v381 = vadd.f32 %v315, %v365
    %v382 = vadd.f32 %v318, %v365
    %v383 = vadd.f32 %v321, %v365
    %v384 = vadd.f32 %v324, %v365
    %v385 = vadd.f32 %v327, %v365
    %v386 = vadd.f32 %v330, %v365
    %v387 = vadd.f32 %v333, %v365
    %v388 = vadd.f32 %v336, %v365
    %v389 = vadd.f32 %v339, %v365
    %v390 = vadd.f32 %v342, %v365
    %v391 = vadd.f32 %v345, %v365
    %v392 = vadd.f32 %v348, %v365
    %v393 = vadd.f32 %v351, %v365
    %v394 = vadd.f32 %v354, %v365
    %v395 = vadd.f32 %v357, %v365
    %v396 = vadd.f32 %v360, %v365
    %v397 = vadd.f32 %v363, %v365
    %v398 = vtanh.pop %v366
    %v399 = vtanh.pop %v367
    %v400 = vtanh.pop %v368
    %v401 = vtanh.pop %v369
    %v402 = vtanh.pop %v370
    %v403 = vtanh.pop %v371
    %v404 = vtanh.pop %v372
    %v405 = vtanh.pop %v373
    %v406 = vtanh.pop %v374
    %v407 = vtanh.pop %v375
    %v408 = vtanh.pop %v376
    %v409 = vtanh.pop %v377
    %v410 = vtanh.pop %v378
    %v411 = vtanh.pop %v379
    %v412 = vtanh.pop %v380
    %v413 = vtanh.pop %v381
    %v414 = vtanh.pop %v382
    %v415 = vtanh.pop %v383
    %v416 = vtanh.pop %v384
    %v417 = vtanh.pop %v385
    %v418 = vtanh.pop %v386
    %v419 = vtanh.pop %v387
    %v420 = vtanh.pop %v388
    %v421 = vtanh.pop %v389
    %v422 = vtanh.pop %v390
    %v423 = vtanh.pop %v391
    %v424 = vtanh.pop %v392
    %v425 = vtanh.pop %v393
    %v426 = vtanh.pop %v394
    %v427 = vtanh.pop %v395
    %v428 = vtanh.pop %v396
    %v429 = vtanh.pop %v397
    %s430 = scalar_lea.vmem %s3, 1
    %v431 = vld [vmem:[%s430] ss:$2 sm:$0x3]
    %v433 = vperm.slane %v431, 0
    %v434 = vperm.slane %v431, 1
    %v437 = vmul.f32 %v134, %v433
    %v438 = vmul.f32 %v135, %v434
    %v439 = vmul.f32 %v136, %v433
    %v440 = vmul.f32 %v137, %v434
    %v441 = vmul.f32 %v138, %v433
    %v442 = vmul.f32 %v139, %v434
    %v443 = vmul.f32 %v140, %v433
    %v444 = vmul.f32 %v141, %v434
    %v445 = vmul.f32 %v142, %v433
    %v446 = vmul.f32 %v143, %v434
    %v447 = vmul.f32 %v144, %v433
    %v448 = vmul.f32 %v145, %v434
    %v449 = vmul.f32 %v146, %v433
    %v450 = vmul.f32 %v147, %v434
    %v451 = vmul.f32 %v148, %v433
    %v452 = vmul.f32 %v149, %v434
    %v453 = vmul.f32 %v150, %v433
    %v454 = vmul.f32 %v151, %v434
    %v455 = vmul.f32 %v152, %v433
    %v456 = vmul.f32 %v153, %v434
    %v457 = vmul.f32 %v154, %v433
    %v458 = vmul.f32 %v155, %v434
    %v459 = vmul.f32 %v156, %v433
    %v460 = vmul.f32 %v157, %v434
    %v461 = vmul.f32 %v158, %v433
    %v462 = vmul.f32 %v159, %v434
    %v463 = vmul.f32 %v160, %v433
    %v464 = vmul.f32 %v161, %v434
    %v465 = vmul.f32 %v162, %v433
    %v466 = vmul.f32 %v163, %v434
    %v467 = vmul.f32 %v164, %v433
    %v468 = vmul.f32 %v165, %v434
    %v469 = vmul.f32 %v166, %v433
    %v470 = vmul.f32 %v167, %v434
    %v471 = vmul.f32 %v168, %v433
    %v472 = vmul.f32 %v169, %v434
    %v473 = vmul.f32 %v170, %v433
    %v474 = vmul.f32 %v171, %v434
    %v475 = vmul.f32 %v172, %v433
    %v476 = vmul.f32 %v173, %v434
    %v477 = vmul.f32 %v174, %v433
    %v478 = vmul.f32 %v175, %v434
    %v479 = vmul.f32 %v176, %v433
    %v480 = vmul.f32 %v177, %v434
    %v481 = vmul.f32 %v178, %v433
    %v482 = vmul.f32 %v179, %v434
    %v483 = vmul.f32 %v180, %v433
    %v484 = vmul.f32 %v181, %v434
    %v485 = vmul.f32 %v182, %v433
    %v486 = vmul.f32 %v183, %v434
    %v487 = vmul.f32 %v184, %v433
    %v488 = vmul.f32 %v185, %v434
    %v489 = vmul.f32 %v186, %v433
    %v490 = vmul.f32 %v187, %v434
    %v491 = vmul.f32 %v188, %v433
    %v492 = vmul.f32 %v189, %v434
    %v493 = vmul.f32 %v190, %v433
    %v494 = vmul.f32 %v191, %v434
    %v495 = vmul.f32 %v192, %v433
    %v496 = vmul.f32 %v193, %v434
    %v497 = vmul.f32 %v194, %v433
    %v498 = vmul.f32 %v195, %v434
    %v499 = vmul.f32 %v196, %v433
    %v500 = vmul.f32 %v197, %v434
    %v501 = vadd.f32 %v437, %v438
    %502 = vadd.xlane.f32.xlu0 %v501
    %v503 = vpop.xlane.xlu0 %502
    %v504 = vadd.f32 %v439, %v440
    %505 = vadd.xlane.f32.xlu0 %v504
    %v506 = vpop.xlane.xlu0 %505
    %v507 = vadd.f32 %v441, %v442
    %508 = vadd.xlane.f32.xlu0 %v507
    %v509 = vpop.xlane.xlu0 %508
    %v510 = vadd.f32 %v443, %v444
    %511 = vadd.xlane.f32.xlu0 %v510
    %v512 = vpop.xlane.xlu0 %511
    %v513 = vadd.f32 %v445, %v446
    %514 = vadd.xlane.f32.xlu0 %v513
    %v515 = vpop.xlane.xlu0 %514
    %v516 = vadd.f32 %v447, %v448
    %517 = vadd.xlane.f32.xlu0 %v516
    %v518 = vpop.xlane.xlu0 %517
    %v519 = vadd.f32 %v449, %v450
    %520 = vadd.xlane.f32.xlu0 %v519
    %v521 = vpop.xlane.xlu0 %520
    %v522 = vadd.f32 %v451, %v452
    %523 = vadd.xlane.f32.xlu0 %v522
    %v524 = vpop.xlane.xlu0 %523
    %v525 = vadd.f32 %v453, %v454
    %526 = vadd.xlane.f32.xlu0 %v525
    %v527 = vpop.xlane.xlu0 %526
    %v528 = vadd.f32 %v455, %v456
    %529 = vadd.xlane.f32.xlu0 %v528
    %v530 = vpop.xlane.xlu0 %529
    %v531 = vadd.f32 %v457, %v458
    %532 = vadd.xlane.f32.xlu0 %v531
    %v533 = vpop.xlane.xlu0 %532
    %v534 = vadd.f32 %v459, %v460
    %535 = vadd.xlane.f32.xlu0 %v534
    %v536 = vpop.xlane.xlu0 %535
    %v537 = vadd.f32 %v461, %v462
    %538 = vadd.xlane.f32.xlu0 %v537
    %v539 = vpop.xlane.xlu0 %538
    %v540 = vadd.f32 %v463, %v464
    %541 = vadd.xlane.f32.xlu0 %v540
    %v542 = vpop.xlane.xlu0 %541
    %v543 = vadd.f32 %v465, %v466
    %544 = vadd.xlane.f32.xlu0 %v543
    %v545 = vpop.xlane.xlu0 %544
    %v546 = vadd.f32 %v467, %v468
    %547 = vadd.xlane.f32.xlu0 %v546
    %v548 = vpop.xlane.xlu0 %547
    %v549 = vadd.f32 %v469, %v470
    %550 = vadd.xlane.f32.xlu0 %v549
    %v551 = vpop.xlane.xlu0 %550
    %v552 = vadd.f32 %v471, %v472
    %553 = vadd.xlane.f32.xlu0 %v552
    %v554 = vpop.xlane.xlu0 %553
    %v555 = vadd.f32 %v473, %v474
    %556 = vadd.xlane.f32.xlu0 %v555
    %v557 = vpop.xlane.xlu0 %556
    %v558 = vadd.f32 %v475, %v476
    %559 = vadd.xlane.f32.xlu0 %v558
    %v560 = vpop.xlane.xlu0 %559
    %v561 = vadd.f32 %v477, %v478
    %562 = vadd.xlane.f32.xlu0 %v561
    %v563 = vpop.xlane.xlu0 %562
    %v564 = vadd.f32 %v479, %v480
    %565 = vadd.xlane.f32.xlu0 %v564
    %v566 = vpop.xlane.xlu0 %565
    %v567 = vadd.f32 %v481, %v482
    %568 = vadd.xlane.f32.xlu0 %v567
    %v569 = vpop.xlane.xlu0 %568
    %v570 = vadd.f32 %v483, %v484
    %571 = vadd.xlane.f32.xlu0 %v570
    %v572 = vpop.xlane.xlu0 %571
    %v573 = vadd.f32 %v485, %v486
    %574 = vadd.xlane.f32.xlu0 %v573
    %v575 = vpop.xlane.xlu0 %574
    %v576 = vadd.f32 %v487, %v488
    %577 = vadd.xlane.f32.xlu0 %v576
    %v578 = vpop.xlane.xlu0 %577
    %v579 = vadd.f32 %v489, %v490
    %580 = vadd.xlane.f32.xlu0 %v579
    %v581 = vpop.xlane.xlu0 %580
    %v582 = vadd.f32 %v491, %v492
    %583 = vadd.xlane.f32.xlu0 %v582
    %v584 = vpop.xlane.xlu0 %583
    %v585 = vadd.f32 %v493, %v494
    %586 = vadd.xlane.f32.xlu0 %v585
    %v587 = vpop.xlane.xlu0 %586
    %v588 = vadd.f32 %v495, %v496
    %589 = vadd.xlane.f32.xlu0 %v588
    %v590 = vpop.xlane.xlu0 %589
    %v591 = vadd.f32 %v497, %v498
    %592 = vadd.xlane.f32.xlu0 %v591
    %v593 = vpop.xlane.xlu0 %592
    %v594 = vadd.f32 %v499, %v500
    %595 = vadd.xlane.f32.xlu0 %v594
    %v596 = vpop.xlane.xlu0 %595
    %v597 = vld [vmem:[%s4 + $0x1] sm:$0x1]
    %v598 = vperm.slane %v597, 0
    %v599 = vadd.f32 %v503, %v598
    %v600 = vadd.f32 %v506, %v598
    %v601 = vadd.f32 %v509, %v598
    %v602 = vadd.f32 %v512, %v598
    %v603 = vadd.f32 %v515, %v598
    %v604 = vadd.f32 %v518, %v598
    %v605 = vadd.f32 %v521, %v598
    %v606 = vadd.f32 %v524, %v598
    %v607 = vadd.f32 %v527, %v598
    %v608 = vadd.f32 %v530, %v598
    %v609 = vadd.f32 %v533, %v598
    %v610 = vadd.f32 %v536, %v598
    %v611 = vadd.f32 %v539, %v598
    %v612 = vadd.f32 %v542, %v598
    %v613 = vadd.f32 %v545, %v598
    %v614 = vadd.f32 %v548, %v598
    %v615 = vadd.f32 %v551, %v598
    %v616 = vadd.f32 %v554, %v598
    %v617 = vadd.f32 %v557, %v598
    %v618 = vadd.f32 %v560, %v598
    %v619 = vadd.f32 %v563, %v598
    %v620 = vadd.f32 %v566, %v598
    %v621 = vadd.f32 %v569, %v598
    %v622 = vadd.f32 %v572, %v598
    %v623 = vadd.f32 %v575, %v598
    %v624 = vadd.f32 %v578, %v598
    %v625 = vadd.f32 %v581, %v598
    %v626 = vadd.f32 %v584, %v598
    %v627 = vadd.f32 %v587, %v598
    %v628 = vadd.f32 %v590, %v598
    %v629 = vadd.f32 %v593, %v598
    %v630 = vadd.f32 %v596, %v598
    %v631 = vtanh.pop %v599
    %v632 = vtanh.pop %v600
    %v633 = vtanh.pop %v601
    %v634 = vtanh.pop %v602
    %v635 = vtanh.pop %v603
    %v636 = vtanh.pop %v604
    %v637 = vtanh.pop %v605
    %v638 = vtanh.pop %v606
    %v639 = vtanh.pop %v607
    %v640 = vtanh.pop %v608
    %v641 = vtanh.pop %v609
    %v642 = vtanh.pop %v610
    %v643 = vtanh.pop %v611
    %v644 = vtanh.pop %v612
    %v645 = vtanh.pop %v613
    %v646 = vtanh.pop %v614
    %v647 = vtanh.pop %v615
    %v648 = vtanh.pop %v616
    %v649 = vtanh.pop %v617
    %v650 = vtanh.pop %v618
    %v651 = vtanh.pop %v619
    %v652 = vtanh.pop %v620
    %v653 = vtanh.pop %v621
    %v654 = vtanh.pop %v622
    %v655 = vtanh.pop %v623
    %v656 = vtanh.pop %v624
    %v657 = vtanh.pop %v625
    %v658 = vtanh.pop %v626
    %v659 = vtanh.pop %v627
    %v660 = vtanh.pop %v628
    %v661 = vtanh.pop %v629
    %v662 = vtanh.pop %v630
    %v663 = vld [vmem:[#allocation5] sm:$0xff]
    %v664 = vld [vmem:[#allocation5 + $0x8] sm:$0xff]
    %v665 = vld [vmem:[#allocation5 + $0x10] sm:$0xff]
    %v666 = vld [vmem:[#allocation5 + $0x18] sm:$0xff]
    %v667 = vld [vmem:[#allocation5 + $0x20] sm:$0xff]
    %v668 = vld [vmem:[#allocation5 + $0x28] sm:$0xff]
    %v669 = vld [vmem:[#allocation5 + $0x30] sm:$0xff]
    %v670 = vld [vmem:[#allocation5 + $0x38] sm:$0xff]
    %v671 = vld [vmem:[#allocation5 + $0x40] sm:$0xff]
    %v672 = vld [vmem:[#allocation5 + $0x48] sm:$0xff]
    %v673 = vld [vmem:[#allocation5 + $0x50] sm:$0xff]
    %v674 = vld [vmem:[#allocation5 + $0x58] sm:$0xff]
    %v675 = vld [vmem:[#allocation5 + $0x60] sm:$0xff]
    %v676 = vld [vmem:[#allocation5 + $0x68] sm:$0xff]
    %v677 = vld [vmem:[#allocation5 + $0x70] sm:$0xff]
    %v678 = vld [vmem:[#allocation5 + $0x78] sm:$0xff]
    %v679 = vld [vmem:[#allocation5 + $0x80] sm:$0xff]
    %v680 = vld [vmem:[#allocation5 + $0x88] sm:$0xff]
    %v681 = vld [vmem:[#allocation5 + $0x90] sm:$0xff]
    %v682 = vld [vmem:[#allocation5 + $0x98] sm:$0xff]
    %v683 = vld [vmem:[#allocation5 + $0xa0] sm:$0xff]
    %v684 = vld [vmem:[#allocation5 + $0xa8] sm:$0xff]
    %v685 = vld [vmem:[#allocation5 + $0xb0] sm:$0xff]
    %v686 = vld [vmem:[#allocation5 + $0xb8] sm:$0xff]
    %v687 = vld [vmem:[#allocation5 + $0xc0] sm:$0xff]
    %v688 = vld [vmem:[#allocation5 + $0xc8] sm:$0xff]
    %v689 = vld [vmem:[#allocation5 + $0xd0] sm:$0xff]
    %v690 = vld [vmem:[#allocation5 + $0xd8] sm:$0xff]
    %v691 = vld [vmem:[#allocation5 + $0xe0] sm:$0xff]
    %v692 = vld [vmem:[#allocation5 + $0xe8] sm:$0xff]
    %v693 = vld [vmem:[#allocation5 + $0xf0] sm:$0xff]
    %v694 = vld [vmem:[#allocation5 + $0xf8] sm:$0xff]
    %v695 = vld [vmem:[#allocation5 + $0x100] sm:$0xff]
    %v696 = vld [vmem:[#allocation5 + $0x108] sm:$0xff]
    %v697 = vld [vmem:[#allocation5 + $0x110] sm:$0xff]
    %v698 = vld [vmem:[#allocation5 + $0x118] sm:$0xff]
    %v699 = vld [vmem:[#allocation5 + $0x120] sm:$0xff]
    %v700 = vld [vmem:[#allocation5 + $0x128] sm:$0xff]
    %v701 = vld [vmem:[#allocation5 + $0x130] sm:$0xff]
    %v702 = vld [vmem:[#allocation5 + $0x138] sm:$0xff]
    %v703 = vld [vmem:[#allocation5 + $0x140] sm:$0xff]
    %v704 = vld [vmem:[#allocation5 + $0x148] sm:$0xff]
    %v705 = vld [vmem:[#allocation5 + $0x150] sm:$0xff]
    %v706 = vld [vmem:[#allocation5 + $0x158] sm:$0xff]
    %v707 = vld [vmem:[#allocation5 + $0x160] sm:$0xff]
    %v708 = vld [vmem:[#allocation5 + $0x168] sm:$0xff]
    %v709 = vld [vmem:[#allocation5 + $0x170] sm:$0xff]
    %v710 = vld [vmem:[#allocation5 + $0x178] sm:$0xff]
    %v711 = vld [vmem:[#allocation5 + $0x180] sm:$0xff]
    %v712 = vld [vmem:[#allocation5 + $0x188] sm:$0xff]
    %v713 = vld [vmem:[#allocation5 + $0x190] sm:$0xff]
    %v714 = vld [vmem:[#allocation5 + $0x198] sm:$0xff]
    %v715 = vld [vmem:[#allocation5 + $0x1a0] sm:$0xff]
    %v716 = vld [vmem:[#allocation5 + $0x1a8] sm:$0xff]
    %v717 = vld [vmem:[#allocation5 + $0x1b0] sm:$0xff]
    %v718 = vld [vmem:[#allocation5 + $0x1b8] sm:$0xff]
    %v719 = vld [vmem:[#allocation5 + $0x1c0] sm:$0xff]
    %v720 = vld [vmem:[#allocation5 + $0x1c8] sm:$0xff]
    %v721 = vld [vmem:[#allocation5 + $0x1d0] sm:$0xff]
    %v722 = vld [vmem:[#allocation5 + $0x1d8] sm:$0xff]
    %v723 = vld [vmem:[#allocation5 + $0x1e0] sm:$0xff]
    %v724 = vld [vmem:[#allocation5 + $0x1e8] sm:$0xff]
    %v725 = vld [vmem:[#allocation5 + $0x1f0] sm:$0xff]
    %v726 = vld [vmem:[#allocation5 + $0x1f8] sm:$0xff]
    %v727 = vld [vmem:[#allocation10] sm:$0xff]
    %v728 = vld [vmem:[#allocation10 + $0x8] sm:$0xff]
    %v729 = vld [vmem:[#allocation10 + $0x10] sm:$0xff]
    %v730 = vld [vmem:[#allocation10 + $0x18] sm:$0xff]
    %v731 = vld [vmem:[#allocation10 + $0x20] sm:$0xff]
    %v732 = vld [vmem:[#allocation10 + $0x28] sm:$0xff]
    %v733 = vld [vmem:[#allocation10 + $0x30] sm:$0xff]
    %v734 = vld [vmem:[#allocation10 + $0x38] sm:$0xff]
    %v735 = vld [vmem:[#allocation10 + $0x40] sm:$0xff]
    %v736 = vld [vmem:[#allocation10 + $0x48] sm:$0xff]
    %v737 = vld [vmem:[#allocation10 + $0x50] sm:$0xff]
    %v738 = vld [vmem:[#allocation10 + $0x58] sm:$0xff]
    %v739 = vld [vmem:[#allocation10 + $0x60] sm:$0xff]
    %v740 = vld [vmem:[#allocation10 + $0x68] sm:$0xff]
    %v741 = vld [vmem:[#allocation10 + $0x70] sm:$0xff]
    %v742 = vld [vmem:[#allocation10 + $0x78] sm:$0xff]
    %v743 = vld [vmem:[#allocation10 + $0x80] sm:$0xff]
    %v744 = vld [vmem:[#allocation10 + $0x88] sm:$0xff]
    %v745 = vld [vmem:[#allocation10 + $0x90] sm:$0xff]
    %v746 = vld [vmem:[#allocation10 + $0x98] sm:$0xff]
    %v747 = vld [vmem:[#allocation10 + $0xa0] sm:$0xff]
    %v748 = vld [vmem:[#allocation10 + $0xa8] sm:$0xff]
    %v749 = vld [vmem:[#allocation10 + $0xb0] sm:$0xff]
    %v750 = vld [vmem:[#allocation10 + $0xb8] sm:$0xff]
    %v751 = vld [vmem:[#allocation10 + $0xc0] sm:$0xff]
    %v752 = vld [vmem:[#allocation10 + $0xc8] sm:$0xff]
    %v753 = vld [vmem:[#allocation10 + $0xd0] sm:$0xff]
    %v754 = vld [vmem:[#allocation10 + $0xd8] sm:$0xff]
    %v755 = vld [vmem:[#allocation10 + $0xe0] sm:$0xff]
    %v756 = vld [vmem:[#allocation10 + $0xe8] sm:$0xff]
    %v757 = vld [vmem:[#allocation10 + $0xf0] sm:$0xff]
    %v758 = vld [vmem:[#allocation10 + $0xf8] sm:$0xff]
    %v759 = vld [vmem:[#allocation10 + $0x100] sm:$0xff]
    %v760 = vld [vmem:[#allocation10 + $0x108] sm:$0xff]
    %v761 = vld [vmem:[#allocation10 + $0x110] sm:$0xff]
    %v762 = vld [vmem:[#allocation10 + $0x118] sm:$0xff]
    %v763 = vld [vmem:[#allocation10 + $0x120] sm:$0xff]
    %v764 = vld [vmem:[#allocation10 + $0x128] sm:$0xff]
    %v765 = vld [vmem:[#allocation10 + $0x130] sm:$0xff]
    %v766 = vld [vmem:[#allocation10 + $0x138] sm:$0xff]
    %v767 = vld [vmem:[#allocation10 + $0x140] sm:$0xff]
    %v768 = vld [vmem:[#allocation10 + $0x148] sm:$0xff]
    %v769 = vld [vmem:[#allocation10 + $0x150] sm:$0xff]
    %v770 = vld [vmem:[#allocation10 + $0x158] sm:$0xff]
    %v771 = vld [vmem:[#allocation10 + $0x160] sm:$0xff]
    %v772 = vld [vmem:[#allocation10 + $0x168] sm:$0xff]
    %v773 = vld [vmem:[#allocation10 + $0x170] sm:$0xff]
    %v774 = vld [vmem:[#allocation10 + $0x178] sm:$0xff]
    %v775 = vld [vmem:[#allocation10 + $0x180] sm:$0xff]
    %v776 = vld [vmem:[#allocation10 + $0x188] sm:$0xff]
    %v777 = vld [vmem:[#allocation10 + $0x190] sm:$0xff]
    %v778 = vld [vmem:[#allocation10 + $0x198] sm:$0xff]
    %v779 = vld [vmem:[#allocation10 + $0x1a0] sm:$0xff]
    %v780 = vld [vmem:[#allocation10 + $0x1a8] sm:$0xff]
    %v781 = vld [vmem:[#allocation10 + $0x1b0] sm:$0xff]
    %v782 = vld [vmem:[#allocation10 + $0x1b8] sm:$0xff]
    %v783 = vld [vmem:[#allocation10 + $0x1c0] sm:$0xff]
    %v784 = vld [vmem:[#allocation10 + $0x1c8] sm:$0xff]
    %v785 = vld [vmem:[#allocation10 + $0x1d0] sm:$0xff]
    %v786 = vld [vmem:[#allocation10 + $0x1d8] sm:$0xff]
    %v787 = vld [vmem:[#allocation10 + $0x1e0] sm:$0xff]
    %v788 = vld [vmem:[#allocation10 + $0x1e8] sm:$0xff]
    %v789 = vld [vmem:[#allocation10 + $0x1f0] sm:$0xff]
    %v790 = vld [vmem:[#allocation10 + $0x1f8] sm:$0xff]
    %v791 = vld [vmem:[%s8] sm:$0x3]
    %v793 = vperm.slane %v791, 0
    %v794 = vperm.slane %v791, 1
    %797 = vmatpush.msra.mxu0 %v757
    %798 = vmatpush.msra.mxu0 %v755
    %799 = vmatpush.msra.mxu0 %v753
    %800 = vmatpush.msra.mxu0 %v751
    %801 = vmatpush.msra.mxu0 %v749
    %802 = vmatpush.msra.mxu0 %v747
    %803 = vmatpush.msra.mxu0 %v745
    %804 = vmatpush.msra.mxu0 %v743
    %805 = vmatpush.msra.mxu0 %v741
    %806 = vmatpush.msra.mxu0 %v739
    %807 = vmatpush.msra.mxu0 %v737
    %808 = vmatpush.msra.mxu0 %v735
    %809 = vmatpush.msra.mxu0 %v733
    %810 = vmatpush.msra.mxu0 %v731
    %811 = vmatpush.msra.mxu0 %v729
    %812 = vmatpush.msra.mxu0 %v727
    %813 = vmatmul.f32.gmra.mxu0 %v663
    %v814 = vpop.f32.mrf.mxu0
    %v815 = vadd.f32 %v793, %v814
    %816 = vmatmul.f32.gmra.mxu0 %v665
    %v817 = vpop.f32.mrf.mxu0
    %v818 = vadd.f32 %v793, %v817
    %819 = vmatmul.f32.gmra.mxu0 %v667
    %v820 = vpop.f32.mrf.mxu0
    %v821 = vadd.f32 %v793, %v820
    %822 = vmatmul.f32.gmra.mxu0 %v669
    %v823 = vpop.f32.mrf.mxu0
    %v824 = vadd.f32 %v793, %v823
    %825 = vmatmul.f32.gmra.mxu0 %v671
    %v826 = vpop.f32.mrf.mxu0
    %v827 = vadd.f32 %v793, %v826
    %828 = vmatmul.f32.gmra.mxu0 %v673
    %v829 = vpop.f32.mrf.mxu0
    %v830 = vadd.f32 %v793, %v829
    %831 = vmatmul.f32.gmra.mxu0 %v675
    %v832 = vpop.f32.mrf.mxu0
    %v833 = vadd.f32 %v793, %v832
    %834 = vmatmul.f32.gmra.mxu0 %v677
    %v835 = vpop.f32.mrf.mxu0
    %v836 = vadd.f32 %v793, %v835
    %837 = vmatmul.f32.gmra.mxu0 %v679
    %v838 = vpop.f32.mrf.mxu0
    %v839 = vadd.f32 %v793, %v838
    %840 = vmatmul.f32.gmra.mxu0 %v681
    %v841 = vpop.f32.mrf.mxu0
    %v842 = vadd.f32 %v793, %v841
    %843 = vmatmul.f32.gmra.mxu0 %v683
    %v844 = vpop.f32.mrf.mxu0
    %v845 = vadd.f32 %v793, %v844
    %846 = vmatmul.f32.gmra.mxu0 %v685
    %v847 = vpop.f32.mrf.mxu0
    %v848 = vadd.f32 %v793, %v847
    %849 = vmatmul.f32.gmra.mxu0 %v687
    %v850 = vpop.f32.mrf.mxu0
    %v851 = vadd.f32 %v793, %v850
    %852 = vmatmul.f32.gmra.mxu0 %v689
    %v853 = vpop.f32.mrf.mxu0
    %v854 = vadd.f32 %v793, %v853
    %855 = vmatmul.f32.gmra.mxu0 %v691
    %v856 = vpop.f32.mrf.mxu0
    %v857 = vadd.f32 %v793, %v856
    %858 = vmatmul.f32.gmra.mxu0 %v693
    %v859 = vpop.f32.mrf.mxu0
    %v860 = vadd.f32 %v793, %v859
    %861 = vmatmul.f32.gmra.mxu0 %v695
    %v862 = vpop.f32.mrf.mxu0
    %v863 = vadd.f32 %v793, %v862
    %864 = vmatmul.f32.gmra.mxu0 %v697
    %v865 = vpop.f32.mrf.mxu0
    %v866 = vadd.f32 %v793, %v865
    %867 = vmatmul.f32.gmra.mxu0 %v699
    %v868 = vpop.f32.mrf.mxu0
    %v869 = vadd.f32 %v793, %v868
    %870 = vmatmul.f32.gmra.mxu0 %v701
    %v871 = vpop.f32.mrf.mxu0
    %v872 = vadd.f32 %v793, %v871
    %873 = vmatmul.f32.gmra.mxu0 %v703
    %v874 = vpop.f32.mrf.mxu0
    %v875 = vadd.f32 %v793, %v874
    %876 = vmatmul.f32.gmra.mxu0 %v705
    %v877 = vpop.f32.mrf.mxu0
    %v878 = vadd.f32 %v793, %v877
    %879 = vmatmul.f32.gmra.mxu0 %v707
    %v880 = vpop.f32.mrf.mxu0
    %v881 = vadd.f32 %v793, %v880
    %882 = vmatmul.f32.gmra.mxu0 %v709
    %v883 = vpop.f32.mrf.mxu0
    %v884 = vadd.f32 %v793, %v883
    %885 = vmatmul.f32.gmra.mxu0 %v711
    %v886 = vpop.f32.mrf.mxu0
    %v887 = vadd.f32 %v793, %v886
    %888 = vmatmul.f32.gmra.mxu0 %v713
    %v889 = vpop.f32.mrf.mxu0
    %v890 = vadd.f32 %v793, %v889
    %891 = vmatmul.f32.gmra.mxu0 %v715
    %v892 = vpop.f32.mrf.mxu0
    %v893 = vadd.f32 %v793, %v892
    %894 = vmatmul.f32.gmra.mxu0 %v717
    %v895 = vpop.f32.mrf.mxu0
    %v896 = vadd.f32 %v793, %v895
    %897 = vmatmul.f32.gmra.mxu0 %v719
    %v898 = vpop.f32.mrf.mxu0
    %v899 = vadd.f32 %v793, %v898
    %900 = vmatmul.f32.gmra.mxu0 %v721
    %v901 = vpop.f32.mrf.mxu0
    %v902 = vadd.f32 %v793, %v901
    %903 = vmatmul.f32.gmra.mxu0 %v723
    %v904 = vpop.f32.mrf.mxu0
    %v905 = vadd.f32 %v793, %v904
    %906 = vmatmul.f32.gmra.mxu0 %v725
    %v907 = vpop.f32.mrf.mxu0
    %v908 = vadd.f32 %v793, %v907
    %909 = vdwg.mxu0
    %910 = vmatpush.msra.mxu0 %v789
    %911 = vmatpush.msra.mxu0 %v787
    %912 = vmatpush.msra.mxu0 %v785
    %913 = vmatpush.msra.mxu0 %v783
    %914 = vmatpush.msra.mxu0 %v781
    %915 = vmatpush.msra.mxu0 %v779
    %916 = vmatpush.msra.mxu0 %v777
    %917 = vmatpush.msra.mxu0 %v775
    %918 = vmatpush.msra.mxu0 %v773
    %919 = vmatpush.msra.mxu0 %v771
    %920 = vmatpush.msra.mxu0 %v769
    %921 = vmatpush.msra.mxu0 %v767
    %922 = vmatpush.msra.mxu0 %v765
    %923 = vmatpush.msra.mxu0 %v763
    %924 = vmatpush.msra.mxu0 %v761
    %925 = vmatpush.msra.mxu0 %v759
    %926 = vmatmul.f32.gmra.mxu0 %v664
    %v927 = vpop.f32.mrf.mxu0
    %v928 = vadd.f32 %v815, %v927
    %929 = vmatmul.f32.gmra.mxu0 %v666
    %v930 = vpop.f32.mrf.mxu0
    %v931 = vadd.f32 %v818, %v930
    %932 = vmatmul.f32.gmra.mxu0 %v668
    %v933 = vpop.f32.mrf.mxu0
    %v934 = vadd.f32 %v821, %v933
    %935 = vmatmul.f32.gmra.mxu0 %v670
    %v936 = vpop.f32.mrf.mxu0
    %v937 = vadd.f32 %v824, %v936
    %938 = vmatmul.f32.gmra.mxu0 %v672
    %v939 = vpop.f32.mrf.mxu0
    %v940 = vadd.f32 %v827, %v939
    %941 = vmatmul.f32.gmra.mxu0 %v674
    %v942 = vpop.f32.mrf.mxu0
    %v943 = vadd.f32 %v830, %v942
    %944 = vmatmul.f32.gmra.mxu0 %v676
    %v945 = vpop.f32.mrf.mxu0
    %v946 = vadd.f32 %v833, %v945
    %947 = vmatmul.f32.gmra.mxu0 %v678
    %v948 = vpop.f32.mrf.mxu0
    %v949 = vadd.f32 %v836, %v948
    %950 = vmatmul.f32.gmra.mxu0 %v680
    %v951 = vpop.f32.mrf.mxu0
    %v952 = vadd.f32 %v839, %v951
    %953 = vmatmul.f32.gmra.mxu0 %v682
    %v954 = vpop.f32.mrf.mxu0
    %v955 = vadd.f32 %v842, %v954
    %956 = vmatmul.f32.gmra.mxu0 %v684
    %v957 = vpop.f32.mrf.mxu0
    %v958 = vadd.f32 %v845, %v957
    %959 = vmatmul.f32.gmra.mxu0 %v686
    %v960 = vpop.f32.mrf.mxu0
    %v961 = vadd.f32 %v848, %v960
    %962 = vmatmul.f32.gmra.mxu0 %v688
    %v963 = vpop.f32.mrf.mxu0
    %v964 = vadd.f32 %v851, %v963
    %965 = vmatmul.f32.gmra.mxu0 %v690
    %v966 = vpop.f32.mrf.mxu0
    %v967 = vadd.f32 %v854, %v966
    %968 = vmatmul.f32.gmra.mxu0 %v692
    %v969 = vpop.f32.mrf.mxu0
    %v970 = vadd.f32 %v857, %v969
    %971 = vmatmul.f32.gmra.mxu0 %v694
    %v972 = vpop.f32.mrf.mxu0
    %v973 = vadd.f32 %v860, %v972
    %974 = vmatmul.f32.gmra.mxu0 %v696
    %v975 = vpop.f32.mrf.mxu0
    %v976 = vadd.f32 %v863, %v975
    %977 = vmatmul.f32.gmra.mxu0 %v698
    %v978 = vpop.f32.mrf.mxu0
    %v979 = vadd.f32 %v866, %v978
    %980 = vmatmul.f32.gmra.mxu0 %v700
    %v981 = vpop.f32.mrf.mxu0
    %v982 = vadd.f32 %v869, %v981
    %983 = vmatmul.f32.gmra.mxu0 %v702
    %v984 = vpop.f32.mrf.mxu0
    %v985 = vadd.f32 %v872, %v984
    %986 = vmatmul.f32.gmra.mxu0 %v704
    %v987 = vpop.f32.mrf.mxu0
    %v988 = vadd.f32 %v875, %v987
    %989 = vmatmul.f32.gmra.mxu0 %v706
    %v990 = vpop.f32.mrf.mxu0
    %v991 = vadd.f32 %v878, %v990
    %992 = vmatmul.f32.gmra.mxu0 %v708
    %v993 = vpop.f32.mrf.mxu0
    %v994 = vadd.f32 %v881, %v993
    %995 = vmatmul.f32.gmra.mxu0 %v710
    %v996 = vpop.f32.mrf.mxu0
    %v997 = vadd.f32 %v884, %v996
    %998 = vmatmul.f32.gmra.mxu0 %v712
    %v999 = vpop.f32.mrf.mxu0
    %v1000 = vadd.f32 %v887, %v999
    %1001 = vmatmul.f32.gmra.mxu0 %v714
    %v1002 = vpop.f32.mrf.mxu0
    %v1003 = vadd.f32 %v890, %v1002
    %1004 = vmatmul.f32.gmra.mxu0 %v716
    %v1005 = vpop.f32.mrf.mxu0
    %v1006 = vadd.f32 %v893, %v1005
    %1007 = vmatmul.f32.gmra.mxu0 %v718
    %v1008 = vpop.f32.mrf.mxu0
    %v1009 = vadd.f32 %v896, %v1008
    %1010 = vmatmul.f32.gmra.mxu0 %v720
    %v1011 = vpop.f32.mrf.mxu0
    %v1012 = vadd.f32 %v899, %v1011
    %1013 = vmatmul.f32.gmra.mxu0 %v722
    %v1014 = vpop.f32.mrf.mxu0
    %v1015 = vadd.f32 %v902, %v1014
    %1016 = vmatmul.f32.gmra.mxu0 %v724
    %v1017 = vpop.f32.mrf.mxu0
    %v1018 = vadd.f32 %v905, %v1017
    %1019 = vmatmul.f32.gmra.mxu0 %v726
    %v1020 = vpop.f32.mrf.mxu0
    %v1021 = vadd.f32 %v908, %v1020
    %1022 = vdwg.mxu0
    %1023 = vmatpush.msra.mxu0 %v758
    %1024 = vmatpush.msra.mxu0 %v756
    %1025 = vmatpush.msra.mxu0 %v754
    %1026 = vmatpush.msra.mxu0 %v752
    %1027 = vmatpush.msra.mxu0 %v750
    %1028 = vmatpush.msra.mxu0 %v748
    %1029 = vmatpush.msra.mxu0 %v746
    %1030 = vmatpush.msra.mxu0 %v744
    %1031 = vmatpush.msra.mxu0 %v742
    %1032 = vmatpush.msra.mxu0 %v740
    %1033 = vmatpush.msra.mxu0 %v738
    %1034 = vmatpush.msra.mxu0 %v736
    %1035 = vmatpush.msra.mxu0 %v734
    %1036 = vmatpush.msra.mxu0 %v732
    %1037 = vmatpush.msra.mxu0 %v730
    %1038 = vmatpush.msra.mxu0 %v728
    %1039 = vmatmul.f32.gmra.mxu0 %v663
    %v1040 = vpop.f32.mrf.mxu0
    %v1041 = vadd.f32 %v794, %v1040
    %1042 = vmatmul.f32.gmra.mxu0 %v665
    %v1043 = vpop.f32.mrf.mxu0
    %v1044 = vadd.f32 %v794, %v1043
    %1045 = vmatmul.f32.gmra.mxu0 %v667
    %v1046 = vpop.f32.mrf.mxu0
    %v1047 = vadd.f32 %v794, %v1046
    %1048 = vmatmul.f32.gmra.mxu0 %v669
    %v1049 = vpop.f32.mrf.mxu0
    %v1050 = vadd.f32 %v794, %v1049
    %1051 = vmatmul.f32.gmra.mxu0 %v671
    %v1052 = vpop.f32.mrf.mxu0
    %v1053 = vadd.f32 %v794, %v1052
    %1054 = vmatmul.f32.gmra.mxu0 %v673
    %v1055 = vpop.f32.mrf.mxu0
    %v1056 = vadd.f32 %v794, %v1055
    %1057 = vmatmul.f32.gmra.mxu0 %v675
    %v1058 = vpop.f32.mrf.mxu0
    %v1059 = vadd.f32 %v794, %v1058
    %1060 = vmatmul.f32.gmra.mxu0 %v677
    %v1061 = vpop.f32.mrf.mxu0
    %v1062 = vadd.f32 %v794, %v1061
    %1063 = vmatmul.f32.gmra.mxu0 %v679
    %v1064 = vpop.f32.mrf.mxu0
    %v1065 = vadd.f32 %v794, %v1064
    %1066 = vmatmul.f32.gmra.mxu0 %v681
    %v1067 = vpop.f32.mrf.mxu0
    %v1068 = vadd.f32 %v794, %v1067
    %1069 = vmatmul.f32.gmra.mxu0 %v683
    %v1070 = vpop.f32.mrf.mxu0
    %v1071 = vadd.f32 %v794, %v1070
    %1072 = vmatmul.f32.gmra.mxu0 %v685
    %v1073 = vpop.f32.mrf.mxu0
    %v1074 = vadd.f32 %v794, %v1073
    %1075 = vmatmul.f32.gmra.mxu0 %v687
    %v1076 = vpop.f32.mrf.mxu0
    %v1077 = vadd.f32 %v794, %v1076
    %1078 = vmatmul.f32.gmra.mxu0 %v689
    %v1079 = vpop.f32.mrf.mxu0
    %v1080 = vadd.f32 %v794, %v1079
    %1081 = vmatmul.f32.gmra.mxu0 %v691
    %v1082 = vpop.f32.mrf.mxu0
    %v1083 = vadd.f32 %v794, %v1082
    %1084 = vmatmul.f32.gmra.mxu0 %v693
    %v1085 = vpop.f32.mrf.mxu0
    %v1086 = vadd.f32 %v794, %v1085
    %1087 = vmatmul.f32.gmra.mxu0 %v695
    %v1088 = vpop.f32.mrf.mxu0
    %v1089 = vadd.f32 %v794, %v1088
    %1090 = vmatmul.f32.gmra.mxu0 %v697
    %v1091 = vpop.f32.mrf.mxu0
    %v1092 = vadd.f32 %v794, %v1091
    %1093 = vmatmul.f32.gmra.mxu0 %v699
    %v1094 = vpop.f32.mrf.mxu0
    %v1095 = vadd.f32 %v794, %v1094
    %1096 = vmatmul.f32.gmra.mxu0 %v701
    %v1097 = vpop.f32.mrf.mxu0
    %v1098 = vadd.f32 %v794, %v1097
    %1099 = vmatmul.f32.gmra.mxu0 %v703
    %v1100 = vpop.f32.mrf.mxu0
    %v1101 = vadd.f32 %v794, %v1100
    %1102 = vmatmul.f32.gmra.mxu0 %v705
    %v1103 = vpop.f32.mrf.mxu0
    %v1104 = vadd.f32 %v794, %v1103
    %1105 = vmatmul.f32.gmra.mxu0 %v707
    %v1106 = vpop.f32.mrf.mxu0
    %v1107 = vadd.f32 %v794, %v1106
    %1108 = vmatmul.f32.gmra.mxu0 %v709
    %v1109 = vpop.f32.mrf.mxu0
    %v1110 = vadd.f32 %v794, %v1109
    %1111 = vmatmul.f32.gmra.mxu0 %v711
    %v1112 = vpop.f32.mrf.mxu0
    %v1113 = vadd.f32 %v794, %v1112
    %1114 = vmatmul.f32.gmra.mxu0 %v713
    %v1115 = vpop.f32.mrf.mxu0
    %v1116 = vadd.f32 %v794, %v1115
    %1117 = vmatmul.f32.gmra.mxu0 %v715
    %v1118 = vpop.f32.mrf.mxu0
    %v1119 = vadd.f32 %v794, %v1118
    %1120 = vmatmul.f32.gmra.mxu0 %v717
    %v1121 = vpop.f32.mrf.mxu0
    %v1122 = vadd.f32 %v794, %v1121
    %1123 = vmatmul.f32.gmra.mxu0 %v719
    %v1124 = vpop.f32.mrf.mxu0
    %v1125 = vadd.f32 %v794, %v1124
    %1126 = vmatmul.f32.gmra.mxu0 %v721
    %v1127 = vpop.f32.mrf.mxu0
    %v1128 = vadd.f32 %v794, %v1127
    %1129 = vmatmul.f32.gmra.mxu0 %v723
    %v1130 = vpop.f32.mrf.mxu0
    %v1131 = vadd.f32 %v794, %v1130
    %1132 = vmatmul.f32.gmra.mxu0 %v725
    %v1133 = vpop.f32.mrf.mxu0
    %v1134 = vadd.f32 %v794, %v1133
    %1135 = vdwg.mxu0
    %1136 = vmatpush.msra.mxu0 %v790
    %1137 = vmatpush.msra.mxu0 %v788
    %1138 = vmatpush.msra.mxu0 %v786
    %1139 = vmatpush.msra.mxu0 %v784
    %1140 = vmatpush.msra.mxu0 %v782
    %1141 = vmatpush.msra.mxu0 %v780
    %1142 = vmatpush.msra.mxu0 %v778
    %1143 = vmatpush.msra.mxu0 %v776
    %1144 = vmatpush.msra.mxu0 %v774
    %1145 = vmatpush.msra.mxu0 %v772
    %1146 = vmatpush.msra.mxu0 %v770
    %1147 = vmatpush.msra.mxu0 %v768
    %1148 = vmatpush.msra.mxu0 %v766
    %1149 = vmatpush.msra.mxu0 %v764
    %1150 = vmatpush.msra.mxu0 %v762
    %1151 = vmatpush.msra.mxu0 %v760
    %1152 = vmatmul.f32.gmra.mxu0 %v664
    %v1153 = vpop.f32.mrf.mxu0
    %v1154 = vadd.f32 %v1041, %v1153
    %1155 = vmatmul.f32.gmra.mxu0 %v666
    %v1156 = vpop.f32.mrf.mxu0
    %v1157 = vadd.f32 %v1044, %v1156
    %1158 = vmatmul.f32.gmra.mxu0 %v668
    %v1159 = vpop.f32.mrf.mxu0
    %v1160 = vadd.f32 %v1047, %v1159
    %1161 = vmatmul.f32.gmra.mxu0 %v670
    %v1162 = vpop.f32.mrf.mxu0
    %v1163 = vadd.f32 %v1050, %v1162
    %1164 = vmatmul.f32.gmra.mxu0 %v672
    %v1165 = vpop.f32.mrf.mxu0
    %v1166 = vadd.f32 %v1053, %v1165
    %1167 = vmatmul.f32.gmra.mxu0 %v674
    %v1168 = vpop.f32.mrf.mxu0
    %v1169 = vadd.f32 %v1056, %v1168
    %1170 = vmatmul.f32.gmra.mxu0 %v676
    %v1171 = vpop.f32.mrf.mxu0
    %v1172 = vadd.f32 %v1059, %v1171
    %1173 = vmatmul.f32.gmra.mxu0 %v678
    %v1174 = vpop.f32.mrf.mxu0
    %v1175 = vadd.f32 %v1062, %v1174
    %1176 = vmatmul.f32.gmra.mxu0 %v680
    %v1177 = vpop.f32.mrf.mxu0
    %v1178 = vadd.f32 %v1065, %v1177
    %1179 = vmatmul.f32.gmra.mxu0 %v682
    %v1180 = vpop.f32.mrf.mxu0
    %v1181 = vadd.f32 %v1068, %v1180
    %1182 = vmatmul.f32.gmra.mxu0 %v684
    %v1183 = vpop.f32.mrf.mxu0
    %v1184 = vadd.f32 %v1071, %v1183
    %1185 = vmatmul.f32.gmra.mxu0 %v686
    %v1186 = vpop.f32.mrf.mxu0
    %v1187 = vadd.f32 %v1074, %v1186
    %1188 = vmatmul.f32.gmra.mxu0 %v688
    %v1189 = vpop.f32.mrf.mxu0
    %v1190 = vadd.f32 %v1077, %v1189
    %1191 = vmatmul.f32.gmra.mxu0 %v690
    %v1192 = vpop.f32.mrf.mxu0
    %v1193 = vadd.f32 %v1080, %v1192
    %1194 = vmatmul.f32.gmra.mxu0 %v692
    %v1195 = vpop.f32.mrf.mxu0
    %v1196 = vadd.f32 %v1083, %v1195
    %1197 = vmatmul.f32.gmra.mxu0 %v694
    %v1198 = vpop.f32.mrf.mxu0
    %v1199 = vadd.f32 %v1086, %v1198
    %1200 = vmatmul.f32.gmra.mxu0 %v696
    %v1201 = vpop.f32.mrf.mxu0
    %v1202 = vadd.f32 %v1089, %v1201
    %1203 = vmatmul.f32.gmra.mxu0 %v698
    %v1204 = vpop.f32.mrf.mxu0
    %v1205 = vadd.f32 %v1092, %v1204
    %1206 = vmatmul.f32.gmra.mxu0 %v700
    %v1207 = vpop.f32.mrf.mxu0
    %v1208 = vadd.f32 %v1095, %v1207
    %1209 = vmatmul.f32.gmra.mxu0 %v702
    %v1210 = vpop.f32.mrf.mxu0
    %v1211 = vadd.f32 %v1098, %v1210
    %1212 = vmatmul.f32.gmra.mxu0 %v704
    %v1213 = vpop.f32.mrf.mxu0
    %v1214 = vadd.f32 %v1101, %v1213
    %1215 = vmatmul.f32.gmra.mxu0 %v706
    %v1216 = vpop.f32.mrf.mxu0
    %v1217 = vadd.f32 %v1104, %v1216
    %1218 = vmatmul.f32.gmra.mxu0 %v708
    %v1219 = vpop.f32.mrf.mxu0
    %v1220 = vadd.f32 %v1107, %v1219
    %1221 = vmatmul.f32.gmra.mxu0 %v710
    %v1222 = vpop.f32.mrf.mxu0
    %v1223 = vadd.f32 %v1110, %v1222
    %1224 = vmatmul.f32.gmra.mxu0 %v712
    %v1225 = vpop.f32.mrf.mxu0
    %v1226 = vadd.f32 %v1113, %v1225
    %1227 = vmatmul.f32.gmra.mxu0 %v714
    %v1228 = vpop.f32.mrf.mxu0
    %v1229 = vadd.f32 %v1116, %v1228
    %1230 = vmatmul.f32.gmra.mxu0 %v716
    %v1231 = vpop.f32.mrf.mxu0
    %v1232 = vadd.f32 %v1119, %v1231
    %1233 = vmatmul.f32.gmra.mxu0 %v718
    %v1234 = vpop.f32.mrf.mxu0
    %v1235 = vadd.f32 %v1122, %v1234
    %1236 = vmatmul.f32.gmra.mxu0 %v720
    %v1237 = vpop.f32.mrf.mxu0
    %v1238 = vadd.f32 %v1125, %v1237
    %1239 = vmatmul.f32.gmra.mxu0 %v722
    %v1240 = vpop.f32.mrf.mxu0
    %v1241 = vadd.f32 %v1128, %v1240
    %1242 = vmatmul.f32.gmra.mxu0 %v724
    %v1243 = vpop.f32.mrf.mxu0
    %v1244 = vadd.f32 %v1131, %v1243
    %1245 = vmatmul.f32.gmra.mxu0 %v726
    %v1246 = vpop.f32.mrf.mxu0
    %v1247 = vadd.f32 %v1134, %v1246
    %1248 = vdwg.mxu0
    %v1249 = vld [vmem:[#allocation8] ss:$2 sm:$0x3]
    %1251 = vset.pattern.permute.xlu0 0
    %1252 = vperm.xlu0 %1251, %v398
    %v1253 = vpop.permute.xlu0 %1252
    %1256 = vset.pattern.permute.xlu0 0
    %1257 = vperm.xlu0 %1256, %v399
    %v1258 = vpop.permute.xlu0 %1257
    %1261 = vset.pattern.permute.xlu0 0
    %1262 = vperm.xlu0 %1261, %v400
    %v1263 = vpop.permute.xlu0 %1262
    %1266 = vset.pattern.permute.xlu0 0
    %1267 = vperm.xlu0 %1266, %v401
    %v1268 = vpop.permute.xlu0 %1267
    %1271 = vset.pattern.permute.xlu0 0
    %1272 = vperm.xlu0 %1271, %v402
    %v1273 = vpop.permute.xlu0 %1272
    %1276 = vset.pattern.permute.xlu0 0
    %1277 = vperm.xlu0 %1276, %v403
    %v1278 = vpop.permute.xlu0 %1277
    %1281 = vset.pattern.permute.xlu0 0
    %1282 = vperm.xlu0 %1281, %v404
    %v1283 = vpop.permute.xlu0 %1282
    %1286 = vset.pattern.permute.xlu0 0
    %1287 = vperm.xlu0 %1286, %v405
    %v1288 = vpop.permute.xlu0 %1287
    %1291 = vset.pattern.permute.xlu0 0
    %1292 = vperm.xlu0 %1291, %v406
    %v1293 = vpop.permute.xlu0 %1292
    %1296 = vset.pattern.permute.xlu0 0
    %1297 = vperm.xlu0 %1296, %v407
    %v1298 = vpop.permute.xlu0 %1297
    %1301 = vset.pattern.permute.xlu0 0
    %1302 = vperm.xlu0 %1301, %v408
    %v1303 = vpop.permute.xlu0 %1302
    %1306 = vset.pattern.permute.xlu0 0
    %1307 = vperm.xlu0 %1306, %v409
    %v1308 = vpop.permute.xlu0 %1307
    %1311 = vset.pattern.permute.xlu0 0
    %1312 = vperm.xlu0 %1311, %v410
    %v1313 = vpop.permute.xlu0 %1312
    %1316 = vset.pattern.permute.xlu0 0
    %1317 = vperm.xlu0 %1316, %v411
    %v1318 = vpop.permute.xlu0 %1317
    %1321 = vset.pattern.permute.xlu0 0
    %1322 = vperm.xlu0 %1321, %v412
    %v1323 = vpop.permute.xlu0 %1322
    %1326 = vset.pattern.permute.xlu0 0
    %1327 = vperm.xlu0 %1326, %v413
    %v1328 = vpop.permute.xlu0 %1327
    %1331 = vset.pattern.permute.xlu0 0
    %1332 = vperm.xlu0 %1331, %v414
    %v1333 = vpop.permute.xlu0 %1332
    %1336 = vset.pattern.permute.xlu0 0
    %1337 = vperm.xlu0 %1336, %v415
    %v1338 = vpop.permute.xlu0 %1337
    %1341 = vset.pattern.permute.xlu0 0
    %1342 = vperm.xlu0 %1341, %v416
    %v1343 = vpop.permute.xlu0 %1342
    %1346 = vset.pattern.permute.xlu0 0
    %1347 = vperm.xlu0 %1346, %v417
    %v1348 = vpop.permute.xlu0 %1347
    %1351 = vset.pattern.permute.xlu0 0
    %1352 = vperm.xlu0 %1351, %v418
    %v1353 = vpop.permute.xlu0 %1352
    %1356 = vset.pattern.permute.xlu0 0
    %1357 = vperm.xlu0 %1356, %v419
    %v1358 = vpop.permute.xlu0 %1357
    %1361 = vset.pattern.permute.xlu0 0
    %1362 = vperm.xlu0 %1361, %v420
    %v1363 = vpop.permute.xlu0 %1362
    %1366 = vset.pattern.permute.xlu0 0
    %1367 = vperm.xlu0 %1366, %v421
    %v1368 = vpop.permute.xlu0 %1367
    %1371 = vset.pattern.permute.xlu0 0
    %1372 = vperm.xlu0 %1371, %v422
    %v1373 = vpop.permute.xlu0 %1372
    %1376 = vset.pattern.permute.xlu0 0
    %1377 = vperm.xlu0 %1376, %v423
    %v1378 = vpop.permute.xlu0 %1377
    %1381 = vset.pattern.permute.xlu0 0
    %1382 = vperm.xlu0 %1381, %v424
    %v1383 = vpop.permute.xlu0 %1382
    %1386 = vset.pattern.permute.xlu0 0
    %1387 = vperm.xlu0 %1386, %v425
    %v1388 = vpop.permute.xlu0 %1387
    %1391 = vset.pattern.permute.xlu0 0
    %1392 = vperm.xlu0 %1391, %v426
    %v1393 = vpop.permute.xlu0 %1392
    %1396 = vset.pattern.permute.xlu0 0
    %1397 = vperm.xlu0 %1396, %v427
    %v1398 = vpop.permute.xlu0 %1397
    %1401 = vset.pattern.permute.xlu0 0
    %1402 = vperm.xlu0 %1401, %v428
    %v1403 = vpop.permute.xlu0 %1402
    %1406 = vset.pattern.permute.xlu0 0
    %1407 = vperm.xlu0 %1406, %v429
    %v1408 = vpop.permute.xlu0 %1407
    %v1411 = vperm.slane %v1249, 0
    %v1412 = vperm.slane %v1249, 1
    %v1415 = vmul.f32 %v1253, %v1411
    %v1416 = vmul.f32 %v1253, %v1412
    %v1417 = vmul.f32 %v1258, %v1411
    %v1418 = vmul.f32 %v1258, %v1412
    %v1419 = vmul.f32 %v1263, %v1411
    %v1420 = vmul.f32 %v1263, %v1412
    %v1421 = vmul.f32 %v1268, %v1411
    %v1422 = vmul.f32 %v1268, %v1412
    %v1423 = vmul.f32 %v1273, %v1411
    %v1424 = vmul.f32 %v1273, %v1412
    %v1425 = vmul.f32 %v1278, %v1411
    %v1426 = vmul.f32 %v1278, %v1412
    %v1427 = vmul.f32 %v1283, %v1411
    %v1428 = vmul.f32 %v1283, %v1412
    %v1429 = vmul.f32 %v1288, %v1411
    %v1430 = vmul.f32 %v1288, %v1412
    %v1431 = vmul.f32 %v1293, %v1411
    %v1432 = vmul.f32 %v1293, %v1412
    %v1433 = vmul.f32 %v1298, %v1411
    %v1434 = vmul.f32 %v1298, %v1412
    %v1435 = vmul.f32 %v1303, %v1411
    %v1436 = vmul.f32 %v1303, %v1412
    %v1437 = vmul.f32 %v1308, %v1411
    %v1438 = vmul.f32 %v1308, %v1412
    %v1439 = vmul.f32 %v1313, %v1411
    %v1440 = vmul.f32 %v1313, %v1412
    %v1441 = vmul.f32 %v1318, %v1411
    %v1442 = vmul.f32 %v1318, %v1412
    %v1443 = vmul.f32 %v1323, %v1411
    %v1444 = vmul.f32 %v1323, %v1412
    %v1445 = vmul.f32 %v1328, %v1411
    %v1446 = vmul.f32 %v1328, %v1412
    %v1447 = vmul.f32 %v1333, %v1411
    %v1448 = vmul.f32 %v1333, %v1412
    %v1449 = vmul.f32 %v1338, %v1411
    %v1450 = vmul.f32 %v1338, %v1412
    %v1451 = vmul.f32 %v1343, %v1411
    %v1452 = vmul.f32 %v1343, %v1412
    %v1453 = vmul.f32 %v1348, %v1411
    %v1454 = vmul.f32 %v1348, %v1412
    %v1455 = vmul.f32 %v1353, %v1411
    %v1456 = vmul.f32 %v1353, %v1412
    %v1457 = vmul.f32 %v1358, %v1411
    %v1458 = vmul.f32 %v1358, %v1412
    %v1459 = vmul.f32 %v1363, %v1411
    %v1460 = vmul.f32 %v1363, %v1412
    %v1461 = vmul.f32 %v1368, %v1411
    %v1462 = vmul.f32 %v1368, %v1412
    %v1463 = vmul.f32 %v1373, %v1411
    %v1464 = vmul.f32 %v1373, %v1412
    %v1465 = vmul.f32 %v1378, %v1411
    %v1466 = vmul.f32 %v1378, %v1412
    %v1467 = vmul.f32 %v1383, %v1411
    %v1468 = vmul.f32 %v1383, %v1412
    %v1469 = vmul.f32 %v1388, %v1411
    %v1470 = vmul.f32 %v1388, %v1412
    %v1471 = vmul.f32 %v1393, %v1411
    %v1472 = vmul.f32 %v1393, %v1412
    %v1473 = vmul.f32 %v1398, %v1411
    %v1474 = vmul.f32 %v1398, %v1412
    %v1475 = vmul.f32 %v1403, %v1411
    %v1476 = vmul.f32 %v1403, %v1412
    %v1477 = vmul.f32 %v1408, %v1411
    %v1478 = vmul.f32 %v1408, %v1412
    %v1479 = vadd.f32 %v928, %v1415
    %v1480 = vadd.f32 %v1154, %v1416
    %v1481 = vadd.f32 %v931, %v1417
    %v1482 = vadd.f32 %v1157, %v1418
    %v1483 = vadd.f32 %v934, %v1419
    %v1484 = vadd.f32 %v1160, %v1420
    %v1485 = vadd.f32 %v937, %v1421
    %v1486 = vadd.f32 %v1163, %v1422
    %v1487 = vadd.f32 %v940, %v1423
    %v1488 = vadd.f32 %v1166, %v1424
    %v1489 = vadd.f32 %v943, %v1425
    %v1490 = vadd.f32 %v1169, %v1426
    %v1491 = vadd.f32 %v946, %v1427
    %v1492 = vadd.f32 %v1172, %v1428
    %v1493 = vadd.f32 %v949, %v1429
    %v1494 = vadd.f32 %v1175, %v1430
    %v1495 = vadd.f32 %v952, %v1431
    %v1496 = vadd.f32 %v1178, %v1432
    %v1497 = vadd.f32 %v955, %v1433
    %v1498 = vadd.f32 %v1181, %v1434
    %v1499 = vadd.f32 %v958, %v1435
    %v1500 = vadd.f32 %v1184, %v1436
    %v1501 = vadd.f32 %v961, %v1437
    %v1502 = vadd.f32 %v1187, %v1438
    %v1503 = vadd.f32 %v964, %v1439
    %v1504 = vadd.f32 %v1190, %v1440
    %v1505 = vadd.f32 %v967, %v1441
    %v1506 = vadd.f32 %v1193, %v1442
    %v1507 = vadd.f32 %v970, %v1443
    %v1508 = vadd.f32 %v1196, %v1444
    %v1509 = vadd.f32 %v973, %v1445
    %v1510 = vadd.f32 %v1199, %v1446
    %v1511 = vadd.f32 %v976, %v1447
    %v1512 = vadd.f32 %v1202, %v1448
    %v1513 = vadd.f32 %v979, %v1449
    %v1514 = vadd.f32 %v1205, %v1450
    %v1515 = vadd.f32 %v982, %v1451
    %v1516 = vadd.f32 %v1208, %v1452
    %v1517 = vadd.f32 %v985, %v1453
    %v1518 = vadd.f32 %v1211, %v1454
    %v1519 = vadd.f32 %v988, %v1455
    %v1520 = vadd.f32 %v1214, %v1456
    %v1521 = vadd.f32 %v991, %v1457
    %v1522 = vadd.f32 %v1217, %v1458
    %v1523 = vadd.f32 %v994, %v1459
    %v1524 = vadd.f32 %v1220, %v1460
    %v1525 = vadd.f32 %v997, %v1461
    %v1526 = vadd.f32 %v1223, %v1462
    %v1527 = vadd.f32 %v1000, %v1463
    %v1528 = vadd.f32 %v1226, %v1464
    %v1529 = vadd.f32 %v1003, %v1465
    %v1530 = vadd.f32 %v1229, %v1466
    %v1531 = vadd.f32 %v1006, %v1467
    %v1532 = vadd.f32 %v1232, %v1468
    %v1533 = vadd.f32 %v1009, %v1469
    %v1534 = vadd.f32 %v1235, %v1470
    %v1535 = vadd.f32 %v1012, %v1471
    %v1536 = vadd.f32 %v1238, %v1472
    %v1537 = vadd.f32 %v1015, %v1473
    %v1538 = vadd.f32 %v1241, %v1474
    %v1539 = vadd.f32 %v1018, %v1475
    %v1540 = vadd.f32 %v1244, %v1476
    %v1541 = vadd.f32 %v1021, %v1477
    %v1542 = vadd.f32 %v1247, %v1478
    %s1543 = scalar_lea.vmem [#allocation8], 1
    %v1544 = vld [vmem:[%s1543] ss:$2 sm:$0x3]
    %1546 = vset.pattern.permute.xlu0 0
    %1547 = vperm.xlu0 %1546, %v631
    %v1548 = vpop.permute.xlu0 %1547
    %1551 = vset.pattern.permute.xlu0 0
    %1552 = vperm.xlu0 %1551, %v632
    %v1553 = vpop.permute.xlu0 %1552
    %1556 = vset.pattern.permute.xlu0 0
    %1557 = vperm.xlu0 %1556, %v633
    %v1558 = vpop.permute.xlu0 %1557
    %1561 = vset.pattern.permute.xlu0 0
    %1562 = vperm.xlu0 %1561, %v634
    %v1563 = vpop.permute.xlu0 %1562
    %1566 = vset.pattern.permute.xlu0 0
    %1567 = vperm.xlu0 %1566, %v635
    %v1568 = vpop.permute.xlu0 %1567
    %1571 = vset.pattern.permute.xlu0 0
    %1572 = vperm.xlu0 %1571, %v636
    %v1573 = vpop.permute.xlu0 %1572
    %1576 = vset.pattern.permute.xlu0 0
    %1577 = vperm.xlu0 %1576, %v637
    %v1578 = vpop.permute.xlu0 %1577
    %1581 = vset.pattern.permute.xlu0 0
    %1582 = vperm.xlu0 %1581, %v638
    %v1583 = vpop.permute.xlu0 %1582
    %1586 = vset.pattern.permute.xlu0 0
    %1587 = vperm.xlu0 %1586, %v639
    %v1588 = vpop.permute.xlu0 %1587
    %1591 = vset.pattern.permute.xlu0 0
    %1592 = vperm.xlu0 %1591, %v640
    %v1593 = vpop.permute.xlu0 %1592
    %1596 = vset.pattern.permute.xlu0 0
    %1597 = vperm.xlu0 %1596, %v641
    %v1598 = vpop.permute.xlu0 %1597
    %1601 = vset.pattern.permute.xlu0 0
    %1602 = vperm.xlu0 %1601, %v642
    %v1603 = vpop.permute.xlu0 %1602
    %1606 = vset.pattern.permute.xlu0 0
    %1607 = vperm.xlu0 %1606, %v643
    %v1608 = vpop.permute.xlu0 %1607
    %1611 = vset.pattern.permute.xlu0 0
    %1612 = vperm.xlu0 %1611, %v644
    %v1613 = vpop.permute.xlu0 %1612
    %1616 = vset.pattern.permute.xlu0 0
    %1617 = vperm.xlu0 %1616, %v645
    %v1618 = vpop.permute.xlu0 %1617
    %1621 = vset.pattern.permute.xlu0 0
    %1622 = vperm.xlu0 %1621, %v646
    %v1623 = vpop.permute.xlu0 %1622
    %1626 = vset.pattern.permute.xlu0 0
    %1627 = vperm.xlu0 %1626, %v647
    %v1628 = vpop.permute.xlu0 %1627
    %1631 = vset.pattern.permute.xlu0 0
    %1632 = vperm.xlu0 %1631, %v648
    %v1633 = vpop.permute.xlu0 %1632
    %1636 = vset.pattern.permute.xlu0 0
    %1637 = vperm.xlu0 %1636, %v649
    %v1638 = vpop.permute.xlu0 %1637
    %1641 = vset.pattern.permute.xlu0 0
    %1642 = vperm.xlu0 %1641, %v650
    %v1643 = vpop.permute.xlu0 %1642
    %1646 = vset.pattern.permute.xlu0 0
    %1647 = vperm.xlu0 %1646, %v651
    %v1648 = vpop.permute.xlu0 %1647
    %1651 = vset.pattern.permute.xlu0 0
    %1652 = vperm.xlu0 %1651, %v652
    %v1653 = vpop.permute.xlu0 %1652
    %1656 = vset.pattern.permute.xlu0 0
    %1657 = vperm.xlu0 %1656, %v653
    %v1658 = vpop.permute.xlu0 %1657
    %1661 = vset.pattern.permute.xlu0 0
    %1662 = vperm.xlu0 %1661, %v654
    %v1663 = vpop.permute.xlu0 %1662
    %1666 = vset.pattern.permute.xlu0 0
    %1667 = vperm.xlu0 %1666, %v655
    %v1668 = vpop.permute.xlu0 %1667
    %1671 = vset.pattern.permute.xlu0 0
    %1672 = vperm.xlu0 %1671, %v656
    %v1673 = vpop.permute.xlu0 %1672
    %1676 = vset.pattern.permute.xlu0 0
    %1677 = vperm.xlu0 %1676, %v657
    %v1678 = vpop.permute.xlu0 %1677
    %1681 = vset.pattern.permute.xlu0 0
    %1682 = vperm.xlu0 %1681, %v658
    %v1683 = vpop.permute.xlu0 %1682
    %1686 = vset.pattern.permute.xlu0 0
    %1687 = vperm.xlu0 %1686, %v659
    %v1688 = vpop.permute.xlu0 %1687
    %1691 = vset.pattern.permute.xlu0 0
    %1692 = vperm.xlu0 %1691, %v660
    %v1693 = vpop.permute.xlu0 %1692
    %1696 = vset.pattern.permute.xlu0 0
    %1697 = vperm.xlu0 %1696, %v661
    %v1698 = vpop.permute.xlu0 %1697
    %1701 = vset.pattern.permute.xlu0 0
    %1702 = vperm.xlu0 %1701, %v662
    %v1703 = vpop.permute.xlu0 %1702
    %v1706 = vperm.slane %v1544, 0
    %v1707 = vperm.slane %v1544, 1
    %v1710 = vmul.f32 %v1548, %v1706
    %v1711 = vmul.f32 %v1548, %v1707
    %v1712 = vmul.f32 %v1553, %v1706
    %v1713 = vmul.f32 %v1553, %v1707
    %v1714 = vmul.f32 %v1558, %v1706
    %v1715 = vmul.f32 %v1558, %v1707
    %v1716 = vmul.f32 %v1563, %v1706
    %v1717 = vmul.f32 %v1563, %v1707
    %v1718 = vmul.f32 %v1568, %v1706
    %v1719 = vmul.f32 %v1568, %v1707
    %v1720 = vmul.f32 %v1573, %v1706
    %v1721 = vmul.f32 %v1573, %v1707
    %v1722 = vmul.f32 %v1578, %v1706
    %v1723 = vmul.f32 %v1578, %v1707
    %v1724 = vmul.f32 %v1583, %v1706
    %v1725 = vmul.f32 %v1583, %v1707
    %v1726 = vmul.f32 %v1588, %v1706
    %v1727 = vmul.f32 %v1588, %v1707
    %v1728 = vmul.f32 %v1593, %v1706
    %v1729 = vmul.f32 %v1593, %v1707
    %v1730 = vmul.f32 %v1598, %v1706
    %v1731 = vmul.f32 %v1598, %v1707
    %v1732 = vmul.f32 %v1603, %v1706
    %v1733 = vmul.f32 %v1603, %v1707
    %v1734 = vmul.f32 %v1608, %v1706
    %v1735 = vmul.f32 %v1608, %v1707
    %v1736 = vmul.f32 %v1613, %v1706
    %v1737 = vmul.f32 %v1613, %v1707
    %v1738 = vmul.f32 %v1618, %v1706
    %v1739 = vmul.f32 %v1618, %v1707
    %v1740 = vmul.f32 %v1623, %v1706
    %v1741 = vmul.f32 %v1623, %v1707
    %v1742 = vmul.f32 %v1628, %v1706
    %v1743 = vmul.f32 %v1628, %v1707
    %v1744 = vmul.f32 %v1633, %v1706
    %v1745 = vmul.f32 %v1633, %v1707
    %v1746 = vmul.f32 %v1638, %v1706
    %v1747 = vmul.f32 %v1638, %v1707
    %v1748 = vmul.f32 %v1643, %v1706
    %v1749 = vmul.f32 %v1643, %v1707
    %v1750 = vmul.f32 %v1648, %v1706
    %v1751 = vmul.f32 %v1648, %v1707
    %v1752 = vmul.f32 %v1653, %v1706
    %v1753 = vmul.f32 %v1653, %v1707
    %v1754 = vmul.f32 %v1658, %v1706
    %v1755 = vmul.f32 %v1658, %v1707
    %v1756 = vmul.f32 %v1663, %v1706
    %v1757 = vmul.f32 %v1663, %v1707
    %v1758 = vmul.f32 %v1668, %v1706
    %v1759 = vmul.f32 %v1668, %v1707
    %v1760 = vmul.f32 %v1673, %v1706
    %v1761 = vmul.f32 %v1673, %v1707
    %v1762 = vmul.f32 %v1678, %v1706
    %v1763 = vmul.f32 %v1678, %v1707
    %v1764 = vmul.f32 %v1683, %v1706
    %v1765 = vmul.f32 %v1683, %v1707
    %v1766 = vmul.f32 %v1688, %v1706
    %v1767 = vmul.f32 %v1688, %v1707
    %v1768 = vmul.f32 %v1693, %v1706
    %v1769 = vmul.f32 %v1693, %v1707
    %v1770 = vmul.f32 %v1698, %v1706
    %v1771 = vmul.f32 %v1698, %v1707
    %v1772 = vmul.f32 %v1703, %v1706
    %v1773 = vmul.f32 %v1703, %v1707
    %v1774 = vadd.f32 %v1479, %v1710
    %v1775 = vadd.f32 %v1480, %v1711
    %v1776 = vadd.f32 %v1481, %v1712
    %v1777 = vadd.f32 %v1482, %v1713
    %v1778 = vadd.f32 %v1483, %v1714
    %v1779 = vadd.f32 %v1484, %v1715
    %v1780 = vadd.f32 %v1485, %v1716
    %v1781 = vadd.f32 %v1486, %v1717
    %v1782 = vadd.f32 %v1487, %v1718
    %v1783 = vadd.f32 %v1488, %v1719
    %v1784 = vadd.f32 %v1489, %v1720
    %v1785 = vadd.f32 %v1490, %v1721
    %v1786 = vadd.f32 %v1491, %v1722
    %v1787 = vadd.f32 %v1492, %v1723
    %v1788 = vadd.f32 %v1493, %v1724
    %v1789 = vadd.f32 %v1494, %v1725
    %v1790 = vadd.f32 %v1495, %v1726
    %v1791 = vadd.f32 %v1496, %v1727
    %v1792 = vadd.f32 %v1497, %v1728
    %v1793 = vadd.f32 %v1498, %v1729
    %v1794 = vadd.f32 %v1499, %v1730
    %v1795 = vadd.f32 %v1500, %v1731
    %v1796 = vadd.f32 %v1501, %v1732
    %v1797 = vadd.f32 %v1502, %v1733
    %v1798 = vadd.f32 %v1503, %v1734
    %v1799 = vadd.f32 %v1504, %v1735
    %v1800 = vadd.f32 %v1505, %v1736
    %v1801 = vadd.f32 %v1506, %v1737
    %v1802 = vadd.f32 %v1507, %v1738
    %v1803 = vadd.f32 %v1508, %v1739
    %v1804 = vadd.f32 %v1509, %v1740
    %v1805 = vadd.f32 %v1510, %v1741
    %v1806 = vadd.f32 %v1511, %v1742
    %v1807 = vadd.f32 %v1512, %v1743
    %v1808 = vadd.f32 %v1513, %v1744
    %v1809 = vadd.f32 %v1514, %v1745
    %v1810 = vadd.f32 %v1515, %v1746
    %v1811 = vadd.f32 %v1516, %v1747
    %v1812 = vadd.f32 %v1517, %v1748
    %v1813 = vadd.f32 %v1518, %v1749
    %v1814 = vadd.f32 %v1519, %v1750
    %v1815 = vadd.f32 %v1520, %v1751
    %v1816 = vadd.f32 %v1521, %v1752
    %v1817 = vadd.f32 %v1522, %v1753
    %v1818 = vadd.f32 %v1523, %v1754
    %v1819 = vadd.f32 %v1524, %v1755
    %v1820 = vadd.f32 %v1525, %v1756
    %v1821 = vadd.f32 %v1526, %v1757
    %v1822 = vadd.f32 %v1527, %v1758
    %v1823 = vadd.f32 %v1528, %v1759
    %v1824 = vadd.f32 %v1529, %v1760
    %v1825 = vadd.f32 %v1530, %v1761
    %v1826 = vadd.f32 %v1531, %v1762
    %v1827 = vadd.f32 %v1532, %v1763
    %v1828 = vadd.f32 %v1533, %v1764
    %v1829 = vadd.f32 %v1534, %v1765
    %v1830 = vadd.f32 %v1535, %v1766
    %v1831 = vadd.f32 %v1536, %v1767
    %v1832 = vadd.f32 %v1537, %v1768
    %v1833 = vadd.f32 %v1538, %v1769
    %v1834 = vadd.f32 %v1539, %v1770
    %v1835 = vadd.f32 %v1540, %v1771
    %v1836 = vadd.f32 %v1541, %v1772
    %v1837 = vadd.f32 %v1542, %v1773
    %v1838 = vtanh.pop %v1774
    %v1839 = vtanh.pop %v1775
    %v1840 = vtanh.pop %v1776
    %v1841 = vtanh.pop %v1777
    %v1842 = vtanh.pop %v1778
    %v1843 = vtanh.pop %v1779
    %v1844 = vtanh.pop %v1780
    %v1845 = vtanh.pop %v1781
    %v1846 = vtanh.pop %v1782
    %v1847 = vtanh.pop %v1783
    %v1848 = vtanh.pop %v1784
    %v1849 = vtanh.pop %v1785
    %v1850 = vtanh.pop %v1786
    %v1851 = vtanh.pop %v1787
    %v1852 = vtanh.pop %v1788
    %v1853 = vtanh.pop %v1789
    %v1854 = vtanh.pop %v1790
    %v1855 = vtanh.pop %v1791
    %v1856 = vtanh.pop %v1792
    %v1857 = vtanh.pop %v1793
    %v1858 = vtanh.pop %v1794
    %v1859 = vtanh.pop %v1795
    %v1860 = vtanh.pop %v1796
    %v1861 = vtanh.pop %v1797
    %v1862 = vtanh.pop %v1798
    %v1863 = vtanh.pop %v1799
    %v1864 = vtanh.pop %v1800
    %v1865 = vtanh.pop %v1801
    %v1866 = vtanh.pop %v1802
    %v1867 = vtanh.pop %v1803
    %v1868 = vtanh.pop %v1804
    %v1869 = vtanh.pop %v1805
    %v1870 = vtanh.pop %v1806
    %v1871 = vtanh.pop %v1807
    %v1872 = vtanh.pop %v1808
    %v1873 = vtanh.pop %v1809
    %v1874 = vtanh.pop %v1810
    %v1875 = vtanh.pop %v1811
    %v1876 = vtanh.pop %v1812
    %v1877 = vtanh.pop %v1813
    %v1878 = vtanh.pop %v1814
    %v1879 = vtanh.pop %v1815
    %v1880 = vtanh.pop %v1816
    %v1881 = vtanh.pop %v1817
    %v1882 = vtanh.pop %v1818
    %v1883 = vtanh.pop %v1819
    %v1884 = vtanh.pop %v1820
    %v1885 = vtanh.pop %v1821
    %v1886 = vtanh.pop %v1822
    %v1887 = vtanh.pop %v1823
    %v1888 = vtanh.pop %v1824
    %v1889 = vtanh.pop %v1825
    %v1890 = vtanh.pop %v1826
    %v1891 = vtanh.pop %v1827
    %v1892 = vtanh.pop %v1828
    %v1893 = vtanh.pop %v1829
    %v1894 = vtanh.pop %v1830
    %v1895 = vtanh.pop %v1831
    %v1896 = vtanh.pop %v1832
    %v1897 = vtanh.pop %v1833
    %v1898 = vtanh.pop %v1834
    %v1899 = vtanh.pop %v1835
    %v1900 = vtanh.pop %v1836
    %v1901 = vtanh.pop %v1837
    %1902 = vst [vmem:[#allocation13] sm:$0xff] %v1838
    %1903 = vst [vmem:[#allocation13 + $0x8] sm:$0xff] %v1839
    %1904 = vst [vmem:[#allocation13 + $0x10] sm:$0xff] %v1840
    %1905 = vst [vmem:[#allocation13 + $0x18] sm:$0xff] %v1841
    %1906 = vst [vmem:[#allocation13 + $0x20] sm:$0xff] %v1842
    %1907 = vst [vmem:[#allocation13 + $0x28] sm:$0xff] %v1843
    %1908 = vst [vmem:[#allocation13 + $0x30] sm:$0xff] %v1844
    %1909 = vst [vmem:[#allocation13 + $0x38] sm:$0xff] %v1845
    %1910 = vst [vmem:[#allocation13 + $0x40] sm:$0xff] %v1846
    %1911 = vst [vmem:[#allocation13 + $0x48] sm:$0xff] %v1847
    %1912 = vst [vmem:[#allocation13 + $0x50] sm:$0xff] %v1848
    %1913 = vst [vmem:[#allocation13 + $0x58] sm:$0xff] %v1849
    %1914 = vst [vmem:[#allocation13 + $0x60] sm:$0xff] %v1850
    %1915 = vst [vmem:[#allocation13 + $0x68] sm:$0xff] %v1851
    %1916 = vst [vmem:[#allocation13 + $0x70] sm:$0xff] %v1852
    %1917 = vst [vmem:[#allocation13 + $0x78] sm:$0xff] %v1853
    %1918 = vst [vmem:[#allocation13 + $0x80] sm:$0xff] %v1854
    %1919 = vst [vmem:[#allocation13 + $0x88] sm:$0xff] %v1855
    %1920 = vst [vmem:[#allocation13 + $0x90] sm:$0xff] %v1856
    %1921 = vst [vmem:[#allocation13 + $0x98] sm:$0xff] %v1857
    %1922 = vst [vmem:[#allocation13 + $0xa0] sm:$0xff] %v1858
    %1923 = vst [vmem:[#allocation13 + $0xa8] sm:$0xff] %v1859
    %1924 = vst [vmem:[#allocation13 + $0xb0] sm:$0xff] %v1860
    %1925 = vst [vmem:[#allocation13 + $0xb8] sm:$0xff] %v1861
    %1926 = vst [vmem:[#allocation13 + $0xc0] sm:$0xff] %v1862
    %1927 = vst [vmem:[#allocation13 + $0xc8] sm:$0xff] %v1863
    %1928 = vst [vmem:[#allocation13 + $0xd0] sm:$0xff] %v1864
    %1929 = vst [vmem:[#allocation13 + $0xd8] sm:$0xff] %v1865
    %1930 = vst [vmem:[#allocation13 + $0xe0] sm:$0xff] %v1866
    %1931 = vst [vmem:[#allocation13 + $0xe8] sm:$0xff] %v1867
    %1932 = vst [vmem:[#allocation13 + $0xf0] sm:$0xff] %v1868
    %1933 = vst [vmem:[#allocation13 + $0xf8] sm:$0xff] %v1869
    %1934 = vst [vmem:[#allocation13 + $0x100] sm:$0xff] %v1870
    %1935 = vst [vmem:[#allocation13 + $0x108] sm:$0xff] %v1871
    %1936 = vst [vmem:[#allocation13 + $0x110] sm:$0xff] %v1872
    %1937 = vst [vmem:[#allocation13 + $0x118] sm:$0xff] %v1873
    %1938 = vst [vmem:[#allocation13 + $0x120] sm:$0xff] %v1874
    %1939 = vst [vmem:[#allocation13 + $0x128] sm:$0xff] %v1875
    %1940 = vst [vmem:[#allocation13 + $0x130] sm:$0xff] %v1876
    %1941 = vst [vmem:[#allocation13 + $0x138] sm:$0xff] %v1877
    %1942 = vst [vmem:[#allocation13 + $0x140] sm:$0xff] %v1878
    %1943 = vst [vmem:[#allocation13 + $0x148] sm:$0xff] %v1879
    %1944 = vst [vmem:[#allocation13 + $0x150] sm:$0xff] %v1880
    %1945 = vst [vmem:[#allocation13 + $0x158] sm:$0xff] %v1881
    %1946 = vst [vmem:[#allocation13 + $0x160] sm:$0xff] %v1882
    %1947 = vst [vmem:[#allocation13 + $0x168] sm:$0xff] %v1883
    %1948 = vst [vmem:[#allocation13 + $0x170] sm:$0xff] %v1884
    %1949 = vst [vmem:[#allocation13 + $0x178] sm:$0xff] %v1885
    %1950 = vst [vmem:[#allocation13 + $0x180] sm:$0xff] %v1886
    %1951 = vst [vmem:[#allocation13 + $0x188] sm:$0xff] %v1887
    %1952 = vst [vmem:[#allocation13 + $0x190] sm:$0xff] %v1888
    %1953 = vst [vmem:[#allocation13 + $0x198] sm:$0xff] %v1889
    %1954 = vst [vmem:[#allocation13 + $0x1a0] sm:$0xff] %v1890
    %1955 = vst [vmem:[#allocation13 + $0x1a8] sm:$0xff] %v1891
    %1956 = vst [vmem:[#allocation13 + $0x1b0] sm:$0xff] %v1892
    %1957 = vst [vmem:[#allocation13 + $0x1b8] sm:$0xff] %v1893
    %1958 = vst [vmem:[#allocation13 + $0x1c0] sm:$0xff] %v1894
    %1959 = vst [vmem:[#allocation13 + $0x1c8] sm:$0xff] %v1895
    %1960 = vst [vmem:[#allocation13 + $0x1d0] sm:$0xff] %v1896
    %1961 = vst [vmem:[#allocation13 + $0x1d8] sm:$0xff] %v1897
    %1962 = vst [vmem:[#allocation13 + $0x1e0] sm:$0xff] %v1898
    %1963 = vst [vmem:[#allocation13 + $0x1e8] sm:$0xff] %v1899
    %1964 = vst [vmem:[#allocation13 + $0x1f0] sm:$0xff] %v1900
    %1965 = vst [vmem:[#allocation13 + $0x1f8] sm:$0xff] %v1901
    %v1966 = vld [vmem:[#allocation7] sm:$0xff]
    %v1967 = vld [vmem:[#allocation7 + $0x8] sm:$0xff]
    %v1968 = vld [vmem:[#allocation7 + $0x10] sm:$0xff]
    %v1969 = vld [vmem:[#allocation7 + $0x18] sm:$0xff]
    %v1970 = vld [vmem:[#allocation7 + $0x20] sm:$0xff]
    %v1971 = vld [vmem:[#allocation7 + $0x28] sm:$0xff]
    %v1972 = vld [vmem:[#allocation7 + $0x30] sm:$0xff]
    %v1973 = vld [vmem:[#allocation7 + $0x38] sm:$0xff]
    %v1974 = vld [vmem:[#allocation7 + $0x40] sm:$0xff]
    %v1975 = vld [vmem:[#allocation7 + $0x48] sm:$0xff]
    %v1976 = vld [vmem:[#allocation7 + $0x50] sm:$0xff]
    %v1977 = vld [vmem:[#allocation7 + $0x58] sm:$0xff]
    %v1978 = vld [vmem:[#allocation7 + $0x60] sm:$0xff]
    %v1979 = vld [vmem:[#allocation7 + $0x68] sm:$0xff]
    %v1980 = vld [vmem:[#allocation7 + $0x70] sm:$0xff]
    %v1981 = vld [vmem:[#allocation7 + $0x78] sm:$0xff]
    %v1982 = vld [vmem:[#allocation7 + $0x80] sm:$0xff]
    %v1983 = vld [vmem:[#allocation7 + $0x88] sm:$0xff]
    %v1984 = vld [vmem:[#allocation7 + $0x90] sm:$0xff]
    %v1985 = vld [vmem:[#allocation7 + $0x98] sm:$0xff]
    %v1986 = vld [vmem:[#allocation7 + $0xa0] sm:$0xff]
    %v1987 = vld [vmem:[#allocation7 + $0xa8] sm:$0xff]
    %v1988 = vld [vmem:[#allocation7 + $0xb0] sm:$0xff]
    %v1989 = vld [vmem:[#allocation7 + $0xb8] sm:$0xff]
    %v1990 = vld [vmem:[#allocation7 + $0xc0] sm:$0xff]
    %v1991 = vld [vmem:[#allocation7 + $0xc8] sm:$0xff]
    %v1992 = vld [vmem:[#allocation7 + $0xd0] sm:$0xff]
    %v1993 = vld [vmem:[#allocation7 + $0xd8] sm:$0xff]
    %v1994 = vld [vmem:[#allocation7 + $0xe0] sm:$0xff]
    %v1995 = vld [vmem:[#allocation7 + $0xe8] sm:$0xff]
    %v1996 = vld [vmem:[#allocation7 + $0xf0] sm:$0xff]
    %v1997 = vld [vmem:[#allocation7 + $0xf8] sm:$0xff]
    %v1998 = vld [vmem:[#allocation7 + $0x100] sm:$0xff]
    %v1999 = vld [vmem:[#allocation7 + $0x108] sm:$0xff]
    %v2000 = vld [vmem:[#allocation7 + $0x110] sm:$0xff]
    %v2001 = vld [vmem:[#allocation7 + $0x118] sm:$0xff]
    %v2002 = vld [vmem:[#allocation7 + $0x120] sm:$0xff]
    %v2003 = vld [vmem:[#allocation7 + $0x128] sm:$0xff]
    %v2004 = vld [vmem:[#allocation7 + $0x130] sm:$0xff]
    %v2005 = vld [vmem:[#allocation7 + $0x138] sm:$0xff]
    %v2006 = vld [vmem:[#allocation7 + $0x140] sm:$0xff]
    %v2007 = vld [vmem:[#allocation7 + $0x148] sm:$0xff]
    %v2008 = vld [vmem:[#allocation7 + $0x150] sm:$0xff]
    %v2009 = vld [vmem:[#allocation7 + $0x158] sm:$0xff]
    %v2010 = vld [vmem:[#allocation7 + $0x160] sm:$0xff]
    %v2011 = vld [vmem:[#allocation7 + $0x168] sm:$0xff]
    %v2012 = vld [vmem:[#allocation7 + $0x170] sm:$0xff]
    %v2013 = vld [vmem:[#allocation7 + $0x178] sm:$0xff]
    %v2014 = vld [vmem:[#allocation7 + $0x180] sm:$0xff]
    %v2015 = vld [vmem:[#allocation7 + $0x188] sm:$0xff]
    %v2016 = vld [vmem:[#allocation7 + $0x190] sm:$0xff]
    %v2017 = vld [vmem:[#allocation7 + $0x198] sm:$0xff]
    %v2018 = vld [vmem:[#allocation7 + $0x1a0] sm:$0xff]
    %v2019 = vld [vmem:[#allocation7 + $0x1a8] sm:$0xff]
    %v2020 = vld [vmem:[#allocation7 + $0x1b0] sm:$0xff]
    %v2021 = vld [vmem:[#allocation7 + $0x1b8] sm:$0xff]
    %v2022 = vld [vmem:[#allocation7 + $0x1c0] sm:$0xff]
    %v2023 = vld [vmem:[#allocation7 + $0x1c8] sm:$0xff]
    %v2024 = vld [vmem:[#allocation7 + $0x1d0] sm:$0xff]
    %v2025 = vld [vmem:[#allocation7 + $0x1d8] sm:$0xff]
    %v2026 = vld [vmem:[#allocation7 + $0x1e0] sm:$0xff]
    %v2027 = vld [vmem:[#allocation7 + $0x1e8] sm:$0xff]
    %v2028 = vld [vmem:[#allocation7 + $0x1f0] sm:$0xff]
    %v2029 = vld [vmem:[#allocation7 + $0x1f8] sm:$0xff]
    %v2030 = vld [vmem:[#allocation11] sm:$0xff]
    %v2031 = vld [vmem:[#allocation11 + $0x8] sm:$0xff]
    %v2032 = vld [vmem:[#allocation11 + $0x10] sm:$0xff]
    %v2033 = vld [vmem:[#allocation11 + $0x18] sm:$0xff]
    %v2034 = vld [vmem:[#allocation11 + $0x20] sm:$0xff]
    %v2035 = vld [vmem:[#allocation11 + $0x28] sm:$0xff]
    %v2036 = vld [vmem:[#allocation11 + $0x30] sm:$0xff]
    %v2037 = vld [vmem:[#allocation11 + $0x38] sm:$0xff]
    %v2038 = vld [vmem:[#allocation11 + $0x40] sm:$0xff]
    %v2039 = vld [vmem:[#allocation11 + $0x48] sm:$0xff]
    %v2040 = vld [vmem:[#allocation11 + $0x50] sm:$0xff]
    %v2041 = vld [vmem:[#allocation11 + $0x58] sm:$0xff]
    %v2042 = vld [vmem:[#allocation11 + $0x60] sm:$0xff]
    %v2043 = vld [vmem:[#allocation11 + $0x68] sm:$0xff]
    %v2044 = vld [vmem:[#allocation11 + $0x70] sm:$0xff]
    %v2045 = vld [vmem:[#allocation11 + $0x78] sm:$0xff]
    %v2046 = vld [vmem:[#allocation11 + $0x80] sm:$0xff]
    %v2047 = vld [vmem:[#allocation11 + $0x88] sm:$0xff]
    %v2048 = vld [vmem:[#allocation11 + $0x90] sm:$0xff]
    %v2049 = vld [vmem:[#allocation11 + $0x98] sm:$0xff]
    %v2050 = vld [vmem:[#allocation11 + $0xa0] sm:$0xff]
    %v2051 = vld [vmem:[#allocation11 + $0xa8] sm:$0xff]
    %v2052 = vld [vmem:[#allocation11 + $0xb0] sm:$0xff]
    %v2053 = vld [vmem:[#allocation11 + $0xb8] sm:$0xff]
    %v2054 = vld [vmem:[#allocation11 + $0xc0] sm:$0xff]
    %v2055 = vld [vmem:[#allocation11 + $0xc8] sm:$0xff]
    %v2056 = vld [vmem:[#allocation11 + $0xd0] sm:$0xff]
    %v2057 = vld [vmem:[#allocation11 + $0xd8] sm:$0xff]
    %v2058 = vld [vmem:[#allocation11 + $0xe0] sm:$0xff]
    %v2059 = vld [vmem:[#allocation11 + $0xe8] sm:$0xff]
    %v2060 = vld [vmem:[#allocation11 + $0xf0] sm:$0xff]
    %v2061 = vld [vmem:[#allocation11 + $0xf8] sm:$0xff]
    %v2062 = vld [vmem:[#allocation11 + $0x100] sm:$0xff]
    %v2063 = vld [vmem:[#allocation11 + $0x108] sm:$0xff]
    %v2064 = vld [vmem:[#allocation11 + $0x110] sm:$0xff]
    %v2065 = vld [vmem:[#allocation11 + $0x118] sm:$0xff]
    %v2066 = vld [vmem:[#allocation11 + $0x120] sm:$0xff]
    %v2067 = vld [vmem:[#allocation11 + $0x128] sm:$0xff]
    %v2068 = vld [vmem:[#allocation11 + $0x130] sm:$0xff]
    %v2069 = vld [vmem:[#allocation11 + $0x138] sm:$0xff]
    %v2070 = vld [vmem:[#allocation11 + $0x140] sm:$0xff]
    %v2071 = vld [vmem:[#allocation11 + $0x148] sm:$0xff]
    %v2072 = vld [vmem:[#allocation11 + $0x150] sm:$0xff]
    %v2073 = vld [vmem:[#allocation11 + $0x158] sm:$0xff]
    %v2074 = vld [vmem:[#allocation11 + $0x160] sm:$0xff]
    %v2075 = vld [vmem:[#allocation11 + $0x168] sm:$0xff]
    %v2076 = vld [vmem:[#allocation11 + $0x170] sm:$0xff]
    %v2077 = vld [vmem:[#allocation11 + $0x178] sm:$0xff]
    %v2078 = vld [vmem:[#allocation11 + $0x180] sm:$0xff]
    %v2079 = vld [vmem:[#allocation11 + $0x188] sm:$0xff]
    %v2080 = vld [vmem:[#allocation11 + $0x190] sm:$0xff]
    %v2081 = vld [vmem:[#allocation11 + $0x198] sm:$0xff]
    %v2082 = vld [vmem:[#allocation11 + $0x1a0] sm:$0xff]
    %v2083 = vld [vmem:[#allocation11 + $0x1a8] sm:$0xff]
    %v2084 = vld [vmem:[#allocation11 + $0x1b0] sm:$0xff]
    %v2085 = vld [vmem:[#allocation11 + $0x1b8] sm:$0xff]
    %v2086 = vld [vmem:[#allocation11 + $0x1c0] sm:$0xff]
    %v2087 = vld [vmem:[#allocation11 + $0x1c8] sm:$0xff]
    %v2088 = vld [vmem:[#allocation11 + $0x1d0] sm:$0xff]
    %v2089 = vld [vmem:[#allocation11 + $0x1d8] sm:$0xff]
    %v2090 = vld [vmem:[#allocation11 + $0x1e0] sm:$0xff]
    %v2091 = vld [vmem:[#allocation11 + $0x1e8] sm:$0xff]
    %v2092 = vld [vmem:[#allocation11 + $0x1f0] sm:$0xff]
    %v2093 = vld [vmem:[#allocation11 + $0x1f8] sm:$0xff]
    %v2094 = vld [vmem:[%s10] sm:$0x3]
    %v2096 = vperm.slane %v2094, 0
    %v2097 = vperm.slane %v2094, 1
    %2100 = vmatpush.msra.mxu0 %v2060
    %2101 = vmatpush.msra.mxu0 %v2058
    %2102 = vmatpush.msra.mxu0 %v2056
    %2103 = vmatpush.msra.mxu0 %v2054
    %2104 = vmatpush.msra.mxu0 %v2052
    %2105 = vmatpush.msra.mxu0 %v2050
    %2106 = vmatpush.msra.mxu0 %v2048
    %2107 = vmatpush.msra.mxu0 %v2046
    %2108 = vmatpush.msra.mxu0 %v2044
    %2109 = vmatpush.msra.mxu0 %v2042
    %2110 = vmatpush.msra.mxu0 %v2040
    %2111 = vmatpush.msra.mxu0 %v2038
    %2112 = vmatpush.msra.mxu0 %v2036
    %2113 = vmatpush.msra.mxu0 %v2034
    %2114 = vmatpush.msra.mxu0 %v2032
    %2115 = vmatpush.msra.mxu0 %v2030
    %2116 = vmatmul.f32.gmra.mxu0 %v1966
    %v2117 = vpop.f32.mrf.mxu0
    %v2118 = vadd.f32 %v2096, %v2117
    %2119 = vmatmul.f32.gmra.mxu0 %v1968
    %v2120 = vpop.f32.mrf.mxu0
    %v2121 = vadd.f32 %v2096, %v2120
    %2122 = vmatmul.f32.gmra.mxu0 %v1970
    %v2123 = vpop.f32.mrf.mxu0
    %v2124 = vadd.f32 %v2096, %v2123
    %2125 = vmatmul.f32.gmra.mxu0 %v1972
    %v2126 = vpop.f32.mrf.mxu0
    %v2127 = vadd.f32 %v2096, %v2126
    %2128 = vmatmul.f32.gmra.mxu0 %v1974
    %v2129 = vpop.f32.mrf.mxu0
    %v2130 = vadd.f32 %v2096, %v2129
    %2131 = vmatmul.f32.gmra.mxu0 %v1976
    %v2132 = vpop.f32.mrf.mxu0
    %v2133 = vadd.f32 %v2096, %v2132
    %2134 = vmatmul.f32.gmra.mxu0 %v1978
    %v2135 = vpop.f32.mrf.mxu0
    %v2136 = vadd.f32 %v2096, %v2135
    %2137 = vmatmul.f32.gmra.mxu0 %v1980
    %v2138 = vpop.f32.mrf.mxu0
    %v2139 = vadd.f32 %v2096, %v2138
    %2140 = vmatmul.f32.gmra.mxu0 %v1982
    %v2141 = vpop.f32.mrf.mxu0
    %v2142 = vadd.f32 %v2096, %v2141
    %2143 = vmatmul.f32.gmra.mxu0 %v1984
    %v2144 = vpop.f32.mrf.mxu0
    %v2145 = vadd.f32 %v2096, %v2144
    %2146 = vmatmul.f32.gmra.mxu0 %v1986
    %v2147 = vpop.f32.mrf.mxu0
    %v2148 = vadd.f32 %v2096, %v2147
    %2149 = vmatmul.f32.gmra.mxu0 %v1988
    %v2150 = vpop.f32.mrf.mxu0
    %v2151 = vadd.f32 %v2096, %v2150
    %2152 = vmatmul.f32.gmra.mxu0 %v1990
    %v2153 = vpop.f32.mrf.mxu0
    %v2154 = vadd.f32 %v2096, %v2153
    %2155 = vmatmul.f32.gmra.mxu0 %v1992
    %v2156 = vpop.f32.mrf.mxu0
    %v2157 = vadd.f32 %v2096, %v2156
    %2158 = vmatmul.f32.gmra.mxu0 %v1994
    %v2159 = vpop.f32.mrf.mxu0
    %v2160 = vadd.f32 %v2096, %v2159
    %2161 = vmatmul.f32.gmra.mxu0 %v1996
    %v2162 = vpop.f32.mrf.mxu0
    %v2163 = vadd.f32 %v2096, %v2162
    %2164 = vmatmul.f32.gmra.mxu0 %v1998
    %v2165 = vpop.f32.mrf.mxu0
    %v2166 = vadd.f32 %v2096, %v2165
    %2167 = vmatmul.f32.gmra.mxu0 %v2000
    %v2168 = vpop.f32.mrf.mxu0
    %v2169 = vadd.f32 %v2096, %v2168
    %2170 = vmatmul.f32.gmra.mxu0 %v2002
    %v2171 = vpop.f32.mrf.mxu0
    %v2172 = vadd.f32 %v2096, %v2171
    %2173 = vmatmul.f32.gmra.mxu0 %v2004
    %v2174 = vpop.f32.mrf.mxu0
    %v2175 = vadd.f32 %v2096, %v2174
    %2176 = vmatmul.f32.gmra.mxu0 %v2006
    %v2177 = vpop.f32.mrf.mxu0
    %v2178 = vadd.f32 %v2096, %v2177
    %2179 = vmatmul.f32.gmra.mxu0 %v2008
    %v2180 = vpop.f32.mrf.mxu0
    %v2181 = vadd.f32 %v2096, %v2180
    %2182 = vmatmul.f32.gmra.mxu0 %v2010
    %v2183 = vpop.f32.mrf.mxu0
    %v2184 = vadd.f32 %v2096, %v2183
    %2185 = vmatmul.f32.gmra.mxu0 %v2012
    %v2186 = vpop.f32.mrf.mxu0
    %v2187 = vadd.f32 %v2096, %v2186
    %2188 = vmatmul.f32.gmra.mxu0 %v2014
    %v2189 = vpop.f32.mrf.mxu0
    %v2190 = vadd.f32 %v2096, %v2189
    %2191 = vmatmul.f32.gmra.mxu0 %v2016
    %v2192 = vpop.f32.mrf.mxu0
    %v2193 = vadd.f32 %v2096, %v2192
    %2194 = vmatmul.f32.gmra.mxu0 %v2018
    %v2195 = vpop.f32.mrf.mxu0
    %v2196 = vadd.f32 %v2096, %v2195
    %2197 = vmatmul.f32.gmra.mxu0 %v2020
    %v2198 = vpop.f32.mrf.mxu0
    %v2199 = vadd.f32 %v2096, %v2198
    %2200 = vmatmul.f32.gmra.mxu0 %v2022
    %v2201 = vpop.f32.mrf.mxu0
    %v2202 = vadd.f32 %v2096, %v2201
    %2203 = vmatmul.f32.gmra.mxu0 %v2024
    %v2204 = vpop.f32.mrf.mxu0
    %v2205 = vadd.f32 %v2096, %v2204
    %2206 = vmatmul.f32.gmra.mxu0 %v2026
    %v2207 = vpop.f32.mrf.mxu0
    %v2208 = vadd.f32 %v2096, %v2207
    %2209 = vmatmul.f32.gmra.mxu0 %v2028
    %v2210 = vpop.f32.mrf.mxu0
    %v2211 = vadd.f32 %v2096, %v2210
    %2212 = vdwg.mxu0
    %2213 = vmatpush.msra.mxu0 %v2092
    %2214 = vmatpush.msra.mxu0 %v2090
    %2215 = vmatpush.msra.mxu0 %v2088
    %2216 = vmatpush.msra.mxu0 %v2086
    %2217 = vmatpush.msra.mxu0 %v2084
    %2218 = vmatpush.msra.mxu0 %v2082
    %2219 = vmatpush.msra.mxu0 %v2080
    %2220 = vmatpush.msra.mxu0 %v2078
    %2221 = vmatpush.msra.mxu0 %v2076
    %2222 = vmatpush.msra.mxu0 %v2074
    %2223 = vmatpush.msra.mxu0 %v2072
    %2224 = vmatpush.msra.mxu0 %v2070
    %2225 = vmatpush.msra.mxu0 %v2068
    %2226 = vmatpush.msra.mxu0 %v2066
    %2227 = vmatpush.msra.mxu0 %v2064
    %2228 = vmatpush.msra.mxu0 %v2062
    %2229 = vmatmul.f32.gmra.mxu0 %v1967
    %v2230 = vpop.f32.mrf.mxu0
    %v2231 = vadd.f32 %v2118, %v2230
    %2232 = vmatmul.f32.gmra.mxu0 %v1969
    %v2233 = vpop.f32.mrf.mxu0
    %v2234 = vadd.f32 %v2121, %v2233
    %2235 = vmatmul.f32.gmra.mxu0 %v1971
    %v2236 = vpop.f32.mrf.mxu0
    %v2237 = vadd.f32 %v2124, %v2236
    %2238 = vmatmul.f32.gmra.mxu0 %v1973
    %v2239 = vpop.f32.mrf.mxu0
    %v2240 = vadd.f32 %v2127, %v2239
    %2241 = vmatmul.f32.gmra.mxu0 %v1975
    %v2242 = vpop.f32.mrf.mxu0
    %v2243 = vadd.f32 %v2130, %v2242
    %2244 = vmatmul.f32.gmra.mxu0 %v1977
    %v2245 = vpop.f32.mrf.mxu0
    %v2246 = vadd.f32 %v2133, %v2245
    %2247 = vmatmul.f32.gmra.mxu0 %v1979
    %v2248 = vpop.f32.mrf.mxu0
    %v2249 = vadd.f32 %v2136, %v2248
    %2250 = vmatmul.f32.gmra.mxu0 %v1981
    %v2251 = vpop.f32.mrf.mxu0
    %v2252 = vadd.f32 %v2139, %v2251
    %2253 = vmatmul.f32.gmra.mxu0 %v1983
    %v2254 = vpop.f32.mrf.mxu0
    %v2255 = vadd.f32 %v2142, %v2254
    %2256 = vmatmul.f32.gmra.mxu0 %v1985
    %v2257 = vpop.f32.mrf.mxu0
    %v2258 = vadd.f32 %v2145, %v2257
    %2259 = vmatmul.f32.gmra.mxu0 %v1987
    %v2260 = vpop.f32.mrf.mxu0
    %v2261 = vadd.f32 %v2148, %v2260
    %2262 = vmatmul.f32.gmra.mxu0 %v1989
    %v2263 = vpop.f32.mrf.mxu0
    %v2264 = vadd.f32 %v2151, %v2263
    %2265 = vmatmul.f32.gmra.mxu0 %v1991
    %v2266 = vpop.f32.mrf.mxu0
    %v2267 = vadd.f32 %v2154, %v2266
    %2268 = vmatmul.f32.gmra.mxu0 %v1993
    %v2269 = vpop.f32.mrf.mxu0
    %v2270 = vadd.f32 %v2157, %v2269
    %2271 = vmatmul.f32.gmra.mxu0 %v1995
    %v2272 = vpop.f32.mrf.mxu0
    %v2273 = vadd.f32 %v2160, %v2272
    %2274 = vmatmul.f32.gmra.mxu0 %v1997
    %v2275 = vpop.f32.mrf.mxu0
    %v2276 = vadd.f32 %v2163, %v2275
    %2277 = vmatmul.f32.gmra.mxu0 %v1999
    %v2278 = vpop.f32.mrf.mxu0
    %v2279 = vadd.f32 %v2166, %v2278
    %2280 = vmatmul.f32.gmra.mxu0 %v2001
    %v2281 = vpop.f32.mrf.mxu0
    %v2282 = vadd.f32 %v2169, %v2281
    %2283 = vmatmul.f32.gmra.mxu0 %v2003
    %v2284 = vpop.f32.mrf.mxu0
    %v2285 = vadd.f32 %v2172, %v2284
    %2286 = vmatmul.f32.gmra.mxu0 %v2005
    %v2287 = vpop.f32.mrf.mxu0
    %v2288 = vadd.f32 %v2175, %v2287
    %2289 = vmatmul.f32.gmra.mxu0 %v2007
    %v2290 = vpop.f32.mrf.mxu0
    %v2291 = vadd.f32 %v2178, %v2290
    %2292 = vmatmul.f32.gmra.mxu0 %v2009
    %v2293 = vpop.f32.mrf.mxu0
    %v2294 = vadd.f32 %v2181, %v2293
    %2295 = vmatmul.f32.gmra.mxu0 %v2011
    %v2296 = vpop.f32.mrf.mxu0
    %v2297 = vadd.f32 %v2184, %v2296
    %2298 = vmatmul.f32.gmra.mxu0 %v2013
    %v2299 = vpop.f32.mrf.mxu0
    %v2300 = vadd.f32 %v2187, %v2299
    %2301 = vmatmul.f32.gmra.mxu0 %v2015
    %v2302 = vpop.f32.mrf.mxu0
    %v2303 = vadd.f32 %v2190, %v2302
    %2304 = vmatmul.f32.gmra.mxu0 %v2017
    %v2305 = vpop.f32.mrf.mxu0
    %v2306 = vadd.f32 %v2193, %v2305
    %2307 = vmatmul.f32.gmra.mxu0 %v2019
    %v2308 = vpop.f32.mrf.mxu0
    %v2309 = vadd.f32 %v2196, %v2308
    %2310 = vmatmul.f32.gmra.mxu0 %v2021
    %v2311 = vpop.f32.mrf.mxu0
    %v2312 = vadd.f32 %v2199, %v2311
    %2313 = vmatmul.f32.gmra.mxu0 %v2023
    %v2314 = vpop.f32.mrf.mxu0
    %v2315 = vadd.f32 %v2202, %v2314
    %2316 = vmatmul.f32.gmra.mxu0 %v2025
    %v2317 = vpop.f32.mrf.mxu0
    %v2318 = vadd.f32 %v2205, %v2317
    %2319 = vmatmul.f32.gmra.mxu0 %v2027
    %v2320 = vpop.f32.mrf.mxu0
    %v2321 = vadd.f32 %v2208, %v2320
    %2322 = vmatmul.f32.gmra.mxu0 %v2029
    %v2323 = vpop.f32.mrf.mxu0
    %v2324 = vadd.f32 %v2211, %v2323
    %2325 = vdwg.mxu0
    %2326 = vmatpush.msra.mxu0 %v2061
    %2327 = vmatpush.msra.mxu0 %v2059
    %2328 = vmatpush.msra.mxu0 %v2057
    %2329 = vmatpush.msra.mxu0 %v2055
    %2330 = vmatpush.msra.mxu0 %v2053
    %2331 = vmatpush.msra.mxu0 %v2051
    %2332 = vmatpush.msra.mxu0 %v2049
    %2333 = vmatpush.msra.mxu0 %v2047
    %2334 = vmatpush.msra.mxu0 %v2045
    %2335 = vmatpush.msra.mxu0 %v2043
    %2336 = vmatpush.msra.mxu0 %v2041
    %2337 = vmatpush.msra.mxu0 %v2039
    %2338 = vmatpush.msra.mxu0 %v2037
    %2339 = vmatpush.msra.mxu0 %v2035
    %2340 = vmatpush.msra.mxu0 %v2033
    %2341 = vmatpush.msra.mxu0 %v2031
    %2342 = vmatmul.f32.gmra.mxu0 %v1966
    %v2343 = vpop.f32.mrf.mxu0
    %v2344 = vadd.f32 %v2097, %v2343
    %2345 = vmatmul.f32.gmra.mxu0 %v1968
    %v2346 = vpop.f32.mrf.mxu0
    %v2347 = vadd.f32 %v2097, %v2346
    %2348 = vmatmul.f32.gmra.mxu0 %v1970
    %v2349 = vpop.f32.mrf.mxu0
    %v2350 = vadd.f32 %v2097, %v2349
    %2351 = vmatmul.f32.gmra.mxu0 %v1972
    %v2352 = vpop.f32.mrf.mxu0
    %v2353 = vadd.f32 %v2097, %v2352
    %2354 = vmatmul.f32.gmra.mxu0 %v1974
    %v2355 = vpop.f32.mrf.mxu0
    %v2356 = vadd.f32 %v2097, %v2355
    %2357 = vmatmul.f32.gmra.mxu0 %v1976
    %v2358 = vpop.f32.mrf.mxu0
    %v2359 = vadd.f32 %v2097, %v2358
    %2360 = vmatmul.f32.gmra.mxu0 %v1978
    %v2361 = vpop.f32.mrf.mxu0
    %v2362 = vadd.f32 %v2097, %v2361
    %2363 = vmatmul.f32.gmra.mxu0 %v1980
    %v2364 = vpop.f32.mrf.mxu0
    %v2365 = vadd.f32 %v2097, %v2364
    %2366 = vmatmul.f32.gmra.mxu0 %v1982
    %v2367 = vpop.f32.mrf.mxu0
    %v2368 = vadd.f32 %v2097, %v2367
    %2369 = vmatmul.f32.gmra.mxu0 %v1984
    %v2370 = vpop.f32.mrf.mxu0
    %v2371 = vadd.f32 %v2097, %v2370
    %2372 = vmatmul.f32.gmra.mxu0 %v1986
    %v2373 = vpop.f32.mrf.mxu0
    %v2374 = vadd.f32 %v2097, %v2373
    %2375 = vmatmul.f32.gmra.mxu0 %v1988
    %v2376 = vpop.f32.mrf.mxu0
    %v2377 = vadd.f32 %v2097, %v2376
    %2378 = vmatmul.f32.gmra.mxu0 %v1990
    %v2379 = vpop.f32.mrf.mxu0
    %v2380 = vadd.f32 %v2097, %v2379
    %2381 = vmatmul.f32.gmra.mxu0 %v1992
    %v2382 = vpop.f32.mrf.mxu0
    %v2383 = vadd.f32 %v2097, %v2382
    %2384 = vmatmul.f32.gmra.mxu0 %v1994
    %v2385 = vpop.f32.mrf.mxu0
    %v2386 = vadd.f32 %v2097, %v2385
    %2387 = vmatmul.f32.gmra.mxu0 %v1996
    %v2388 = vpop.f32.mrf.mxu0
    %v2389 = vadd.f32 %v2097, %v2388
    %2390 = vmatmul.f32.gmra.mxu0 %v1998
    %v2391 = vpop.f32.mrf.mxu0
    %v2392 = vadd.f32 %v2097, %v2391
    %2393 = vmatmul.f32.gmra.mxu0 %v2000
    %v2394 = vpop.f32.mrf.mxu0
    %v2395 = vadd.f32 %v2097, %v2394
    %2396 = vmatmul.f32.gmra.mxu0 %v2002
    %v2397 = vpop.f32.mrf.mxu0
    %v2398 = vadd.f32 %v2097, %v2397
    %2399 = vmatmul.f32.gmra.mxu0 %v2004
    %v2400 = vpop.f32.mrf.mxu0
    %v2401 = vadd.f32 %v2097, %v2400
    %2402 = vmatmul.f32.gmra.mxu0 %v2006
    %v2403 = vpop.f32.mrf.mxu0
    %v2404 = vadd.f32 %v2097, %v2403
    %2405 = vmatmul.f32.gmra.mxu0 %v2008
    %v2406 = vpop.f32.mrf.mxu0
    %v2407 = vadd.f32 %v2097, %v2406
    %2408 = vmatmul.f32.gmra.mxu0 %v2010
    %v2409 = vpop.f32.mrf.mxu0
    %v2410 = vadd.f32 %v2097, %v2409
    %2411 = vmatmul.f32.gmra.mxu0 %v2012
    %v2412 = vpop.f32.mrf.mxu0
    %v2413 = vadd.f32 %v2097, %v2412
    %2414 = vmatmul.f32.gmra.mxu0 %v2014
    %v2415 = vpop.f32.mrf.mxu0
    %v2416 = vadd.f32 %v2097, %v2415
    %2417 = vmatmul.f32.gmra.mxu0 %v2016
    %v2418 = vpop.f32.mrf.mxu0
    %v2419 = vadd.f32 %v2097, %v2418
    %2420 = vmatmul.f32.gmra.mxu0 %v2018
    %v2421 = vpop.f32.mrf.mxu0
    %v2422 = vadd.f32 %v2097, %v2421
    %2423 = vmatmul.f32.gmra.mxu0 %v2020
    %v2424 = vpop.f32.mrf.mxu0
    %v2425 = vadd.f32 %v2097, %v2424
    %2426 = vmatmul.f32.gmra.mxu0 %v2022
    %v2427 = vpop.f32.mrf.mxu0
    %v2428 = vadd.f32 %v2097, %v2427
    %2429 = vmatmul.f32.gmra.mxu0 %v2024
    %v2430 = vpop.f32.mrf.mxu0
    %v2431 = vadd.f32 %v2097, %v2430
    %2432 = vmatmul.f32.gmra.mxu0 %v2026
    %v2433 = vpop.f32.mrf.mxu0
    %v2434 = vadd.f32 %v2097, %v2433
    %2435 = vmatmul.f32.gmra.mxu0 %v2028
    %v2436 = vpop.f32.mrf.mxu0
    %v2437 = vadd.f32 %v2097, %v2436
    %2438 = vdwg.mxu0
    %2439 = vmatpush.msra.mxu0 %v2093
    %2440 = vmatpush.msra.mxu0 %v2091
    %2441 = vmatpush.msra.mxu0 %v2089
    %2442 = vmatpush.msra.mxu0 %v2087
    %2443 = vmatpush.msra.mxu0 %v2085
    %2444 = vmatpush.msra.mxu0 %v2083
    %2445 = vmatpush.msra.mxu0 %v2081
    %2446 = vmatpush.msra.mxu0 %v2079
    %2447 = vmatpush.msra.mxu0 %v2077
    %2448 = vmatpush.msra.mxu0 %v2075
    %2449 = vmatpush.msra.mxu0 %v2073
    %2450 = vmatpush.msra.mxu0 %v2071
    %2451 = vmatpush.msra.mxu0 %v2069
    %2452 = vmatpush.msra.mxu0 %v2067
    %2453 = vmatpush.msra.mxu0 %v2065
    %2454 = vmatpush.msra.mxu0 %v2063
    %2455 = vmatmul.f32.gmra.mxu0 %v1967
    %v2456 = vpop.f32.mrf.mxu0
    %v2457 = vadd.f32 %v2344, %v2456
    %2458 = vmatmul.f32.gmra.mxu0 %v1969
    %v2459 = vpop.f32.mrf.mxu0
    %v2460 = vadd.f32 %v2347, %v2459
    %2461 = vmatmul.f32.gmra.mxu0 %v1971
    %v2462 = vpop.f32.mrf.mxu0
    %v2463 = vadd.f32 %v2350, %v2462
    %2464 = vmatmul.f32.gmra.mxu0 %v1973
    %v2465 = vpop.f32.mrf.mxu0
    %v2466 = vadd.f32 %v2353, %v2465
    %2467 = vmatmul.f32.gmra.mxu0 %v1975
    %v2468 = vpop.f32.mrf.mxu0
    %v2469 = vadd.f32 %v2356, %v2468
    %2470 = vmatmul.f32.gmra.mxu0 %v1977
    %v2471 = vpop.f32.mrf.mxu0
    %v2472 = vadd.f32 %v2359, %v2471
    %2473 = vmatmul.f32.gmra.mxu0 %v1979
    %v2474 = vpop.f32.mrf.mxu0
    %v2475 = vadd.f32 %v2362, %v2474
    %2476 = vmatmul.f32.gmra.mxu0 %v1981
    %v2477 = vpop.f32.mrf.mxu0
    %v2478 = vadd.f32 %v2365, %v2477
    %2479 = vmatmul.f32.gmra.mxu0 %v1983
    %v2480 = vpop.f32.mrf.mxu0
    %v2481 = vadd.f32 %v2368, %v2480
    %2482 = vmatmul.f32.gmra.mxu0 %v1985
    %v2483 = vpop.f32.mrf.mxu0
    %v2484 = vadd.f32 %v2371, %v2483
    %2485 = vmatmul.f32.gmra.mxu0 %v1987
    %v2486 = vpop.f32.mrf.mxu0
    %v2487 = vadd.f32 %v2374, %v2486
    %2488 = vmatmul.f32.gmra.mxu0 %v1989
    %v2489 = vpop.f32.mrf.mxu0
    %v2490 = vadd.f32 %v2377, %v2489
    %2491 = vmatmul.f32.gmra.mxu0 %v1991
    %v2492 = vpop.f32.mrf.mxu0
    %v2493 = vadd.f32 %v2380, %v2492
    %2494 = vmatmul.f32.gmra.mxu0 %v1993
    %v2495 = vpop.f32.mrf.mxu0
    %v2496 = vadd.f32 %v2383, %v2495
    %2497 = vmatmul.f32.gmra.mxu0 %v1995
    %v2498 = vpop.f32.mrf.mxu0
    %v2499 = vadd.f32 %v2386, %v2498
    %2500 = vmatmul.f32.gmra.mxu0 %v1997
    %v2501 = vpop.f32.mrf.mxu0
    %v2502 = vadd.f32 %v2389, %v2501
    %2503 = vmatmul.f32.gmra.mxu0 %v1999
    %v2504 = vpop.f32.mrf.mxu0
    %v2505 = vadd.f32 %v2392, %v2504
    %2506 = vmatmul.f32.gmra.mxu0 %v2001
    %v2507 = vpop.f32.mrf.mxu0
    %v2508 = vadd.f32 %v2395, %v2507
    %2509 = vmatmul.f32.gmra.mxu0 %v2003
    %v2510 = vpop.f32.mrf.mxu0
    %v2511 = vadd.f32 %v2398, %v2510
    %2512 = vmatmul.f32.gmra.mxu0 %v2005
    %v2513 = vpop.f32.mrf.mxu0
    %v2514 = vadd.f32 %v2401, %v2513
    %2515 = vmatmul.f32.gmra.mxu0 %v2007
    %v2516 = vpop.f32.mrf.mxu0
    %v2517 = vadd.f32 %v2404, %v2516
    %2518 = vmatmul.f32.gmra.mxu0 %v2009
    %v2519 = vpop.f32.mrf.mxu0
    %v2520 = vadd.f32 %v2407, %v2519
    %2521 = vmatmul.f32.gmra.mxu0 %v2011
    %v2522 = vpop.f32.mrf.mxu0
    %v2523 = vadd.f32 %v2410, %v2522
    %2524 = vmatmul.f32.gmra.mxu0 %v2013
    %v2525 = vpop.f32.mrf.mxu0
    %v2526 = vadd.f32 %v2413, %v2525
    %2527 = vmatmul.f32.gmra.mxu0 %v2015
    %v2528 = vpop.f32.mrf.mxu0
    %v2529 = vadd.f32 %v2416, %v2528
    %2530 = vmatmul.f32.gmra.mxu0 %v2017
    %v2531 = vpop.f32.mrf.mxu0
    %v2532 = vadd.f32 %v2419, %v2531
    %2533 = vmatmul.f32.gmra.mxu0 %v2019
    %v2534 = vpop.f32.mrf.mxu0
    %v2535 = vadd.f32 %v2422, %v2534
    %2536 = vmatmul.f32.gmra.mxu0 %v2021
    %v2537 = vpop.f32.mrf.mxu0
    %v2538 = vadd.f32 %v2425, %v2537
    %2539 = vmatmul.f32.gmra.mxu0 %v2023
    %v2540 = vpop.f32.mrf.mxu0
    %v2541 = vadd.f32 %v2428, %v2540
    %2542 = vmatmul.f32.gmra.mxu0 %v2025
    %v2543 = vpop.f32.mrf.mxu0
    %v2544 = vadd.f32 %v2431, %v2543
    %2545 = vmatmul.f32.gmra.mxu0 %v2027
    %v2546 = vpop.f32.mrf.mxu0
    %v2547 = vadd.f32 %v2434, %v2546
    %2548 = vmatmul.f32.gmra.mxu0 %v2029
    %v2549 = vpop.f32.mrf.mxu0
    %v2550 = vadd.f32 %v2437, %v2549
    %2551 = vdwg.mxu0
    %v2552 = vld [vmem:[%s6] ss:$2 sm:$0x3]
    %v2554 = vperm.slane %v2552, 0
    %v2555 = vperm.slane %v2552, 1
    %v2558 = vmul.f32 %v1253, %v2554
    %v2559 = vmul.f32 %v1253, %v2555
    %v2560 = vmul.f32 %v1258, %v2554
    %v2561 = vmul.f32 %v1258, %v2555
    %v2562 = vmul.f32 %v1263, %v2554
    %v2563 = vmul.f32 %v1263, %v2555
    %v2564 = vmul.f32 %v1268, %v2554
    %v2565 = vmul.f32 %v1268, %v2555
    %v2566 = vmul.f32 %v1273, %v2554
    %v2567 = vmul.f32 %v1273, %v2555
    %v2568 = vmul.f32 %v1278, %v2554
    %v2569 = vmul.f32 %v1278, %v2555
    %v2570 = vmul.f32 %v1283, %v2554
    %v2571 = vmul.f32 %v1283, %v2555
    %v2572 = vmul.f32 %v1288, %v2554
    %v2573 = vmul.f32 %v1288, %v2555
    %v2574 = vmul.f32 %v1293, %v2554
    %v2575 = vmul.f32 %v1293, %v2555
    %v2576 = vmul.f32 %v1298, %v2554
    %v2577 = vmul.f32 %v1298, %v2555
    %v2578 = vmul.f32 %v1303, %v2554
    %v2579 = vmul.f32 %v1303, %v2555
    %v2580 = vmul.f32 %v1308, %v2554
    %v2581 = vmul.f32 %v1308, %v2555
    %v2582 = vmul.f32 %v1313, %v2554
    %v2583 = vmul.f32 %v1313, %v2555
    %v2584 = vmul.f32 %v1318, %v2554
    %v2585 = vmul.f32 %v1318, %v2555
    %v2586 = vmul.f32 %v1323, %v2554
    %v2587 = vmul.f32 %v1323, %v2555
    %v2588 = vmul.f32 %v1328, %v2554
    %v2589 = vmul.f32 %v1328, %v2555
    %v2590 = vmul.f32 %v1333, %v2554
    %v2591 = vmul.f32 %v1333, %v2555
    %v2592 = vmul.f32 %v1338, %v2554
    %v2593 = vmul.f32 %v1338, %v2555
    %v2594 = vmul.f32 %v1343, %v2554
    %v2595 = vmul.f32 %v1343, %v2555
    %v2596 = vmul.f32 %v1348, %v2554
    %v2597 = vmul.f32 %v1348, %v2555
    %v2598 = vmul.f32 %v1353, %v2554
    %v2599 = vmul.f32 %v1353, %v2555
    %v2600 = vmul.f32 %v1358, %v2554
    %v2601 = vmul.f32 %v1358, %v2555
    %v2602 = vmul.f32 %v1363, %v2554
    %v2603 = vmul.f32 %v1363, %v2555
    %v2604 = vmul.f32 %v1368, %v2554
    %v2605 = vmul.f32 %v1368, %v2555
    %v2606 = vmul.f32 %v1373, %v2554
    %v2607 = vmul.f32 %v1373, %v2555
    %v2608 = vmul.f32 %v1378, %v2554
    %v2609 = vmul.f32 %v1378, %v2555
    %v2610 = vmul.f32 %v1383, %v2554
    %v2611 = vmul.f32 %v1383, %v2555
    %v2612 = vmul.f32 %v1388, %v2554
    %v2613 = vmul.f32 %v1388, %v2555
    %v2614 = vmul.f32 %v1393, %v2554
    %v2615 = vmul.f32 %v1393, %v2555
    %v2616 = vmul.f32 %v1398, %v2554
    %v2617 = vmul.f32 %v1398, %v2555
    %v2618 = vmul.f32 %v1403, %v2554
    %v2619 = vmul.f32 %v1403, %v2555
    %v2620 = vmul.f32 %v1408, %v2554
    %v2621 = vmul.f32 %v1408, %v2555
    %v2622 = vadd.f32 %v2231, %v2558
    %v2623 = vadd.f32 %v2457, %v2559
    %v2624 = vadd.f32 %v2234, %v2560
    %v2625 = vadd.f32 %v2460, %v2561
    %v2626 = vadd.f32 %v2237, %v2562
    %v2627 = vadd.f32 %v2463, %v2563
    %v2628 = vadd.f32 %v2240, %v2564
    %v2629 = vadd.f32 %v2466, %v2565
    %v2630 = vadd.f32 %v2243, %v2566
    %v2631 = vadd.f32 %v2469, %v2567
    %v2632 = vadd.f32 %v2246, %v2568
    %v2633 = vadd.f32 %v2472, %v2569
    %v2634 = vadd.f32 %v2249, %v2570
    %v2635 = vadd.f32 %v2475, %v2571
    %v2636 = vadd.f32 %v2252, %v2572
    %v2637 = vadd.f32 %v2478, %v2573
    %v2638 = vadd.f32 %v2255, %v2574
    %v2639 = vadd.f32 %v2481, %v2575
    %v2640 = vadd.f32 %v2258, %v2576
    %v2641 = vadd.f32 %v2484, %v2577
    %v2642 = vadd.f32 %v2261, %v2578
    %v2643 = vadd.f32 %v2487, %v2579
    %v2644 = vadd.f32 %v2264, %v2580
    %v2645 = vadd.f32 %v2490, %v2581
    %v2646 = vadd.f32 %v2267, %v2582
    %v2647 = vadd.f32 %v2493, %v2583
    %v2648 = vadd.f32 %v2270, %v2584
    %v2649 = vadd.f32 %v2496, %v2585
    %v2650 = vadd.f32 %v2273, %v2586
    %v2651 = vadd.f32 %v2499, %v2587
    %v2652 = vadd.f32 %v2276, %v2588
    %v2653 = vadd.f32 %v2502, %v2589
    %v2654 = vadd.f32 %v2279, %v2590
    %v2655 = vadd.f32 %v2505, %v2591
    %v2656 = vadd.f32 %v2282, %v2592
    %v2657 = vadd.f32 %v2508, %v2593
    %v2658 = vadd.f32 %v2285, %v2594
    %v2659 = vadd.f32 %v2511, %v2595
    %v2660 = vadd.f32 %v2288, %v2596
    %v2661 = vadd.f32 %v2514, %v2597
    %v2662 = vadd.f32 %v2291, %v2598
    %v2663 = vadd.f32 %v2517, %v2599
    %v2664 = vadd.f32 %v2294, %v2600
    %v2665 = vadd.f32 %v2520, %v2601
    %v2666 = vadd.f32 %v2297, %v2602
    %v2667 = vadd.f32 %v2523, %v2603
    %v2668 = vadd.f32 %v2300, %v2604
    %v2669 = vadd.f32 %v2526, %v2605
    %v2670 = vadd.f32 %v2303, %v2606
    %v2671 = vadd.f32 %v2529, %v2607
    %v2672 = vadd.f32 %v2306, %v2608
    %v2673 = vadd.f32 %v2532, %v2609
    %v2674 = vadd.f32 %v2309, %v2610
    %v2675 = vadd.f32 %v2535, %v2611
    %v2676 = vadd.f32 %v2312, %v2612
    %v2677 = vadd.f32 %v2538, %v2613
    %v2678 = vadd.f32 %v2315, %v2614
    %v2679 = vadd.f32 %v2541, %v2615
    %v2680 = vadd.f32 %v2318, %v2616
    %v2681 = vadd.f32 %v2544, %v2617
    %v2682 = vadd.f32 %v2321, %v2618
    %v2683 = vadd.f32 %v2547, %v2619
    %v2684 = vadd.f32 %v2324, %v2620
    %v2685 = vadd.f32 %v2550, %v2621
    %s2686 = scalar_lea.vmem %s6, 1
    %v2687 = vld [vmem:[%s2686] ss:$2 sm:$0x3]
    %v2689 = vperm.slane %v2687, 0
    %v2690 = vperm.slane %v2687, 1
    %v2693 = vmul.f32 %v1548, %v2689
    %v2694 = vmul.f32 %v1548, %v2690
    %v2695 = vmul.f32 %v1553, %v2689
    %v2696 = vmul.f32 %v1553, %v2690
    %v2697 = vmul.f32 %v1558, %v2689
    %v2698 = vmul.f32 %v1558, %v2690
    %v2699 = vmul.f32 %v1563, %v2689
    %v2700 = vmul.f32 %v1563, %v2690
    %v2701 = vmul.f32 %v1568, %v2689
    %v2702 = vmul.f32 %v1568, %v2690
    %v2703 = vmul.f32 %v1573, %v2689
    %v2704 = vmul.f32 %v1573, %v2690
    %v2705 = vmul.f32 %v1578, %v2689
    %v2706 = vmul.f32 %v1578, %v2690
    %v2707 = vmul.f32 %v1583, %v2689
    %v2708 = vmul.f32 %v1583, %v2690
    %v2709 = vmul.f32 %v1588, %v2689
    %v2710 = vmul.f32 %v1588, %v2690
    %v2711 = vmul.f32 %v1593, %v2689
    %v2712 = vmul.f32 %v1593, %v2690
    %v2713 = vmul.f32 %v1598, %v2689
    %v2714 = vmul.f32 %v1598, %v2690
    %v2715 = vmul.f32 %v1603, %v2689
    %v2716 = vmul.f32 %v1603, %v2690
    %v2717 = vmul.f32 %v1608, %v2689
    %v2718 = vmul.f32 %v1608, %v2690
    %v2719 = vmul.f32 %v1613, %v2689
    %v2720 = vmul.f32 %v1613, %v2690
    %v2721 = vmul.f32 %v1618, %v2689
    %v2722 = vmul.f32 %v1618, %v2690
    %v2723 = vmul.f32 %v1623, %v2689
    %v2724 = vmul.f32 %v1623, %v2690
    %v2725 = vmul.f32 %v1628, %v2689
    %v2726 = vmul.f32 %v1628, %v2690
    %v2727 = vmul.f32 %v1633, %v2689
    %v2728 = vmul.f32 %v1633, %v2690
    %v2729 = vmul.f32 %v1638, %v2689
    %v2730 = vmul.f32 %v1638, %v2690
    %v2731 = vmul.f32 %v1643, %v2689
    %v2732 = vmul.f32 %v1643, %v2690
    %v2733 = vmul.f32 %v1648, %v2689
    %v2734 = vmul.f32 %v1648, %v2690
    %v2735 = vmul.f32 %v1653, %v2689
    %v2736 = vmul.f32 %v1653, %v2690
    %v2737 = vmul.f32 %v1658, %v2689
    %v2738 = vmul.f32 %v1658, %v2690
    %v2739 = vmul.f32 %v1663, %v2689
    %v2740 = vmul.f32 %v1663, %v2690
    %v2741 = vmul.f32 %v1668, %v2689
    %v2742 = vmul.f32 %v1668, %v2690
    %v2743 = vmul.f32 %v1673, %v2689
    %v2744 = vmul.f32 %v1673, %v2690
    %v2745 = vmul.f32 %v1678, %v2689
    %v2746 = vmul.f32 %v1678, %v2690
    %v2747 = vmul.f32 %v1683, %v2689
    %v2748 = vmul.f32 %v1683, %v2690
    %v2749 = vmul.f32 %v1688, %v2689
    %v2750 = vmul.f32 %v1688, %v2690
    %v2751 = vmul.f32 %v1693, %v2689
    %v2752 = vmul.f32 %v1693, %v2690
    %v2753 = vmul.f32 %v1698, %v2689
    %v2754 = vmul.f32 %v1698, %v2690
    %v2755 = vmul.f32 %v1703, %v2689
    %v2756 = vmul.f32 %v1703, %v2690
    %v2757 = vadd.f32 %v2622, %v2693
    %v2758 = vadd.f32 %v2623, %v2694
    %v2759 = vadd.f32 %v2624, %v2695
    %v2760 = vadd.f32 %v2625, %v2696
    %v2761 = vadd.f32 %v2626, %v2697
    %v2762 = vadd.f32 %v2627, %v2698
    %v2763 = vadd.f32 %v2628, %v2699
    %v2764 = vadd.f32 %v2629, %v2700
    %v2765 = vadd.f32 %v2630, %v2701
    %v2766 = vadd.f32 %v2631, %v2702
    %v2767 = vadd.f32 %v2632, %v2703
    %v2768 = vadd.f32 %v2633, %v2704
    %v2769 = vadd.f32 %v2634, %v2705
    %v2770 = vadd.f32 %v2635, %v2706
    %v2771 = vadd.f32 %v2636, %v2707
    %v2772 = vadd.f32 %v2637, %v2708
    %v2773 = vadd.f32 %v2638, %v2709
    %v2774 = vadd.f32 %v2639, %v2710
    %v2775 = vadd.f32 %v2640, %v2711
    %v2776 = vadd.f32 %v2641, %v2712
    %v2777 = vadd.f32 %v2642, %v2713
    %v2778 = vadd.f32 %v2643, %v2714
    %v2779 = vadd.f32 %v2644, %v2715
    %v2780 = vadd.f32 %v2645, %v2716
    %v2781 = vadd.f32 %v2646, %v2717
    %v2782 = vadd.f32 %v2647, %v2718
    %v2783 = vadd.f32 %v2648, %v2719
    %v2784 = vadd.f32 %v2649, %v2720
    %v2785 = vadd.f32 %v2650, %v2721
    %v2786 = vadd.f32 %v2651, %v2722
    %v2787 = vadd.f32 %v2652, %v2723
    %v2788 = vadd.f32 %v2653, %v2724
    %v2789 = vadd.f32 %v2654, %v2725
    %v2790 = vadd.f32 %v2655, %v2726
    %v2791 = vadd.f32 %v2656, %v2727
    %v2792 = vadd.f32 %v2657, %v2728
    %v2793 = vadd.f32 %v2658, %v2729
    %v2794 = vadd.f32 %v2659, %v2730
    %v2795 = vadd.f32 %v2660, %v2731
    %v2796 = vadd.f32 %v2661, %v2732
    %v2797 = vadd.f32 %v2662, %v2733
    %v2798 = vadd.f32 %v2663, %v2734
    %v2799 = vadd.f32 %v2664, %v2735
    %v2800 = vadd.f32 %v2665, %v2736
    %v2801 = vadd.f32 %v2666, %v2737
    %v2802 = vadd.f32 %v2667, %v2738
    %v2803 = vadd.f32 %v2668, %v2739
    %v2804 = vadd.f32 %v2669, %v2740
    %v2805 = vadd.f32 %v2670, %v2741
    %v2806 = vadd.f32 %v2671, %v2742
    %v2807 = vadd.f32 %v2672, %v2743
    %v2808 = vadd.f32 %v2673, %v2744
    %v2809 = vadd.f32 %v2674, %v2745
    %v2810 = vadd.f32 %v2675, %v2746
    %v2811 = vadd.f32 %v2676, %v2747
    %v2812 = vadd.f32 %v2677, %v2748
    %v2813 = vadd.f32 %v2678, %v2749
    %v2814 = vadd.f32 %v2679, %v2750
    %v2815 = vadd.f32 %v2680, %v2751
    %v2816 = vadd.f32 %v2681, %v2752
    %v2817 = vadd.f32 %v2682, %v2753
    %v2818 = vadd.f32 %v2683, %v2754
    %v2819 = vadd.f32 %v2684, %v2755
    %v2820 = vadd.f32 %v2685, %v2756
    %v2821 = vtanh.pop %v2757
    %v2822 = vtanh.pop %v2758
    %v2823 = vtanh.pop %v2759
    %v2824 = vtanh.pop %v2760
    %v2825 = vtanh.pop %v2761
    %v2826 = vtanh.pop %v2762
    %v2827 = vtanh.pop %v2763
    %v2828 = vtanh.pop %v2764
    %v2829 = vtanh.pop %v2765
    %v2830 = vtanh.pop %v2766
    %v2831 = vtanh.pop %v2767
    %v2832 = vtanh.pop %v2768
    %v2833 = vtanh.pop %v2769
    %v2834 = vtanh.pop %v2770
    %v2835 = vtanh.pop %v2771
    %v2836 = vtanh.pop %v2772
    %v2837 = vtanh.pop %v2773
    %v2838 = vtanh.pop %v2774
    %v2839 = vtanh.pop %v2775
    %v2840 = vtanh.pop %v2776
    %v2841 = vtanh.pop %v2777
    %v2842 = vtanh.pop %v2778
    %v2843 = vtanh.pop %v2779
    %v2844 = vtanh.pop %v2780
    %v2845 = vtanh.pop %v2781
    %v2846 = vtanh.pop %v2782
    %v2847 = vtanh.pop %v2783
    %v2848 = vtanh.pop %v2784
    %v2849 = vtanh.pop %v2785
    %v2850 = vtanh.pop %v2786
    %v2851 = vtanh.pop %v2787
    %v2852 = vtanh.pop %v2788
    %v2853 = vtanh.pop %v2789
    %v2854 = vtanh.pop %v2790
    %v2855 = vtanh.pop %v2791
    %v2856 = vtanh.pop %v2792
    %v2857 = vtanh.pop %v2793
    %v2858 = vtanh.pop %v2794
    %v2859 = vtanh.pop %v2795
    %v2860 = vtanh.pop %v2796
    %v2861 = vtanh.pop %v2797
    %v2862 = vtanh.pop %v2798
    %v2863 = vtanh.pop %v2799
    %v2864 = vtanh.pop %v2800
    %v2865 = vtanh.pop %v2801
    %v2866 = vtanh.pop %v2802
    %v2867 = vtanh.pop %v2803
    %v2868 = vtanh.pop %v2804
    %v2869 = vtanh.pop %v2805
    %v2870 = vtanh.pop %v2806
    %v2871 = vtanh.pop %v2807
    %v2872 = vtanh.pop %v2808
    %v2873 = vtanh.pop %v2809
    %v2874 = vtanh.pop %v2810
    %v2875 = vtanh.pop %v2811
    %v2876 = vtanh.pop %v2812
    %v2877 = vtanh.pop %v2813
    %v2878 = vtanh.pop %v2814
    %v2879 = vtanh.pop %v2815
    %v2880 = vtanh.pop %v2816
    %v2881 = vtanh.pop %v2817
    %v2882 = vtanh.pop %v2818
    %v2883 = vtanh.pop %v2819
    %v2884 = vtanh.pop %v2820
    %2885 = vst [vmem:[#allocation14] sm:$0xff] %v2821
    %2886 = vst [vmem:[#allocation14 + $0x8] sm:$0xff] %v2822
    %2887 = vst [vmem:[#allocation14 + $0x10] sm:$0xff] %v2823
    %2888 = vst [vmem:[#allocation14 + $0x18] sm:$0xff] %v2824
    %2889 = vst [vmem:[#allocation14 + $0x20] sm:$0xff] %v2825
    %2890 = vst [vmem:[#allocation14 + $0x28] sm:$0xff] %v2826
    %2891 = vst [vmem:[#allocation14 + $0x30] sm:$0xff] %v2827
    %2892 = vst [vmem:[#allocation14 + $0x38] sm:$0xff] %v2828
    %2893 = vst [vmem:[#allocation14 + $0x40] sm:$0xff] %v2829
    %2894 = vst [vmem:[#allocation14 + $0x48] sm:$0xff] %v2830
    %2895 = vst [vmem:[#allocation14 + $0x50] sm:$0xff] %v2831
    %2896 = vst [vmem:[#allocation14 + $0x58] sm:$0xff] %v2832
    %2897 = vst [vmem:[#allocation14 + $0x60] sm:$0xff] %v2833
    %2898 = vst [vmem:[#allocation14 + $0x68] sm:$0xff] %v2834
    %2899 = vst [vmem:[#allocation14 + $0x70] sm:$0xff] %v2835
    %2900 = vst [vmem:[#allocation14 + $0x78] sm:$0xff] %v2836
    %2901 = vst [vmem:[#allocation14 + $0x80] sm:$0xff] %v2837
    %2902 = vst [vmem:[#allocation14 + $0x88] sm:$0xff] %v2838
    %2903 = vst [vmem:[#allocation14 + $0x90] sm:$0xff] %v2839
    %2904 = vst [vmem:[#allocation14 + $0x98] sm:$0xff] %v2840
    %2905 = vst [vmem:[#allocation14 + $0xa0] sm:$0xff] %v2841
    %2906 = vst [vmem:[#allocation14 + $0xa8] sm:$0xff] %v2842
    %2907 = vst [vmem:[#allocation14 + $0xb0] sm:$0xff] %v2843
    %2908 = vst [vmem:[#allocation14 + $0xb8] sm:$0xff] %v2844
    %2909 = vst [vmem:[#allocation14 + $0xc0] sm:$0xff] %v2845
    %2910 = vst [vmem:[#allocation14 + $0xc8] sm:$0xff] %v2846
    %2911 = vst [vmem:[#allocation14 + $0xd0] sm:$0xff] %v2847
    %2912 = vst [vmem:[#allocation14 + $0xd8] sm:$0xff] %v2848
    %2913 = vst [vmem:[#allocation14 + $0xe0] sm:$0xff] %v2849
    %2914 = vst [vmem:[#allocation14 + $0xe8] sm:$0xff] %v2850
    %2915 = vst [vmem:[#allocation14 + $0xf0] sm:$0xff] %v2851
    %2916 = vst [vmem:[#allocation14 + $0xf8] sm:$0xff] %v2852
    %2917 = vst [vmem:[#allocation14 + $0x100] sm:$0xff] %v2853
    %2918 = vst [vmem:[#allocation14 + $0x108] sm:$0xff] %v2854
    %2919 = vst [vmem:[#allocation14 + $0x110] sm:$0xff] %v2855
    %2920 = vst [vmem:[#allocation14 + $0x118] sm:$0xff] %v2856
    %2921 = vst [vmem:[#allocation14 + $0x120] sm:$0xff] %v2857
    %2922 = vst [vmem:[#allocation14 + $0x128] sm:$0xff] %v2858
    %2923 = vst [vmem:[#allocation14 + $0x130] sm:$0xff] %v2859
    %2924 = vst [vmem:[#allocation14 + $0x138] sm:$0xff] %v2860
    %2925 = vst [vmem:[#allocation14 + $0x140] sm:$0xff] %v2861
    %2926 = vst [vmem:[#allocation14 + $0x148] sm:$0xff] %v2862
    %2927 = vst [vmem:[#allocation14 + $0x150] sm:$0xff] %v2863
    %2928 = vst [vmem:[#allocation14 + $0x158] sm:$0xff] %v2864
    %2929 = vst [vmem:[#allocation14 + $0x160] sm:$0xff] %v2865
    %2930 = vst [vmem:[#allocation14 + $0x168] sm:$0xff] %v2866
    %2931 = vst [vmem:[#allocation14 + $0x170] sm:$0xff] %v2867
    %2932 = vst [vmem:[#allocation14 + $0x178] sm:$0xff] %v2868
    %2933 = vst [vmem:[#allocation14 + $0x180] sm:$0xff] %v2869
    %2934 = vst [vmem:[#allocation14 + $0x188] sm:$0xff] %v2870
    %2935 = vst [vmem:[#allocation14 + $0x190] sm:$0xff] %v2871
    %2936 = vst [vmem:[#allocation14 + $0x198] sm:$0xff] %v2872
    %2937 = vst [vmem:[#allocation14 + $0x1a0] sm:$0xff] %v2873
    %2938 = vst [vmem:[#allocation14 + $0x1a8] sm:$0xff] %v2874
    %2939 = vst [vmem:[#allocation14 + $0x1b0] sm:$0xff] %v2875
    %2940 = vst [vmem:[#allocation14 + $0x1b8] sm:$0xff] %v2876
    %2941 = vst [vmem:[#allocation14 + $0x1c0] sm:$0xff] %v2877
    %2942 = vst [vmem:[#allocation14 + $0x1c8] sm:$0xff] %v2878
    %2943 = vst [vmem:[#allocation14 + $0x1d0] sm:$0xff] %v2879
    %2944 = vst [vmem:[#allocation14 + $0x1d8] sm:$0xff] %v2880
    %2945 = vst [vmem:[#allocation14 + $0x1e0] sm:$0xff] %v2881
    %2946 = vst [vmem:[#allocation14 + $0x1e8] sm:$0xff] %v2882
    %2947 = vst [vmem:[#allocation14 + $0x1f0] sm:$0xff] %v2883
    %2948 = vst [vmem:[#allocation14 + $0x1f8] sm:$0xff] %v2884
    // Predicated region
    $region70: #{tpu_custom_call.1} parent=1 // pred_check
      _
    $region71: #{tpu_custom_call.1} parent=1 // pred_check_branch
      %2950 = sbr.rel (0) target = $region73
    $region72: #{tpu_custom_call.1} parent=1 // pred_region
      %2952 = vsyncadd [#allocation4], 0
      %s2953 = sshll.u32 [#allocation13], 4
      %s2954 = int_to_ptr.vmem [resolvable:$true] %s2953
      %s2955 = sshll.u32 %s11, 4
      %s2956 = int_to_ptr.hbm [resolvable:$true] %s2955
      %2961 = dma.vmem_to_hbm [thread:$0]  %s2954, 8192, %s2956, [#allocation4], 256, 256, 16
    $region73: #{tpu_custom_call.1} parent=1 // pred_fallthru
      _
    // Predicated region
    $region74: #{tpu_custom_call.1} parent=1 // pred_check
      _
    $region75: #{tpu_custom_call.1} parent=1 // pred_check_branch
      %2963 = sbr.rel (0) target = $region77
    $region76: #{tpu_custom_call.1} parent=1 // pred_region
      %2965 = vsyncadd [#allocation15], 0
      %s2966 = sshll.u32 [#allocation14], 4
      %s2967 = int_to_ptr.vmem [resolvable:$true] %s2966
      %s2968 = sshll.u32 %s12, 4
      %s2969 = int_to_ptr.hbm [resolvable:$true] %s2968
      %2974 = dma.vmem_to_hbm [thread:$0]  %s2967, 8192, %s2969, [#allocation15], 256, 256, 16
    $region77: #{tpu_custom_call.1} parent=1 // pred_fallthru
      _
    // Predicated region
    $region78: #{tpu_custom_call.1} parent=1 // pred_check
      _
    $region79: #{tpu_custom_call.1} parent=1 // pred_check_branch
      %2976 = sbr.rel (0) target = $region81
    $region80: #{tpu_custom_call.1} parent=1 // pred_region
      %2978 = dma.done [#allocation4], 8192
    $region81: #{tpu_custom_call.1} parent=1 // pred_fallthru
      _
    // Predicated region
    $region82: #{tpu_custom_call.1} parent=1 // pred_check
      _
    $region83: #{tpu_custom_call.1} parent=1 // pred_check_branch
      %2980 = sbr.rel (0) target = $region85
    $region84: #{tpu_custom_call.1} parent=1 // pred_region
      %2982 = dma.done [#allocation15], 8192
    $region85: #{tpu_custom_call.1} parent=1 // pred_fallthru
      _
    %2983 = vsyncpa [#allocation3], 1
    %2984 = vsyncpa [#allocation6], 1
    %2985 = vsyncpa [#allocation9], 1
    %2986 = vsyncpa [#allocation12], 1
    %2987 = vsyncpa [#allocation4], 1
    %2988 = vsyncpa [#allocation15], 1

</llo_original>
